<compile_context>
chip_gen: v6e
topology: v6e:2x2x1
jax: 0.10.0
libtpu: 0.0.40
codegen_flags: <defaults>
</compile_context>

<pallas_src>
import functools

import jax
import jax.numpy as jnp
from jax.experimental import pallas as pl
from jax.experimental.pallas import tpu as pltpu


def _vmem_capacity_bytes():
    """Physical per-core VMEM, with a conservative fallback (v7x = 64 MiB)."""
    try:
        info = pltpu.get_tpu_info()
        cap = getattr(info, "vmem_capacity_bytes", None)
        if cap:
            return int(cap)
    except Exception:
        pass
    return 64 * 1024 * 1024


def _basic_block_kernel(x_ref, w1_ref, b1_ref, w2_ref, b2_ref, o_ref, *,
                        TH, H, W, Wp):
    """One (batch image, row tile) per grid step.

    x_ref : ((H+4)*Wp, Cp)  bf16 padded image, rows flattened into sublanes:
                            flat index = (image_row + 2) * Wp + image_col;
                            zeros outside the real H x W x C region.
    w*_ref: (9, Cp, Cp)     per-tap conv weights (BN scale folded), k = dy*3+dx.
    b*_ref: (1, Cp)         folded BN bias (f32).
    o_ref : (TH, W, Cp)     output row tile (bf16).
    """
    Cp = o_ref.shape[-1]
    He = TH + 2                        # conv2-input rows (1-pixel halo)
    M1 = He * Wp
    M2 = TH * Wp
    t = pl.program_id(1)
    row0 = t * TH                      # first padded-input row of this slab
    cdt = x_ref.dtype                  # bf16 MXU operand dtype

    def conv_partials(load_tap, w_ref):
        # 9 per-tap MXU dots with f32 accumulation; the column (dx) shift is
        # applied later via XLU rolls of the three per-dx partial sums, so
        # every MXU LHS here is a sublane-aligned slice (no relayout copies).
        parts = [None, None, None]
        for dy in range(3):
            tap = load_tap(dy)                                  # (m, Cp) bf16
            for dx in range(3):
                d = jnp.dot(tap, w_ref[dy * 3 + dx],
                            preferred_element_type=jnp.float32)
                parts[dx] = d if parts[dx] is None else parts[dx] + d
        return parts

    # ---- conv1 (+ folded BN1 scale) -----------------------------------------
    def x_tap(dy):
        start = pl.multiple_of((row0 + dy) * Wp, 8)
        return x_ref[pl.ds(start, M1), :]

    p0, p1, p2 = conv_partials(x_tap, w1_ref)
    # act1[m] = p0[m-2] + p1[m-1] + p2[m]; wrapped/cross-row reads land on the
    # zero padding columns, so the rolls implement the column shift exactly.
    act1 = p2 + pltpu.roll(p1, 1, axis=0) + pltpu.roll(p0, 2, axis=0)
    act1 = jnp.maximum(act1 + b1_ref[...], 0.0)                 # BN1 bias + ReLU

    # Zero every position outside the real HxW image (this IS conv2's SAME
    # padding).  Per-dim iotas, no integer div/mod.
    act1 = act1.reshape(He, Wp, Cp)
    a_i = jax.lax.broadcasted_iota(jnp.int32, (He, Wp, 1), 0)
    c_i = jax.lax.broadcasted_iota(jnp.int32, (He, Wp, 1), 1)
    g_row = row0 - 1 + a_i             # image row of this act1 row
    valid = (g_row >= 0) & (g_row < H) & (c_i >= 1) & (c_i <= W)
    act1 = jnp.where(valid, act1, 0.0).astype(cdt)              # bf16 operand

    # ---- conv2 (+ folded BN2 scale) -----------------------------------------
    def a_tap(dy):
        return act1[dy:dy + TH].reshape(M2, Cp)

    q0, q1, q2 = conv_partials(a_tap, w2_ref)
    # out[m] = q0[m] + q1[m+1] + q2[m+2]
    out = q0 + pltpu.roll(q1, M2 - 1, axis=0) + pltpu.roll(q2, M2 - 2, axis=0)
    out = out + b2_ref[...]

    # ---- residual add (aligned interior view of the resident input) + ReLU --
    res_start = pl.multiple_of((row0 + 2) * Wp, 8)
    res = x_ref[pl.ds(res_start, M2), :]
    out = jnp.maximum(out + res.astype(jnp.float32), 0.0)
    o_ref[...] = out.reshape(TH, Wp, Cp)[:, :W, :].astype(o_ref.dtype)


def basic_block_pallas(x_nchw, w1, bn1, w2, bn2, *, compute_dtype=jnp.bfloat16):
    """x_nchw: (N, C, H, W). w*: (3, 3, Cin, Cout) HWIO.
    bn*: dict(gamma, beta, mean, var), each (C,). Inference-mode BatchNorm.
    stride=1, downsample=None (identity residual)."""
    N, C, H, W = x_nchw.shape
    eps = 1e-5
    LANE = 128
    Cp = -(-C // LANE) * LANE              # channels padded to lane width
    Wp = -(-(W + 2) // 8) * 8              # flattened row width: >= W+2, 8-aligned
                                           # (>=2 zero cols on the right so the
                                           #  flattened column shifts stay clean)

    # NCHW -> NHWC (bf16), pad channels to Cp, 2 zero rows top/bottom, Wp-W zero
    # cols on the right, then flatten (H+4, Wp) into one sublane axis per image.
    x = jnp.transpose(x_nchw, (0, 2, 3, 1)).astype(compute_dtype)
    xpad = jnp.pad(x, ((0, 0), (2, 2), (0, Wp - W), (0, Cp - C)))
    xflat = xpad.reshape(N, (H + 4) * Wp, Cp)

    def fold(w, bn):
        scale = (bn["gamma"] / jnp.sqrt(bn["var"] + eps)).astype(jnp.float32)
        bias = (bn["beta"] - bn["mean"] * scale).astype(jnp.float32)
        wf = w.astype(jnp.float32) * scale[None, None, None, :]   # fold BN scale
        wpad = jnp.zeros((3, 3, Cp, Cp), jnp.float32).at[:, :, :C, :C].set(wf)
        # TODO(synk): for C < 128 (HRNet 18/36/48/72 branches) pack the 9 taps'
        # real C channels contiguously along K instead of padding each tap to Cp.
        wr = wpad.reshape(9, Cp, Cp).astype(compute_dtype)        # k = dy*3+dx
        bp = jnp.zeros((1, Cp), jnp.float32).at[0, :C].set(bias)
        return wr, bp

    w1r, b1p = fold(w1, bn1)
    w2r, b2p = fold(w2, bn2)

    # ---- row-tile height TH from a per-generation VMEM budget ---------------
    vmem_cap = _vmem_capacity_bytes()
    isz = jnp.dtype(compute_dtype).itemsize
    resident = (2 * (H + 4) * Wp * Cp * isz             # double-buffered image
                + 2 * 9 * Cp * Cp * isz + 8 * Cp)       # weights + biases

    def step_bytes(th):
        m1 = (th + 2) * Wp
        work = 6 * m1 * Cp * 4                          # f32 partials/act1/rolls
        out_blk = 2 * th * W * Cp * isz                 # double-buffered output
        return resident + work + out_blk

    budget = int(0.45 * vmem_cap)
    divs = [d for d in range(1, H + 1) if H % d == 0]
    fitting = [d for d in divs if step_bytes(d) <= budget]
    # Prefer >=2 row tiles per image (pipeline depth) and a not-too-tiny tile;
    # fall back gracefully when H has awkward divisors.
    pref = [d for d in fitting if d < H and d >= 4] or fitting or divs
    TH = max(pref)
    T = H // TH

    # Generation-aware scoped-VMEM limit: ~51 MiB on 64 MiB parts (v7x),
    # up to ~100 MiB on 128 MiB parts (v5e/v6e).
    vmem_limit = max(32 << 20, min(int(0.8 * vmem_cap), 100 << 20))

    kernel = functools.partial(_basic_block_kernel, TH=TH, H=H, W=W, Wp=Wp)

    out = pl.pallas_call(
        kernel,
        out_shape=jax.ShapeDtypeStruct((N, H, W, Cp), compute_dtype),
        grid=(N, T),
        in_specs=[
            # Whole padded image per batch element; block index is constant
            # over the row-tile axis, so it is DMA'd once per image and reused.
            # TODO(synk): for very large feature maps on 64 MiB-VMEM parts,
            # switch this to a manually double-buffered (TH+4)-row halo slab.
            pl.BlockSpec((None, (H + 4) * Wp, Cp), lambda n, t: (n, 0, 0)),
            pl.BlockSpec((9, Cp, Cp), lambda n, t: (0, 0, 0)),   # conv1 weights
            pl.BlockSpec((1, Cp), lambda n, t: (0, 0)),          # bn1 bias
            pl.BlockSpec((9, Cp, Cp), lambda n, t: (0, 0, 0)),   # conv2 weights
            pl.BlockSpec((1, Cp), lambda n, t: (0, 0)),          # bn2 bias
        ],
        out_specs=pl.BlockSpec((None, TH, W, Cp), lambda n, t: (n, t, 0, 0)),
        compiler_params=pltpu.CompilerParams(
            dimension_semantics=("parallel", "parallel"),
            vmem_limit_bytes=vmem_limit),
    )(xflat, w1r, b1p, w2r, b2p)

    # Drop channel lane padding and return NCHW in the caller's dtype.
    # TODO(synk): keep NHWC/bf16 downstream to avoid this extra HBM pass.
    out = out[..., :C].astype(x_nchw.dtype)
    return jnp.transpose(out, (0, 3, 1, 2))


def basic_block_ref(x_nchw, w1, bn1, w2, bn2):
    """Pure-JAX f32 reference (same semantics), used for the correctness check."""
    eps = 1e-5
    x = jnp.transpose(x_nchw, (0, 2, 3, 1)).astype(jnp.float32)

    def conv(inp, w):
        return jax.lax.conv_general_dilated(
            inp, w, window_strides=(1, 1), padding="SAME",
            dimension_numbers=("NHWC", "HWIO", "NHWC"))

    def bn(inp, p):
        scale = p["gamma"] / jnp.sqrt(p["var"] + eps)
        bias = p["beta"] - p["mean"] * scale
        return inp * scale + bias

    out = jax.nn.relu(bn(conv(x, w1), bn1))
    out = bn(conv(out, w2), bn2)
    out = jax.nn.relu(out + x)
    return jnp.transpose(out, (0, 3, 1, 2))


if __name__ == "__main__":
    # Small shapes: batch=2, inplanes=planes=4, H=W=16, stride=1, downsample=None
    N, C, H, W = 2, 4, 16, 16
    key = jax.random.PRNGKey(0)
    kx, kw1, kw2, kg1, kb1, km1, kv1, kg2, kb2, km2, kv2 = jax.random.split(key, 11)

    x = jax.random.normal(kx, (N, C, H, W), dtype=jnp.float32)

    # conv weights in HWIO layout (3, 3, Cin, Cout), deterministic init
    w1 = 0.1 * jax.random.normal(kw1, (3, 3, C, C), dtype=jnp.float32)
    w2 = 0.1 * jax.random.normal(kw2, (3, 3, C, C), dtype=jnp.float32)

    bn1 = dict(gamma=1.0 + 0.1 * jax.random.normal(kg1, (C,)),
               beta=0.1 * jax.random.normal(kb1, (C,)),
               mean=0.1 * jax.random.normal(km1, (C,)),
               var=jnp.abs(1.0 + 0.1 * jax.random.normal(kv1, (C,))))
    bn2 = dict(gamma=1.0 + 0.1 * jax.random.normal(kg2, (C,)),
               beta=0.1 * jax.random.normal(kb2, (C,)),
               mean=0.1 * jax.random.normal(km2, (C,)),
               var=jnp.abs(1.0 + 0.1 * jax.random.normal(kv2, (C,))))

    out = basic_block_pallas(x, w1, bn1, w2, bn2)   # bf16 compute path
    out = jax.block_until_ready(out)

    ref = jax.block_until_ready(basic_block_ref(x, w1, bn1, w2, bn2))
    assert out.shape == (N, C, H, W)
    max_err = float(jnp.max(jnp.abs(out.astype(jnp.float32) - ref)))
    # bf16 MXU operands + bf16 output store -> compare with bf16-level tolerance.
    assert jnp.allclose(out.astype(jnp.float32), ref, atol=5e-2, rtol=5e-2), (
        f"mismatch vs reference (max abs err {max_err})")

    print("KERNEL_OK")
</pallas_src>

<mosaic_0001>
module attributes {stable_mosaic.version = 11 : i64} {
  func.func @_basic_block_kernel(%arg0: i32, %arg1: i32, %arg2: memref<1x480x128xbf16, #tpu.memory_space<vmem>>, %arg3: memref<9x128x128xbf16, #tpu.memory_space<vmem>>, %arg4: memref<1x128xf32, #tpu.memory_space<vmem>>, %arg5: memref<9x128x128xbf16, #tpu.memory_space<vmem>>, %arg6: memref<1x128xf32, #tpu.memory_space<vmem>>, %arg7: memref<1x8x16x128xbf16, #tpu.memory_space<vmem>>) attributes {dimension_semantics = [#tpu.dimension_semantics<parallel>, #tpu.dimension_semantics<parallel>], iteration_bounds = array<i64: 2, 2>, scalar_prefetch = 0 : i64, scratch_operands = 0 : i64, tpu.core_type = #tpu.core_type<tc>, window_params = [{transform_indices = @transform_0, window_bounds = array<i64: 1, 480, 128>}, {pipeline_mode = #tpu.pipeline_mode<synchronous>, transform_indices = @transform_1, window_bounds = array<i64: 9, 128, 128>}, {pipeline_mode = #tpu.pipeline_mode<synchronous>, transform_indices = @transform_2, window_bounds = array<i64: 1, 128>}, {pipeline_mode = #tpu.pipeline_mode<synchronous>, transform_indices = @transform_3, window_bounds = array<i64: 9, 128, 128>}, {pipeline_mode = #tpu.pipeline_mode<synchronous>, transform_indices = @transform_4, window_bounds = array<i64: 1, 128>}, {transform_indices = @transform_5, window_bounds = array<i64: 1, 8, 16, 128>}]} {
    %c8_i32 = arith.constant 8 : i32
    %0 = arith.muli %arg1, %c8_i32 : i32
    %c0_i32 = arith.constant 0 : i32
    %1 = arith.addi %0, %c0_i32 : i32
    %c24_i32 = arith.constant 24 : i32
    %2 = arith.muli %1, %c24_i32 : i32
    %3 = tpu.assume_multiple %2, 8 : i32
    %c0 = arith.constant 0 : index
    %4 = arith.index_cast %3 : i32 to index
    %c0_0 = arith.constant 0 : index
    %5 = vector.load %arg2[%c0, %4, %c0_0] : memref<1x480x128xbf16, #tpu.memory_space<vmem>>, vector<1x240x128xbf16>
    %6 = vector.shape_cast %5 : vector<1x240x128xbf16> to vector<240x128xbf16>
    %c0_1 = arith.constant 0 : index
    %c0_2 = arith.constant 0 : index
    %c0_3 = arith.constant 0 : index
    %7 = vector.load %arg3[%c0_1, %c0_2, %c0_3] : memref<9x128x128xbf16, #tpu.memory_space<vmem>>, vector<1x128x128xbf16>
    %8 = vector.shape_cast %7 : vector<1x128x128xbf16> to vector<128x128xbf16>
    %cst = arith.constant dense<0.000000e+00> : vector<240x128xf32>
    %9 = tpu.matmul %6, %8, %cst {dimension_numbers = #tpu.dot_dimension_numbers<[1], [0], [0], [1], [0, 0, 1, 1], [], []>} : vector<240x128xbf16>, vector<128x128xbf16>, vector<240x128xf32> -> vector<240x128xf32>
    %c1 = arith.constant 1 : index
    %c0_4 = arith.constant 0 : index
    %c0_5 = arith.constant 0 : index
    %10 = vector.load %arg3[%c1, %c0_4, %c0_5] : memref<9x128x128xbf16, #tpu.memory_space<vmem>>, vector<1x128x128xbf16>
    %11 = vector.shape_cast %10 : vector<1x128x128xbf16> to vector<128x128xbf16>
    %cst_6 = arith.constant dense<0.000000e+00> : vector<240x128xf32>
    %12 = tpu.matmul %6, %11, %cst_6 {dimension_numbers = #tpu.dot_dimension_numbers<[1], [0], [0], [1], [0, 0, 1, 1], [], []>} : vector<240x128xbf16>, vector<128x128xbf16>, vector<240x128xf32> -> vector<240x128xf32>
    %c2 = arith.constant 2 : index
    %c0_7 = arith.constant 0 : index
    %c0_8 = arith.constant 0 : index
    %13 = vector.load %arg3[%c2, %c0_7, %c0_8] : memref<9x128x128xbf16, #tpu.memory_space<vmem>>, vector<1x128x128xbf16>
    %14 = vector.shape_cast %13 : vector<1x128x128xbf16> to vector<128x128xbf16>
    %cst_9 = arith.constant dense<0.000000e+00> : vector<240x128xf32>
    %15 = tpu.matmul %6, %14, %cst_9 {dimension_numbers = #tpu.dot_dimension_numbers<[1], [0], [0], [1], [0, 0, 1, 1], [], []>} : vector<240x128xbf16>, vector<128x128xbf16>, vector<240x128xf32> -> vector<240x128xf32>
    %c1_i32 = arith.constant 1 : i32
    %16 = arith.addi %0, %c1_i32 : i32
    %c24_i32_10 = arith.constant 24 : i32
    %17 = arith.muli %16, %c24_i32_10 : i32
    %18 = tpu.assume_multiple %17, 8 : i32
    %c0_11 = arith.constant 0 : index
    %19 = arith.index_cast %18 : i32 to index
    %c0_12 = arith.constant 0 : index
    %20 = vector.load %arg2[%c0_11, %19, %c0_12] : memref<1x480x128xbf16, #tpu.memory_space<vmem>>, vector<1x240x128xbf16>
    %21 = vector.shape_cast %20 : vector<1x240x128xbf16> to vector<240x128xbf16>
    %c3 = arith.constant 3 : index
    %c0_13 = arith.constant 0 : index
    %c0_14 = arith.constant 0 : index
    %22 = vector.load %arg3[%c3, %c0_13, %c0_14] : memref<9x128x128xbf16, #tpu.memory_space<vmem>>, vector<1x128x128xbf16>
    %23 = vector.shape_cast %22 : vector<1x128x128xbf16> to vector<128x128xbf16>
    %cst_15 = arith.constant dense<0.000000e+00> : vector<240x128xf32>
    %24 = tpu.matmul %21, %23, %cst_15 {dimension_numbers = #tpu.dot_dimension_numbers<[1], [0], [0], [1], [0, 0, 1, 1], [], []>} : vector<240x128xbf16>, vector<128x128xbf16>, vector<240x128xf32> -> vector<240x128xf32>
    %25 = arith.addf %9, %24 : vector<240x128xf32>
    %c4 = arith.constant 4 : index
    %c0_16 = arith.constant 0 : index
    %c0_17 = arith.constant 0 : index
    %26 = vector.load %arg3[%c4, %c0_16, %c0_17] : memref<9x128x128xbf16, #tpu.memory_space<vmem>>, vector<1x128x128xbf16>
    %27 = vector.shape_cast %26 : vector<1x128x128xbf16> to vector<128x128xbf16>
    %cst_18 = arith.constant dense<0.000000e+00> : vector<240x128xf32>
    %28 = tpu.matmul %21, %27, %cst_18 {dimension_numbers = #tpu.dot_dimension_numbers<[1], [0], [0], [1], [0, 0, 1, 1], [], []>} : vector<240x128xbf16>, vector<128x128xbf16>, vector<240x128xf32> -> vector<240x128xf32>
    %29 = arith.addf %12, %28 : vector<240x128xf32>
    %c5 = arith.constant 5 : index
    %c0_19 = arith.constant 0 : index
    %c0_20 = arith.constant 0 : index
    %30 = vector.load %arg3[%c5, %c0_19, %c0_20] : memref<9x128x128xbf16, #tpu.memory_space<vmem>>, vector<1x128x128xbf16>
    %31 = vector.shape_cast %30 : vector<1x128x128xbf16> to vector<128x128xbf16>
    %cst_21 = arith.constant dense<0.000000e+00> : vector<240x128xf32>
    %32 = tpu.matmul %21, %31, %cst_21 {dimension_numbers = #tpu.dot_dimension_numbers<[1], [0], [0], [1], [0, 0, 1, 1], [], []>} : vector<240x128xbf16>, vector<128x128xbf16>, vector<240x128xf32> -> vector<240x128xf32>
    %33 = arith.addf %15, %32 : vector<240x128xf32>
    %c2_i32 = arith.constant 2 : i32
    %34 = arith.addi %0, %c2_i32 : i32
    %c24_i32_22 = arith.constant 24 : i32
    %35 = arith.muli %34, %c24_i32_22 : i32
    %36 = tpu.assume_multiple %35, 8 : i32
    %c0_23 = arith.constant 0 : index
    %37 = arith.index_cast %36 : i32 to index
    %c0_24 = arith.constant 0 : index
    %38 = vector.load %arg2[%c0_23, %37, %c0_24] : memref<1x480x128xbf16, #tpu.memory_space<vmem>>, vector<1x240x128xbf16>
    %39 = vector.shape_cast %38 : vector<1x240x128xbf16> to vector<240x128xbf16>
    %c6 = arith.constant 6 : index
    %c0_25 = arith.constant 0 : index
    %c0_26 = arith.constant 0 : index
    %40 = vector.load %arg3[%c6, %c0_25, %c0_26] : memref<9x128x128xbf16, #tpu.memory_space<vmem>>, vector<1x128x128xbf16>
    %41 = vector.shape_cast %40 : vector<1x128x128xbf16> to vector<128x128xbf16>
    %cst_27 = arith.constant dense<0.000000e+00> : vector<240x128xf32>
    %42 = tpu.matmul %39, %41, %cst_27 {dimension_numbers = #tpu.dot_dimension_numbers<[1], [0], [0], [1], [0, 0, 1, 1], [], []>} : vector<240x128xbf16>, vector<128x128xbf16>, vector<240x128xf32> -> vector<240x128xf32>
    %43 = arith.addf %25, %42 : vector<240x128xf32>
    %c7 = arith.constant 7 : index
    %c0_28 = arith.constant 0 : index
    %c0_29 = arith.constant 0 : index
    %44 = vector.load %arg3[%c7, %c0_28, %c0_29] : memref<9x128x128xbf16, #tpu.memory_space<vmem>>, vector<1x128x128xbf16>
    %45 = vector.shape_cast %44 : vector<1x128x128xbf16> to vector<128x128xbf16>
    %cst_30 = arith.constant dense<0.000000e+00> : vector<240x128xf32>
    %46 = tpu.matmul %39, %45, %cst_30 {dimension_numbers = #tpu.dot_dimension_numbers<[1], [0], [0], [1], [0, 0, 1, 1], [], []>} : vector<240x128xbf16>, vector<128x128xbf16>, vector<240x128xf32> -> vector<240x128xf32>
    %47 = arith.addf %29, %46 : vector<240x128xf32>
    %c8 = arith.constant 8 : index
    %c0_31 = arith.constant 0 : index
    %c0_32 = arith.constant 0 : index
    %48 = vector.load %arg3[%c8, %c0_31, %c0_32] : memref<9x128x128xbf16, #tpu.memory_space<vmem>>, vector<1x128x128xbf16>
    %49 = vector.shape_cast %48 : vector<1x128x128xbf16> to vector<128x128xbf16>
    %cst_33 = arith.constant dense<0.000000e+00> : vector<240x128xf32>
    %50 = tpu.matmul %39, %49, %cst_33 {dimension_numbers = #tpu.dot_dimension_numbers<[1], [0], [0], [1], [0, 0, 1, 1], [], []>} : vector<240x128xbf16>, vector<128x128xbf16>, vector<240x128xf32> -> vector<240x128xf32>
    %51 = arith.addf %33, %50 : vector<240x128xf32>
    %c1_i32_34 = arith.constant 1 : i32
    %52 = tpu.dynamic_rotate %47 by %c1_i32_34 dim 0 : vector<240x128xf32>, i32 -> vector<240x128xf32>
    %53 = arith.addf %51, %52 : vector<240x128xf32>
    %c2_i32_35 = arith.constant 2 : i32
    %54 = tpu.dynamic_rotate %43 by %c2_i32_35 dim 0 : vector<240x128xf32>, i32 -> vector<240x128xf32>
    %55 = arith.addf %53, %54 : vector<240x128xf32>
    %c0_36 = arith.constant 0 : index
    %c0_37 = arith.constant 0 : index
    %56 = vector.load %arg4[%c0_36, %c0_37] : memref<1x128xf32, #tpu.memory_space<vmem>>, vector<1x128xf32>
    %57 = vector.broadcast %56 : vector<1x128xf32> to vector<240x128xf32>
    %58 = arith.addf %55, %57 : vector<240x128xf32>
    %cst_38 = arith.constant 0.000000e+00 : f32
    %59 = vector.broadcast %cst_38 : f32 to vector<240x128xf32>
    %60 = arith.maximumf %58, %59 : vector<240x128xf32>
    %61 = vector.shape_cast %60 : vector<240x128xf32> to vector<10x24x128xf32>
    %62 = tpu.iota {dimensions = array<i32: 0>} : vector<10x24x1xi32>
    %63 = tpu.iota {dimensions = array<i32: 1>} : vector<10x24x1xi32>
    %c1_i32_39 = arith.constant 1 : i32
    %64 = arith.subi %0, %c1_i32_39 : i32
    %65 = vector.broadcast %64 : i32 to vector<10x24x1xi32>
    %66 = arith.addi %65, %62 : vector<10x24x1xi32>
    %c0_i32_40 = arith.constant 0 : i32
    %67 = vector.broadcast %c0_i32_40 : i32 to vector<10x24x1xi32>
    %68 = arith.cmpi sge, %66, %67 : vector<10x24x1xi32>
    %c16_i32 = arith.constant 16 : i32
    %69 = vector.broadcast %c16_i32 : i32 to vector<10x24x1xi32>
    %70 = arith.cmpi slt, %66, %69 : vector<10x24x1xi32>
    %71 = arith.andi %68, %70 : vector<10x24x1xi1>
    %c1_i32_41 = arith.constant 1 : i32
    %72 = vector.broadcast %c1_i32_41 : i32 to vector<10x24x1xi32>
    %73 = arith.cmpi sge, %63, %72 : vector<10x24x1xi32>
    %74 = arith.andi %71, %73 : vector<10x24x1xi1>
    %c16_i32_42 = arith.constant 16 : i32
    %75 = vector.broadcast %c16_i32_42 : i32 to vector<10x24x1xi32>
    %76 = arith.cmpi sle, %63, %75 : vector<10x24x1xi32>
    %77 = arith.andi %74, %76 : vector<10x24x1xi1>
    %cst_43 = arith.constant 0.000000e+00 : f32
    %78 = vector.shape_cast %77 : vector<10x24x1xi1> to vector<10x24x1xi1>
    %79 = vector.broadcast %78 : vector<10x24x1xi1> to vector<10x24x128xi1>
    %80 = vector.broadcast %cst_43 : f32 to vector<10x24x128xf32>
    %81 = arith.select %79, %61, %80 : vector<10x24x128xi1>, vector<10x24x128xf32>
    %82 = arith.truncf %81 : vector<10x24x128xf32> to vector<10x24x128xbf16>
    %83 = vector.extract_strided_slice %82 {offsets = [0, 0, 0], sizes = [8, 24, 128], strides = [1, 1, 1]} : vector<10x24x128xbf16> to vector<8x24x128xbf16>
    %84 = vector.shape_cast %83 : vector<8x24x128xbf16> to vector<192x128xbf16>
    %c0_44 = arith.constant 0 : index
    %c0_45 = arith.constant 0 : index
    %c0_46 = arith.constant 0 : index
    %85 = vector.load %arg5[%c0_44, %c0_45, %c0_46] : memref<9x128x128xbf16, #tpu.memory_space<vmem>>, vector<1x128x128xbf16>
    %86 = vector.shape_cast %85 : vector<1x128x128xbf16> to vector<128x128xbf16>
    %cst_47 = arith.constant dense<0.000000e+00> : vector<192x128xf32>
    %87 = tpu.matmul %84, %86, %cst_47 {dimension_numbers = #tpu.dot_dimension_numbers<[1], [0], [0], [1], [0, 0, 1, 1], [], []>} : vector<192x128xbf16>, vector<128x128xbf16>, vector<192x128xf32> -> vector<192x128xf32>
    %c1_48 = arith.constant 1 : index
    %c0_49 = arith.constant 0 : index
    %c0_50 = arith.constant 0 : index
    %88 = vector.load %arg5[%c1_48, %c0_49, %c0_50] : memref<9x128x128xbf16, #tpu.memory_space<vmem>>, vector<1x128x128xbf16>
    %89 = vector.shape_cast %88 : vector<1x128x128xbf16> to vector<128x128xbf16>
    %cst_51 = arith.constant dense<0.000000e+00> : vector<192x128xf32>
    %90 = tpu.matmul %84, %89, %cst_51 {dimension_numbers = #tpu.dot_dimension_numbers<[1], [0], [0], [1], [0, 0, 1, 1], [], []>} : vector<192x128xbf16>, vector<128x128xbf16>, vector<192x128xf32> -> vector<192x128xf32>
    %c2_52 = arith.constant 2 : index
    %c0_53 = arith.constant 0 : index
    %c0_54 = arith.constant 0 : index
    %91 = vector.load %arg5[%c2_52, %c0_53, %c0_54] : memref<9x128x128xbf16, #tpu.memory_space<vmem>>, vector<1x128x128xbf16>
    %92 = vector.shape_cast %91 : vector<1x128x128xbf16> to vector<128x128xbf16>
    %cst_55 = arith.constant dense<0.000000e+00> : vector<192x128xf32>
    %93 = tpu.matmul %84, %92, %cst_55 {dimension_numbers = #tpu.dot_dimension_numbers<[1], [0], [0], [1], [0, 0, 1, 1], [], []>} : vector<192x128xbf16>, vector<128x128xbf16>, vector<192x128xf32> -> vector<192x128xf32>
    %94 = vector.extract_strided_slice %82 {offsets = [1, 0, 0], sizes = [8, 24, 128], strides = [1, 1, 1]} : vector<10x24x128xbf16> to vector<8x24x128xbf16>
    %95 = vector.shape_cast %94 : vector<8x24x128xbf16> to vector<192x128xbf16>
    %c3_56 = arith.constant 3 : index
    %c0_57 = arith.constant 0 : index
    %c0_58 = arith.constant 0 : index
    %96 = vector.load %arg5[%c3_56, %c0_57, %c0_58] : memref<9x128x128xbf16, #tpu.memory_space<vmem>>, vector<1x128x128xbf16>
    %97 = vector.shape_cast %96 : vector<1x128x128xbf16> to vector<128x128xbf16>
    %cst_59 = arith.constant dense<0.000000e+00> : vector<192x128xf32>
    %98 = tpu.matmul %95, %97, %cst_59 {dimension_numbers = #tpu.dot_dimension_numbers<[1], [0], [0], [1], [0, 0, 1, 1], [], []>} : vector<192x128xbf16>, vector<128x128xbf16>, vector<192x128xf32> -> vector<192x128xf32>
    %99 = arith.addf %87, %98 : vector<192x128xf32>
    %c4_60 = arith.constant 4 : index
    %c0_61 = arith.constant 0 : index
    %c0_62 = arith.constant 0 : index
    %100 = vector.load %arg5[%c4_60, %c0_61, %c0_62] : memref<9x128x128xbf16, #tpu.memory_space<vmem>>, vector<1x128x128xbf16>
    %101 = vector.shape_cast %100 : vector<1x128x128xbf16> to vector<128x128xbf16>
    %cst_63 = arith.constant dense<0.000000e+00> : vector<192x128xf32>
    %102 = tpu.matmul %95, %101, %cst_63 {dimension_numbers = #tpu.dot_dimension_numbers<[1], [0], [0], [1], [0, 0, 1, 1], [], []>} : vector<192x128xbf16>, vector<128x128xbf16>, vector<192x128xf32> -> vector<192x128xf32>
    %103 = arith.addf %90, %102 : vector<192x128xf32>
    %c5_64 = arith.constant 5 : index
    %c0_65 = arith.constant 0 : index
    %c0_66 = arith.constant 0 : index
    %104 = vector.load %arg5[%c5_64, %c0_65, %c0_66] : memref<9x128x128xbf16, #tpu.memory_space<vmem>>, vector<1x128x128xbf16>
    %105 = vector.shape_cast %104 : vector<1x128x128xbf16> to vector<128x128xbf16>
    %cst_67 = arith.constant dense<0.000000e+00> : vector<192x128xf32>
    %106 = tpu.matmul %95, %105, %cst_67 {dimension_numbers = #tpu.dot_dimension_numbers<[1], [0], [0], [1], [0, 0, 1, 1], [], []>} : vector<192x128xbf16>, vector<128x128xbf16>, vector<192x128xf32> -> vector<192x128xf32>
    %107 = arith.addf %93, %106 : vector<192x128xf32>
    %108 = vector.extract_strided_slice %82 {offsets = [2, 0, 0], sizes = [8, 24, 128], strides = [1, 1, 1]} : vector<10x24x128xbf16> to vector<8x24x128xbf16>
    %109 = vector.shape_cast %108 : vector<8x24x128xbf16> to vector<192x128xbf16>
    %c6_68 = arith.constant 6 : index
    %c0_69 = arith.constant 0 : index
    %c0_70 = arith.constant 0 : index
    %110 = vector.load %arg5[%c6_68, %c0_69, %c0_70] : memref<9x128x128xbf16, #tpu.memory_space<vmem>>, vector<1x128x128xbf16>
    %111 = vector.shape_cast %110 : vector<1x128x128xbf16> to vector<128x128xbf16>
    %cst_71 = arith.constant dense<0.000000e+00> : vector<192x128xf32>
    %112 = tpu.matmul %109, %111, %cst_71 {dimension_numbers = #tpu.dot_dimension_numbers<[1], [0], [0], [1], [0, 0, 1, 1], [], []>} : vector<192x128xbf16>, vector<128x128xbf16>, vector<192x128xf32> -> vector<192x128xf32>
    %113 = arith.addf %99, %112 : vector<192x128xf32>
    %c7_72 = arith.constant 7 : index
    %c0_73 = arith.constant 0 : index
    %c0_74 = arith.constant 0 : index
    %114 = vector.load %arg5[%c7_72, %c0_73, %c0_74] : memref<9x128x128xbf16, #tpu.memory_space<vmem>>, vector<1x128x128xbf16>
    %115 = vector.shape_cast %114 : vector<1x128x128xbf16> to vector<128x128xbf16>
    %cst_75 = arith.constant dense<0.000000e+00> : vector<192x128xf32>
    %116 = tpu.matmul %109, %115, %cst_75 {dimension_numbers = #tpu.dot_dimension_numbers<[1], [0], [0], [1], [0, 0, 1, 1], [], []>} : vector<192x128xbf16>, vector<128x128xbf16>, vector<192x128xf32> -> vector<192x128xf32>
    %117 = arith.addf %103, %116 : vector<192x128xf32>
    %c8_76 = arith.constant 8 : index
    %c0_77 = arith.constant 0 : index
    %c0_78 = arith.constant 0 : index
    %118 = vector.load %arg5[%c8_76, %c0_77, %c0_78] : memref<9x128x128xbf16, #tpu.memory_space<vmem>>, vector<1x128x128xbf16>
    %119 = vector.shape_cast %118 : vector<1x128x128xbf16> to vector<128x128xbf16>
    %cst_79 = arith.constant dense<0.000000e+00> : vector<192x128xf32>
    %120 = tpu.matmul %109, %119, %cst_79 {dimension_numbers = #tpu.dot_dimension_numbers<[1], [0], [0], [1], [0, 0, 1, 1], [], []>} : vector<192x128xbf16>, vector<128x128xbf16>, vector<192x128xf32> -> vector<192x128xf32>
    %121 = arith.addf %107, %120 : vector<192x128xf32>
    %c191_i32 = arith.constant 191 : i32
    %122 = tpu.dynamic_rotate %117 by %c191_i32 dim 0 : vector<192x128xf32>, i32 -> vector<192x128xf32>
    %123 = arith.addf %113, %122 : vector<192x128xf32>
    %c190_i32 = arith.constant 190 : i32
    %124 = tpu.dynamic_rotate %121 by %c190_i32 dim 0 : vector<192x128xf32>, i32 -> vector<192x128xf32>
    %125 = arith.addf %123, %124 : vector<192x128xf32>
    %c0_80 = arith.constant 0 : index
    %c0_81 = arith.constant 0 : index
    %126 = vector.load %arg6[%c0_80, %c0_81] : memref<1x128xf32, #tpu.memory_space<vmem>>, vector<1x128xf32>
    %127 = vector.broadcast %126 : vector<1x128xf32> to vector<192x128xf32>
    %128 = arith.addf %125, %127 : vector<192x128xf32>
    %c2_i32_82 = arith.constant 2 : i32
    %129 = arith.addi %0, %c2_i32_82 : i32
    %c24_i32_83 = arith.constant 24 : i32
    %130 = arith.muli %129, %c24_i32_83 : i32
    %131 = tpu.assume_multiple %130, 8 : i32
    %c0_84 = arith.constant 0 : index
    %132 = arith.index_cast %131 : i32 to index
    %c0_85 = arith.constant 0 : index
    %133 = vector.load %arg2[%c0_84, %132, %c0_85] : memref<1x480x128xbf16, #tpu.memory_space<vmem>>, vector<1x192x128xbf16>
    %134 = vector.shape_cast %133 : vector<1x192x128xbf16> to vector<192x128xbf16>
    %135 = arith.extf %134 : vector<192x128xbf16> to vector<192x128xf32>
    %136 = arith.addf %128, %135 : vector<192x128xf32>
    %cst_86 = arith.constant 0.000000e+00 : f32
    %137 = vector.broadcast %cst_86 : f32 to vector<192x128xf32>
    %138 = arith.maximumf %136, %137 : vector<192x128xf32>
    %139 = vector.shape_cast %138 : vector<192x128xf32> to vector<8x24x128xf32>
    %140 = vector.extract_strided_slice %139 {offsets = [0, 0, 0], sizes = [8, 16, 128], strides = [1, 1, 1]} : vector<8x24x128xf32> to vector<8x16x128xf32>
    %141 = arith.truncf %140 : vector<8x16x128xf32> to vector<8x16x128xbf16>
    %c0_87 = arith.constant 0 : index
    %c0_88 = arith.constant 0 : index
    %c0_89 = arith.constant 0 : index
    %c0_90 = arith.constant 0 : index
    %142 = vector.load %arg7[%c0_87, %c0_88, %c0_89, %c0_90] : memref<1x8x16x128xbf16, #tpu.memory_space<vmem>>, vector<1x8x16x128xbf16>
    %143 = vector.shape_cast %142 : vector<1x8x16x128xbf16> to vector<8x16x128xbf16>
    %144 = vector.shape_cast %141 : vector<8x16x128xbf16> to vector<1x8x16x128xbf16>
    tpu.vector_store %arg7[%c0_87, %c0_88, %c0_89, %c0_90], %144 {strides = array<i32>} : memref<1x8x16x128xbf16, #tpu.memory_space<vmem>>, vector<1x8x16x128xbf16>,
    return
  }
  func.func @transform_0(%arg0: i32, %arg1: i32) -> (i32, i32, i32) {
    %c0_i32 = arith.constant 0 : i32
    %c0_i32_0 = arith.constant 0 : i32
    %c0_i32_1 = arith.constant 0 : i32
    return %arg0, %c0_i32, %c0_i32_0 : i32, i32, i32
  }
  func.func @transform_1(%arg0: i32, %arg1: i32) -> (i32, i32, i32) {
    %c0_i32 = arith.constant 0 : i32
    %c0_i32_0 = arith.constant 0 : i32
    %c0_i32_1 = arith.constant 0 : i32
    %c0_i32_2 = arith.constant 0 : i32
    return %c0_i32, %c0_i32_0, %c0_i32_1 : i32, i32, i32
  }
  func.func @transform_2(%arg0: i32, %arg1: i32) -> (i32, i32) {
    %c0_i32 = arith.constant 0 : i32
    %c0_i32_0 = arith.constant 0 : i32
    %c0_i32_1 = arith.constant 0 : i32
    return %c0_i32, %c0_i32_0 : i32, i32
  }
  func.func @transform_3(%arg0: i32, %arg1: i32) -> (i32, i32, i32) {
    %c0_i32 = arith.constant 0 : i32
    %c0_i32_0 = arith.constant 0 : i32
    %c0_i32_1 = arith.constant 0 : i32
    %c0_i32_2 = arith.constant 0 : i32
    return %c0_i32, %c0_i32_0, %c0_i32_1 : i32, i32, i32
  }
  func.func @transform_4(%arg0: i32, %arg1: i32) -> (i32, i32) {
    %c0_i32 = arith.constant 0 : i32
    %c0_i32_0 = arith.constant 0 : i32
    %c0_i32_1 = arith.constant 0 : i32
    return %c0_i32, %c0_i32_0 : i32, i32
  }
  func.func @transform_5(%arg0: i32, %arg1: i32) -> (i32, i32, i32, i32) {
    %c0_i32 = arith.constant 0 : i32
    %c0_i32_0 = arith.constant 0 : i32
    %c0_i32_1 = arith.constant 0 : i32
    return %arg0, %arg1, %c0_i32, %c0_i32_0 : i32, i32, i32, i32
  }
}

</mosaic_0001>

<llo_original>
// kernel: tpu_custom_call.1
$region0: #{tpu_custom_call.1}
  #allocation0 [shape = 'u32[]', space=smem, size = 0x4, offset = 0x4, fixed_abs, tag = 'smem constant byte address 0x4 - core index']
  #allocation1 [shape = 'u32[144,128]{1,0:T(1,128)}', space=vmem, size = 0x12000, scoped, tag = 'internal scratch']
  %s0 = inlined_call_operand.hbm [shape: bf16[2,480,128], index: 0, kind: input, shape index: {}]
  %s1 = inlined_call_operand.hbm [shape: bf16[9,128,128], index: 1, kind: input, shape index: {}]
  %s2 = inlined_call_operand.vmem [shape: f32[1,128], index: 2, kind: input, shape index: {}]
  %s3 = inlined_call_operand.hbm [shape: bf16[9,128,128], index: 3, kind: input, shape index: {}]
  %s4 = inlined_call_operand.vmem [shape: f32[1,128], index: 4, kind: input, shape index: {}]
  %s5 = inlined_call_operand.hbm [shape: bf16[2,16,16,128], index: 5, kind: output, shape index: {}]
  %s6 = sld [smem:[#allocation0]]
  $region65: #{tpu_custom_call.1} parent=0
    _
  %s8 = ssub.s32 1, %s6
  %s9 = scalar_select 0, %s8, %s6
  $region1: #{tpu_custom_call.1} parent=0
    #allocation2 [shape = 'u8[245760]{0}', space=vmem, size = 0x3c000, scoped, tag = 'input window, operand 0']
    #allocation3 [shape = 's32[2]{0}', space=sflag, size = 0x8, scoped, tag = 'scoped memory for tpu_custom_call.1']
    #allocation4 [shape = 's32[2]{0}', space=sflag, size = 0x8, scoped, tag = 'scoped memory for tpu_custom_call.1']
    #allocation5 [shape = 'u8[294912]{0}', space=vmem, size = 0x48000, scoped, tag = 'input window, operand 1, single buffered']
    #allocation6 [shape = 's32[1]{0}', space=sflag, size = 0x4, scoped, tag = 'scoped memory for tpu_custom_call.1']
    #allocation7 [shape = 'u8[294912]{0}', space=vmem, size = 0x48000, scoped, tag = 'input window, operand 3, single buffered']
    #allocation8 [shape = 'u8[65536]{0}', space=vmem, size = 0x10000, scoped, tag = 'output window, operand 0']
    %10 = vsyncpa [#allocation3], 0
    %s11 = scalar_lea.sflag [#allocation3], 1
    %12 = vsyncpa %s11, 0
    %13 = vsyncpa [#allocation6], 0
    %14 = vsyncpa [#allocation4], 0
    %s15 = scalar_lea.sflag [#allocation4], 1
    %16 = vsyncpa %s15, 0
    loop: start=0, step=1, limit=6
    $region2: #{tpu_custom_call.1} parent=1 // loop_pre_header
      _
    $region3: #{tpu_custom_call.1} parent=1 // loop_header
      %s18 = sphi 0, %s22
      %p19 = scmp.ge.s32.totalorder %s18, 6
      %s25 = sphi 0, %s37
      %s26 = sphi 0, %s33
      %s27 = sphi 0, %s25
      %s28 = sphi 0, %s26
      %s29 = sphi 0, %s27
      %s30 = sphi 0, %s28
      %s40 = sphi 0, %s42
      %s43 = sphi 0, %s40
      %s44 = sphi 0, %s43
      %s60 = sphi 0, %s44
      %s64 = sphi 0, %s64
      %s66 = sphi 0, %s64
      %s67 = sphi 0, %s66
      %s81 = sphi 0, %s67
      %s85 = sphi 0, %s85
      %s87 = sphi 0, %s85
      %s88 = sphi 0, %s87
      %s102 = sphi 0, %s88
      %s106 = sphi 0, %s106
      %s108 = sphi 0, %s106
      %s109 = sphi 0, %s108
      %s123 = sphi 0, %s109
      %s127 = sphi 0, %s127
      %s129 = sphi 0, %s127
      %s130 = sphi 0, %s129
      %s144 = sphi 0, %s130
      %s152 = sphi 0, %s154
      %s155 = sphi 0, %s152
      %s156 = sphi 0, %s155
      %s172 = sphi 0, %s156
    $region4: #{tpu_custom_call.1} parent=1 // loop_header_branch
      %21 = sbr.rel (%p19) target = $region8
    $region5: #{tpu_custom_call.1} parent=1 // loop_body
      %s23 = ssub.s32 %s18, 1
      %s24 = ssub.s32 %s18, 2
      %s31 = sadd.s32 1, %s26
      %p32 = scmp.ge.s32.totalorder %s31, 2
      %s33 = scalar_select %p32, 0, %s31
      %s34 = sadd.s32 1, %s25
      %s35 = scalar_select %p32, %s34, %s25
      %p36 = scmp.ge.s32.totalorder %s35, 2
      %s37 = scalar_select %p36, 0, %s35
      %s38 = ssub.s32 %s25, %s37
      %p39 = scmp.eq.s32.totalorder %s38, 0
      %s41 = sadd.s32 %s40, 1
      %s42 = scalar_select %p39, %s40, %s41
      %p45 = pneg %p39
      %p46 = scmp.eq.s32.totalorder %s18, 3
      %p47 = por %p45, %p46
      %p48 = scmp.ne.s32.totalorder %s40, %s43
      %p49 = scmp.eq.s32.totalorder %s18, 0
      %p50 = por %p48, %p49
      %p51 = scmp.ne.s32.totalorder %s40, %s43
      %p52 = scmp.eq.s32.totalorder %s23, 3
      %p53 = por %p51, %p52
      %p54 = scmp.ne.s32.totalorder %s43, %s44
      %p55 = scmp.eq.s32.totalorder %s23, 0
      %p56 = por %p54, %p55
      %p57 = scmp.ne.s32.totalorder %s43, %s44
      %p58 = scmp.eq.s32.totalorder %s24, 3
      %p59 = por %p57, %p58
      %p61 = scmp.ne.s32.totalorder %s44, %s60
      %p62 = scmp.eq.s32.totalorder %s24, 0
      %p63 = por %p61, %p62
      %s65 = sadd.s32 %s64, 1
      %p68 = scmp.eq.s32.totalorder %s18, 3
      %p69 = scmp.ne.s32.totalorder %s64, %s66
      %p70 = scmp.eq.s32.totalorder %s18, 0
      %p71 = por %p69, %p70
      %p72 = scmp.ne.s32.totalorder %s64, %s66
      %p73 = scmp.eq.s32.totalorder %s23, 3
      %p74 = por %p72, %p73
      %p75 = scmp.ne.s32.totalorder %s66, %s67
      %p76 = scmp.eq.s32.totalorder %s23, 0
      %p77 = por %p75, %p76
      %p78 = scmp.ne.s32.totalorder %s66, %s67
      %p79 = scmp.eq.s32.totalorder %s24, 3
      %p80 = por %p78, %p79
      %p82 = scmp.ne.s32.totalorder %s67, %s81
      %p83 = scmp.eq.s32.totalorder %s24, 0
      %p84 = por %p82, %p83
      %s86 = sadd.s32 %s85, 1
      %p89 = scmp.eq.s32.totalorder %s18, 3
      %p90 = scmp.ne.s32.totalorder %s85, %s87
      %p91 = scmp.eq.s32.totalorder %s18, 0
      %p92 = por %p90, %p91
      %p93 = scmp.ne.s32.totalorder %s85, %s87
      %p94 = scmp.eq.s32.totalorder %s23, 3
      %p95 = por %p93, %p94
      %p96 = scmp.ne.s32.totalorder %s87, %s88
      %p97 = scmp.eq.s32.totalorder %s23, 0
      %p98 = por %p96, %p97
      %p99 = scmp.ne.s32.totalorder %s87, %s88
      %p100 = scmp.eq.s32.totalorder %s24, 3
      %p101 = por %p99, %p100
      %p103 = scmp.ne.s32.totalorder %s88, %s102
      %p104 = scmp.eq.s32.totalorder %s24, 0
      %p105 = por %p103, %p104
      %s107 = sadd.s32 %s106, 1
      %p110 = scmp.eq.s32.totalorder %s18, 3
      %p111 = scmp.ne.s32.totalorder %s106, %s108
      %p112 = scmp.eq.s32.totalorder %s18, 0
      %p113 = por %p111, %p112
      %p114 = scmp.ne.s32.totalorder %s106, %s108
      %p115 = scmp.eq.s32.totalorder %s23, 3
      %p116 = por %p114, %p115
      %p117 = scmp.ne.s32.totalorder %s108, %s109
      %p118 = scmp.eq.s32.totalorder %s23, 0
      %p119 = por %p117, %p118
      %p120 = scmp.ne.s32.totalorder %s108, %s109
      %p121 = scmp.eq.s32.totalorder %s24, 3
      %p122 = por %p120, %p121
      %p124 = scmp.ne.s32.totalorder %s109, %s123
      %p125 = scmp.eq.s32.totalorder %s24, 0
      %p126 = por %p124, %p125
      %s128 = sadd.s32 %s127, 1
      %p131 = scmp.eq.s32.totalorder %s18, 3
      %p132 = scmp.ne.s32.totalorder %s127, %s129
      %p133 = scmp.eq.s32.totalorder %s18, 0
      %p134 = por %p132, %p133
      %p135 = scmp.ne.s32.totalorder %s127, %s129
      %p136 = scmp.eq.s32.totalorder %s23, 3
      %p137 = por %p135, %p136
      %p138 = scmp.ne.s32.totalorder %s129, %s130
      %p139 = scmp.eq.s32.totalorder %s23, 0
      %p140 = por %p138, %p139
      %p141 = scmp.ne.s32.totalorder %s129, %s130
      %p142 = scmp.eq.s32.totalorder %s24, 3
      %p143 = por %p141, %p142
      %p145 = scmp.ne.s32.totalorder %s130, %s144
      %p146 = scmp.eq.s32.totalorder %s24, 0
      %p147 = por %p145, %p146
      %s148 = ssub.s32 %s25, %s37
      %s149 = ssub.s32 %s26, %s33
      %s150 = sor.u32 %s148, %s149
      %p151 = scmp.eq.s32.totalorder %s150, 0
      %s153 = sadd.s32 %s152, 1
      %s154 = scalar_select %p151, %s152, %s153
      %p157 = pneg %p151
      %p158 = scmp.eq.s32.totalorder %s18, 3
      %p159 = por %p157, %p158
      %p160 = scmp.ne.s32.totalorder %s152, %s155
      %p161 = scmp.eq.s32.totalorder %s18, 0
      %p162 = por %p160, %p161
      %p163 = scmp.ne.s32.totalorder %s152, %s155
      %p164 = scmp.eq.s32.totalorder %s23, 3
      %p165 = por %p163, %p164
      %p166 = scmp.ne.s32.totalorder %s155, %s156
      %p167 = scmp.eq.s32.totalorder %s23, 0
      %p168 = por %p166, %p167
      %p169 = scmp.ne.s32.totalorder %s155, %s156
      %p170 = scmp.eq.s32.totalorder %s24, 3
      %p171 = por %p169, %p170
      %p173 = scmp.ne.s32.totalorder %s156, %s172
      %p174 = scmp.eq.s32.totalorder %s24, 0
      %p175 = por %p173, %p174
      %p176 = scmp.le.s32.totalorder 1, %s18
      %p177 = scmp.lt.s32.totalorder %s18, 5
      %p178 = pnand %p176, %p177
      %p179 = pneg %p178
      // Predicated region
      $region9: #{tpu_custom_call.1} parent=5 // pred_check
        _
      $region10: #{tpu_custom_call.1} parent=5 // pred_check_branch
        %181 = sbr.rel (%p178) target = $region12
      $region11: #{tpu_custom_call.1} parent=5 // pred_region
        %s182 = ssub.s32 %s18, 1
        // Predicated region
        $region13: #{tpu_custom_call.1} parent=11 // pred_check
          %p183 = pneg %p77
        $region14: #{tpu_custom_call.1} parent=11 // pred_check_branch
          %185 = sbr.rel (%p183) target = $region16
        $region15: #{tpu_custom_call.1} parent=11 // pred_region
          %s187 = ssub.s32 9216, 9216
          %188 = vsyncadd [#allocation6], %s187
          %s189 = sshll.u32 [#allocation5], 4
          %s190 = int_to_ptr.vmem [resolvable:$true] %s189
          %195 = dma.hbm_to_vmem [thread:$0]  %s1, 9216, %s190, [#allocation6], 64, 64, 4
        $region16: #{tpu_custom_call.1} parent=11 // pred_fallthru
          _
        // Predicated region
        $region17: #{tpu_custom_call.1} parent=11 // pred_check
          %p196 = pneg %p98
        $region18: #{tpu_custom_call.1} parent=11 // pred_check_branch
          %198 = sbr.rel (%p196) target = $region20
        $region19: #{tpu_custom_call.1} parent=11 // pred_region
          _
        $region20: #{tpu_custom_call.1} parent=11 // pred_fallthru
          _
        // Predicated region
        $region21: #{tpu_custom_call.1} parent=11 // pred_check
          %p199 = pneg %p119
        $region22: #{tpu_custom_call.1} parent=11 // pred_check_branch
          %201 = sbr.rel (%p199) target = $region24
        $region23: #{tpu_custom_call.1} parent=11 // pred_region
          %s203 = ssub.s32 9216, 9216
          %204 = vsyncadd [#allocation6], %s203
          %s205 = sshll.u32 [#allocation7], 4
          %s206 = int_to_ptr.vmem [resolvable:$true] %s205
          %211 = dma.hbm_to_vmem [thread:$0]  %s3, 9216, %s206, [#allocation6], 64, 64, 4
        $region24: #{tpu_custom_call.1} parent=11 // pred_fallthru
          _
        // Predicated region
        $region25: #{tpu_custom_call.1} parent=11 // pred_check
          %p212 = pneg %p140
        $region26: #{tpu_custom_call.1} parent=11 // pred_check_branch
          %214 = sbr.rel (%p212) target = $region28
        $region27: #{tpu_custom_call.1} parent=11 // pred_region
          _
        $region28: #{tpu_custom_call.1} parent=11 // pred_fallthru
          _
      $region12: #{tpu_custom_call.1} parent=5 // pred_fallthru
        _
      %p215 = scmp.lt.s32.totalorder %s18, 4
      // Predicated region
      $region29: #{tpu_custom_call.1} parent=5 // pred_check
        %p216 = pneg %p215
      $region30: #{tpu_custom_call.1} parent=5 // pred_check_branch
        %218 = sbr.rel (%p216) target = $region32
      $region31: #{tpu_custom_call.1} parent=5 // pred_region
        // Predicated region
        $region33: #{tpu_custom_call.1} parent=31 // pred_check
          %p219 = pneg %p50
        $region34: #{tpu_custom_call.1} parent=31 // pred_check_branch
          %221 = sbr.rel (%p219) target = $region36
        $region35: #{tpu_custom_call.1} parent=31 // pred_region
          %s222 = sand.u32 %s40, 1
          %s223 = scalar_lea.sflag [#allocation3], %s222
          %s224 = sand.u32 %s40, 1
          %s225 = smul.addr %s224, 240
          %s226 = scalar_lea.vmem [#allocation2], %s225
          %s228 = ssub.s32 3840, 3840
          %229 = vsyncadd %s223, %s228
          %s230 = smul.addr %s25, 60
          %s231 = smul.addr %s230, 64
          %s232 = scalar_lea.hbm %s0, %s231
          %s233 = sshll.u32 %s226, 4
          %s234 = int_to_ptr.vmem [resolvable:$true] %s233
          %239 = dma.hbm_to_vmem [thread:$0]  %s232, 3840, %s234, %s223, 64, 64, 4
        $region36: #{tpu_custom_call.1} parent=31 // pred_fallthru
          _
      $region32: #{tpu_custom_call.1} parent=5 // pred_fallthru
        _
      %p240 = scmp.le.s32.totalorder 1, %s18
      %p241 = scmp.lt.s32.totalorder %s18, 5
      %p242 = pnand %p240, %p241
      %p243 = pneg %p242
      // Predicated region
      $region37: #{tpu_custom_call.1} parent=5 // pred_check
        _
      $region38: #{tpu_custom_call.1} parent=5 // pred_check_branch
        %245 = sbr.rel (%p242) target = $region40
      $region39: #{tpu_custom_call.1} parent=5 // pred_region
        %s246 = ssub.s32 %s18, 1
        %s247 = sand.u32 %s43, 1
        %s248 = scalar_lea.sflag [#allocation3], %s247
        %s249 = sand.u32 %s43, 1
        %s250 = smul.addr %s249, 240
        %s251 = scalar_lea.vmem [#allocation2], %s250
        // Predicated region
        $region41: #{tpu_custom_call.1} parent=39 // pred_check
          %p252 = pneg %p56
        $region42: #{tpu_custom_call.1} parent=39 // pred_check_branch
          %254 = sbr.rel (%p252) target = $region44
        $region43: #{tpu_custom_call.1} parent=39 // pred_region
          %255 = dma.done %s248, 3840
        $region44: #{tpu_custom_call.1} parent=39 // pred_fallthru
          _
        // Predicated region
        $region45: #{tpu_custom_call.1} parent=39 // pred_check
          %p256 = pneg %p77
        $region46: #{tpu_custom_call.1} parent=39 // pred_check_branch
          %258 = sbr.rel (%p256) target = $region48
        $region47: #{tpu_custom_call.1} parent=39 // pred_region
          %259 = dma.done [#allocation6], 9216
        $region48: #{tpu_custom_call.1} parent=39 // pred_fallthru
          _
        // Predicated region
        $region49: #{tpu_custom_call.1} parent=39 // pred_check
          %p260 = pneg %p119
        $region50: #{tpu_custom_call.1} parent=39 // pred_check_branch
          %262 = sbr.rel (%p260) target = $region52
        $region51: #{tpu_custom_call.1} parent=39 // pred_region
          %263 = dma.done [#allocation6], 9216
        $region52: #{tpu_custom_call.1} parent=39 // pred_fallthru
          _
        %s264 = sand.u32 %s43, 1
        %s265 = scalar_lea.sflag [#allocation3], %s264
        %s266 = sand.u32 %s43, 1
        %s267 = smul.addr %s266, 240
        %s268 = scalar_lea.vmem [#allocation2], %s267
        %p269 = pneg %p56
        %p270 = pneg %p53
        %p271 = pneg %p77
        %p272 = pneg %p74
        %p273 = pneg %p98
        %p274 = pneg %p95
        %p275 = pneg %p119
        %p276 = pneg %p116
        %p277 = pneg %p140
        %p278 = pneg %p137
        %p279 = pneg %p168
        %p280 = pneg %p165
        %s281 = sand.u32 %s155, 1
        %s282 = scalar_lea.sflag [#allocation4], %s281
        %s283 = sand.u32 %s155, 1
        %s284 = smul.addr %s283, 64
        %s285 = scalar_lea.vmem [#allocation8], %s284
        %s286 = smul.u32 8, %s28
        %s288 = smul.u32 %s28, 8
        %s289 = smul.u32 %s28, 192
        %s290 = sshra.s32 %s289, 3
        %s291 = sand.u32 %s289, 7
        %s292 = smul.addr %s290, 4
        %s293 = scalar_lea.vmem %s251, %s292 [#allocation2]
        %v294 = vld [vmem:[%s293] sm:$0xf]
        %v295 = vld [vmem:[%s293 + $0x4] sm:$0xf]
        %v296 = vld [vmem:[%s293 + $0x8] sm:$0xf]
        %v297 = vld [vmem:[%s293 + $0xc] sm:$0xf]
        %v298 = vld [vmem:[%s293 + $0x10] sm:$0xf]
        %v299 = vld [vmem:[%s293 + $0x14] sm:$0xf]
        %v300 = vld [vmem:[%s293 + $0x18] sm:$0xf]
        %v301 = vld [vmem:[%s293 + $0x1c] sm:$0xf]
        %v302 = vld [vmem:[%s293 + $0x20] sm:$0xf]
        %v303 = vld [vmem:[%s293 + $0x24] sm:$0xf]
        %v304 = vld [vmem:[%s293 + $0x28] sm:$0xf]
        %v305 = vld [vmem:[%s293 + $0x2c] sm:$0xf]
        %v306 = vld [vmem:[%s293 + $0x30] sm:$0xf]
        %v307 = vld [vmem:[%s293 + $0x34] sm:$0xf]
        %v308 = vld [vmem:[%s293 + $0x38] sm:$0xf]
        %v309 = vld [vmem:[%s293 + $0x3c] sm:$0xf]
        %v310 = vld [vmem:[%s293 + $0x40] sm:$0xf]
        %v311 = vld [vmem:[%s293 + $0x44] sm:$0xf]
        %v312 = vld [vmem:[%s293 + $0x48] sm:$0xf]
        %v313 = vld [vmem:[%s293 + $0x4c] sm:$0xf]
        %v314 = vld [vmem:[%s293 + $0x50] sm:$0xf]
        %v315 = vld [vmem:[%s293 + $0x54] sm:$0xf]
        %v316 = vld [vmem:[%s293 + $0x58] sm:$0xf]
        %v317 = vld [vmem:[%s293 + $0x5c] sm:$0xf]
        %v318 = vld [vmem:[%s293 + $0x60] sm:$0xf]
        %v319 = vld [vmem:[%s293 + $0x64] sm:$0xf]
        %v320 = vld [vmem:[%s293 + $0x68] sm:$0xf]
        %v321 = vld [vmem:[%s293 + $0x6c] sm:$0xf]
        %v322 = vld [vmem:[%s293 + $0x70] sm:$0xf]
        %v323 = vld [vmem:[%s293 + $0x74] sm:$0xf]
        %v324 = vld [vmem:[#allocation5] sm:$0xf]
        %v325 = vld [vmem:[#allocation5 + $0x4] sm:$0xf]
        %v326 = vld [vmem:[#allocation5 + $0x8] sm:$0xf]
        %v327 = vld [vmem:[#allocation5 + $0xc] sm:$0xf]
        %v328 = vld [vmem:[#allocation5 + $0x10] sm:$0xf]
        %v329 = vld [vmem:[#allocation5 + $0x14] sm:$0xf]
        %v330 = vld [vmem:[#allocation5 + $0x18] sm:$0xf]
        %v331 = vld [vmem:[#allocation5 + $0x1c] sm:$0xf]
        %v332 = vld [vmem:[#allocation5 + $0x20] sm:$0xf]
        %v333 = vld [vmem:[#allocation5 + $0x24] sm:$0xf]
        %v334 = vld [vmem:[#allocation5 + $0x28] sm:$0xf]
        %v335 = vld [vmem:[#allocation5 + $0x2c] sm:$0xf]
        %v336 = vld [vmem:[#allocation5 + $0x30] sm:$0xf]
        %v337 = vld [vmem:[#allocation5 + $0x34] sm:$0xf]
        %v338 = vld [vmem:[#allocation5 + $0x38] sm:$0xf]
        %v339 = vld [vmem:[#allocation5 + $0x3c] sm:$0xf]
        %s340 = scalar_lea.vmem [#allocation5], 64
        %v341 = vld [vmem:[%s340] sm:$0xf]
        %v342 = vld [vmem:[%s340 + $0x4] sm:$0xf]
        %v343 = vld [vmem:[%s340 + $0x8] sm:$0xf]
        %v344 = vld [vmem:[%s340 + $0xc] sm:$0xf]
        %v345 = vld [vmem:[%s340 + $0x10] sm:$0xf]
        %v346 = vld [vmem:[%s340 + $0x14] sm:$0xf]
        %v347 = vld [vmem:[%s340 + $0x18] sm:$0xf]
        %v348 = vld [vmem:[%s340 + $0x1c] sm:$0xf]
        %v349 = vld [vmem:[%s340 + $0x20] sm:$0xf]
        %v350 = vld [vmem:[%s340 + $0x24] sm:$0xf]
        %v351 = vld [vmem:[%s340 + $0x28] sm:$0xf]
        %v352 = vld [vmem:[%s340 + $0x2c] sm:$0xf]
        %v353 = vld [vmem:[%s340 + $0x30] sm:$0xf]
        %v354 = vld [vmem:[%s340 + $0x34] sm:$0xf]
        %v355 = vld [vmem:[%s340 + $0x38] sm:$0xf]
        %v356 = vld [vmem:[%s340 + $0x3c] sm:$0xf]
        %s357 = scalar_lea.vmem [#allocation5], 128
        %v358 = vld [vmem:[%s357] sm:$0xf]
        %v359 = vld [vmem:[%s357 + $0x4] sm:$0xf]
        %v360 = vld [vmem:[%s357 + $0x8] sm:$0xf]
        %v361 = vld [vmem:[%s357 + $0xc] sm:$0xf]
        %v362 = vld [vmem:[%s357 + $0x10] sm:$0xf]
        %v363 = vld [vmem:[%s357 + $0x14] sm:$0xf]
        %v364 = vld [vmem:[%s357 + $0x18] sm:$0xf]
        %v365 = vld [vmem:[%s357 + $0x1c] sm:$0xf]
        %v366 = vld [vmem:[%s357 + $0x20] sm:$0xf]
        %v367 = vld [vmem:[%s357 + $0x24] sm:$0xf]
        %v368 = vld [vmem:[%s357 + $0x28] sm:$0xf]
        %v369 = vld [vmem:[%s357 + $0x2c] sm:$0xf]
        %v370 = vld [vmem:[%s357 + $0x30] sm:$0xf]
        %v371 = vld [vmem:[%s357 + $0x34] sm:$0xf]
        %v372 = vld [vmem:[%s357 + $0x38] sm:$0xf]
        %v373 = vld [vmem:[%s357 + $0x3c] sm:$0xf]
        %s374 = sadd.s32 %s288, 1
        %s375 = smul.u32 %s374, 24
        %s376 = sshra.s32 %s375, 3
        %s377 = sand.u32 %s375, 7
        %s378 = smul.addr %s376, 4
        %s379 = scalar_lea.vmem %s251, %s378 [#allocation2]
        %v380 = vld [vmem:[%s379] sm:$0xf]
        %v381 = vld [vmem:[%s379 + $0x4] sm:$0xf]
        %v382 = vld [vmem:[%s379 + $0x8] sm:$0xf]
        %v383 = vld [vmem:[%s379 + $0xc] sm:$0xf]
        %v384 = vld [vmem:[%s379 + $0x10] sm:$0xf]
        %v385 = vld [vmem:[%s379 + $0x14] sm:$0xf]
        %v386 = vld [vmem:[%s379 + $0x18] sm:$0xf]
        %v387 = vld [vmem:[%s379 + $0x1c] sm:$0xf]
        %v388 = vld [vmem:[%s379 + $0x20] sm:$0xf]
        %v389 = vld [vmem:[%s379 + $0x24] sm:$0xf]
        %v390 = vld [vmem:[%s379 + $0x28] sm:$0xf]
        %v391 = vld [vmem:[%s379 + $0x2c] sm:$0xf]
        %v392 = vld [vmem:[%s379 + $0x30] sm:$0xf]
        %v393 = vld [vmem:[%s379 + $0x34] sm:$0xf]
        %v394 = vld [vmem:[%s379 + $0x38] sm:$0xf]
        %v395 = vld [vmem:[%s379 + $0x3c] sm:$0xf]
        %v396 = vld [vmem:[%s379 + $0x40] sm:$0xf]
        %v397 = vld [vmem:[%s379 + $0x44] sm:$0xf]
        %v398 = vld [vmem:[%s379 + $0x48] sm:$0xf]
        %v399 = vld [vmem:[%s379 + $0x4c] sm:$0xf]
        %v400 = vld [vmem:[%s379 + $0x50] sm:$0xf]
        %v401 = vld [vmem:[%s379 + $0x54] sm:$0xf]
        %v402 = vld [vmem:[%s379 + $0x58] sm:$0xf]
        %v403 = vld [vmem:[%s379 + $0x5c] sm:$0xf]
        %v404 = vld [vmem:[%s379 + $0x60] sm:$0xf]
        %v405 = vld [vmem:[%s379 + $0x64] sm:$0xf]
        %v406 = vld [vmem:[%s379 + $0x68] sm:$0xf]
        %v407 = vld [vmem:[%s379 + $0x6c] sm:$0xf]
        %v408 = vld [vmem:[%s379 + $0x70] sm:$0xf]
        %v409 = vld [vmem:[%s379 + $0x74] sm:$0xf]
        %s410 = scalar_lea.vmem [#allocation5], 192
        %v411 = vld [vmem:[%s410] sm:$0xf]
        %v412 = vld [vmem:[%s410 + $0x4] sm:$0xf]
        %v413 = vld [vmem:[%s410 + $0x8] sm:$0xf]
        %v414 = vld [vmem:[%s410 + $0xc] sm:$0xf]
        %v415 = vld [vmem:[%s410 + $0x10] sm:$0xf]
        %v416 = vld [vmem:[%s410 + $0x14] sm:$0xf]
        %v417 = vld [vmem:[%s410 + $0x18] sm:$0xf]
        %v418 = vld [vmem:[%s410 + $0x1c] sm:$0xf]
        %v419 = vld [vmem:[%s410 + $0x20] sm:$0xf]
        %v420 = vld [vmem:[%s410 + $0x24] sm:$0xf]
        %v421 = vld [vmem:[%s410 + $0x28] sm:$0xf]
        %v422 = vld [vmem:[%s410 + $0x2c] sm:$0xf]
        %v423 = vld [vmem:[%s410 + $0x30] sm:$0xf]
        %v424 = vld [vmem:[%s410 + $0x34] sm:$0xf]
        %v425 = vld [vmem:[%s410 + $0x38] sm:$0xf]
        %v426 = vld [vmem:[%s410 + $0x3c] sm:$0xf]
        %v457 = vunpack.c.l.b16 %v380
        %v458 = vunpack.c.l.b16 %v381
        %v459 = vunpack.c.l.b16 %v382
        %v460 = vunpack.c.l.b16 %v383
        %v461 = vunpack.c.l.b16 %v384
        %v462 = vunpack.c.l.b16 %v385
        %v463 = vunpack.c.l.b16 %v386
        %v464 = vunpack.c.l.b16 %v387
        %v465 = vunpack.c.l.b16 %v388
        %v466 = vunpack.c.l.b16 %v389
        %v467 = vunpack.c.l.b16 %v390
        %v468 = vunpack.c.l.b16 %v391
        %v469 = vunpack.c.l.b16 %v392
        %v470 = vunpack.c.l.b16 %v393
        %v471 = vunpack.c.l.b16 %v394
        %v472 = vunpack.c.l.b16 %v395
        %v473 = vunpack.c.l.b16 %v396
        %v474 = vunpack.c.l.b16 %v397
        %v475 = vunpack.c.l.b16 %v398
        %v476 = vunpack.c.l.b16 %v399
        %v477 = vunpack.c.l.b16 %v400
        %v478 = vunpack.c.l.b16 %v401
        %v479 = vunpack.c.l.b16 %v402
        %v480 = vunpack.c.l.b16 %v403
        %v481 = vunpack.c.l.b16 %v404
        %v482 = vunpack.c.l.b16 %v405
        %v483 = vunpack.c.l.b16 %v406
        %v484 = vunpack.c.l.b16 %v407
        %v485 = vunpack.c.l.b16 %v408
        %v486 = vunpack.c.l.b16 %v409
        %v487 = vpack.c.b16 %v458, %v457
        %v488 = vpack.c.b16 %v460, %v459
        %v489 = vpack.c.b16 %v462, %v461
        %v490 = vpack.c.b16 %v464, %v463
        %v491 = vpack.c.b16 %v466, %v465
        %v492 = vpack.c.b16 %v468, %v467
        %v493 = vpack.c.b16 %v470, %v469
        %v494 = vpack.c.b16 %v472, %v471
        %v495 = vpack.c.b16 %v474, %v473
        %v496 = vpack.c.b16 %v476, %v475
        %v497 = vpack.c.b16 %v478, %v477
        %v498 = vpack.c.b16 %v480, %v479
        %v499 = vpack.c.b16 %v482, %v481
        %v500 = vpack.c.b16 %v484, %v483
        %v501 = vpack.c.b16 %v486, %v485
        %v533 = vunpack.c.l.b16 %v411
        %v534 = vunpack.c.l.b16 %v412
        %v535 = vunpack.c.l.b16 %v413
        %v536 = vunpack.c.l.b16 %v414
        %v537 = vunpack.c.l.b16 %v415
        %v538 = vunpack.c.l.b16 %v416
        %v539 = vunpack.c.l.b16 %v417
        %v540 = vunpack.c.l.b16 %v418
        %v541 = vunpack.c.l.b16 %v419
        %v542 = vunpack.c.l.b16 %v420
        %v543 = vunpack.c.l.b16 %v421
        %v544 = vunpack.c.l.b16 %v422
        %v545 = vunpack.c.l.b16 %v423
        %v546 = vunpack.c.l.b16 %v424
        %v547 = vunpack.c.l.b16 %v425
        %v548 = vunpack.c.l.b16 %v426
        %v549 = vpack.c.b16 %v534, %v533
        %v550 = vpack.c.b16 %v536, %v535
        %v551 = vpack.c.b16 %v538, %v537
        %v552 = vpack.c.b16 %v540, %v539
        %v553 = vpack.c.b16 %v542, %v541
        %v554 = vpack.c.b16 %v544, %v543
        %v555 = vpack.c.b16 %v546, %v545
        %v556 = vpack.c.b16 %v548, %v547
        %565 = vmatprep.subr.bf16.mxu0 0
        %566 = vmatpush1.bf16.msra.mxu0 %v556
        %567 = vmatprep.subr.bf16.mxu0 0
        %568 = vmatpush1.bf16.msra.mxu0 %v555
        %569 = vmatprep.subr.bf16.mxu0 0
        %570 = vmatpush1.bf16.msra.mxu0 %v554
        %571 = vmatprep.subr.bf16.mxu0 0
        %572 = vmatpush1.bf16.msra.mxu0 %v553
        %573 = vmatprep.subr.bf16.mxu0 0
        %574 = vmatpush1.bf16.msra.mxu0 %v552
        %575 = vmatprep.subr.bf16.mxu0 0
        %576 = vmatpush1.bf16.msra.mxu0 %v551
        %577 = vmatprep.subr.bf16.mxu0 0
        %578 = vmatpush1.bf16.msra.mxu0 %v550
        %579 = vmatprep.subr.bf16.mxu0 0
        %580 = vmatpush1.bf16.msra.mxu0 %v549
        %581 = vmatprep.subr.bf16.mxu0 0
        %582 = vmatpush2.bf16.msra.mxu0 0
        %583 = vmatprep.subr.bf16.mxu0 0
        %584 = vmatpush2.bf16.msra.mxu0 0
        %585 = vmatprep.subr.bf16.mxu0 0
        %586 = vmatpush2.bf16.msra.mxu0 0
        %587 = vmatprep.subr.bf16.mxu0 0
        %588 = vmatpush2.bf16.msra.mxu0 0
        %589 = vmatprep.subr.bf16.mxu0 0
        %590 = vmatpush2.bf16.msra.mxu0 0
        %591 = vmatprep.subr.bf16.mxu0 0
        %592 = vmatpush2.bf16.msra.mxu0 0
        %593 = vmatprep.subr.bf16.mxu0 0
        %594 = vmatpush2.bf16.msra.mxu0 0
        %595 = vmatprep.subr.bf16.mxu0 0
        %596 = vmatpush2.bf16.msra.mxu0 0
        %597 = vmatprep.mubr.bf16.mxu0 0
        %598 = vmatmul.mubr.bf16.gmra.mxu0 %v487
        %v599 = vpop.f32.mrf.mxu0
        %v600 = vadd.f32 0.0, %v599
        %v601 = vpop.f32.mrf.mxu0
        %v602 = vpop.f32.mrf.mxu0
        %v603 = vadd.f32 0.0, %v602
        %v604 = vpop.f32.mrf.mxu0
        %605 = vmatprep.mubr.bf16.mxu0 0
        %606 = vmatmul.mubr.bf16.gmra.mxu0 %v488
        %v607 = vpop.f32.mrf.mxu0
        %v608 = vadd.f32 0.0, %v607
        %v609 = vpop.f32.mrf.mxu0
        %v610 = vpop.f32.mrf.mxu0
        %v611 = vadd.f32 0.0, %v610
        %v612 = vpop.f32.mrf.mxu0
        %613 = vmatprep.mubr.bf16.mxu0 0
        %614 = vmatmul.mubr.bf16.gmra.mxu0 %v489
        %v615 = vpop.f32.mrf.mxu0
        %v616 = vadd.f32 0.0, %v615
        %v617 = vpop.f32.mrf.mxu0
        %v618 = vpop.f32.mrf.mxu0
        %v619 = vadd.f32 0.0, %v618
        %v620 = vpop.f32.mrf.mxu0
        %621 = vmatprep.mubr.bf16.mxu0 0
        %622 = vmatmul.mubr.bf16.gmra.mxu0 %v490
        %v623 = vpop.f32.mrf.mxu0
        %v624 = vadd.f32 0.0, %v623
        %v625 = vpop.f32.mrf.mxu0
        %v626 = vpop.f32.mrf.mxu0
        %v627 = vadd.f32 0.0, %v626
        %v628 = vpop.f32.mrf.mxu0
        %629 = vmatprep.mubr.bf16.mxu0 0
        %630 = vmatmul.mubr.bf16.gmra.mxu0 %v491
        %v631 = vpop.f32.mrf.mxu0
        %v632 = vadd.f32 0.0, %v631
        %v633 = vpop.f32.mrf.mxu0
        %v634 = vpop.f32.mrf.mxu0
        %v635 = vadd.f32 0.0, %v634
        %v636 = vpop.f32.mrf.mxu0
        %637 = vmatprep.mubr.bf16.mxu0 0
        %638 = vmatmul.mubr.bf16.gmra.mxu0 %v492
        %v639 = vpop.f32.mrf.mxu0
        %v640 = vadd.f32 0.0, %v639
        %v641 = vpop.f32.mrf.mxu0
        %v642 = vpop.f32.mrf.mxu0
        %v643 = vadd.f32 0.0, %v642
        %v644 = vpop.f32.mrf.mxu0
        %645 = vmatprep.mubr.bf16.mxu0 0
        %646 = vmatmul.mubr.bf16.gmra.mxu0 %v493
        %v647 = vpop.f32.mrf.mxu0
        %v648 = vadd.f32 0.0, %v647
        %v649 = vpop.f32.mrf.mxu0
        %v650 = vpop.f32.mrf.mxu0
        %v651 = vadd.f32 0.0, %v650
        %v652 = vpop.f32.mrf.mxu0
        %653 = vmatprep.mubr.bf16.mxu0 0
        %654 = vmatmul.mubr.bf16.gmra.mxu0 %v494
        %v655 = vpop.f32.mrf.mxu0
        %v656 = vadd.f32 0.0, %v655
        %v657 = vpop.f32.mrf.mxu0
        %v658 = vpop.f32.mrf.mxu0
        %v659 = vadd.f32 0.0, %v658
        %v660 = vpop.f32.mrf.mxu0
        %661 = vmatprep.mubr.bf16.mxu0 0
        %662 = vmatmul.mubr.bf16.gmra.mxu0 %v495
        %v663 = vpop.f32.mrf.mxu0
        %v664 = vadd.f32 0.0, %v663
        %v665 = vpop.f32.mrf.mxu0
        %v666 = vpop.f32.mrf.mxu0
        %v667 = vadd.f32 0.0, %v666
        %v668 = vpop.f32.mrf.mxu0
        %669 = vmatprep.mubr.bf16.mxu0 0
        %670 = vmatmul.mubr.bf16.gmra.mxu0 %v496
        %v671 = vpop.f32.mrf.mxu0
        %v672 = vadd.f32 0.0, %v671
        %v673 = vpop.f32.mrf.mxu0
        %v674 = vpop.f32.mrf.mxu0
        %v675 = vadd.f32 0.0, %v674
        %v676 = vpop.f32.mrf.mxu0
        %677 = vmatprep.mubr.bf16.mxu0 0
        %678 = vmatmul.mubr.bf16.gmra.mxu0 %v497
        %v679 = vpop.f32.mrf.mxu0
        %v680 = vadd.f32 0.0, %v679
        %v681 = vpop.f32.mrf.mxu0
        %v682 = vpop.f32.mrf.mxu0
        %v683 = vadd.f32 0.0, %v682
        %v684 = vpop.f32.mrf.mxu0
        %685 = vmatprep.mubr.bf16.mxu0 0
        %686 = vmatmul.mubr.bf16.gmra.mxu0 %v498
        %v687 = vpop.f32.mrf.mxu0
        %v688 = vadd.f32 0.0, %v687
        %v689 = vpop.f32.mrf.mxu0
        %v690 = vpop.f32.mrf.mxu0
        %v691 = vadd.f32 0.0, %v690
        %v692 = vpop.f32.mrf.mxu0
        %693 = vmatprep.mubr.bf16.mxu0 0
        %694 = vmatmul.mubr.bf16.gmra.mxu0 %v499
        %v695 = vpop.f32.mrf.mxu0
        %v696 = vadd.f32 0.0, %v695
        %v697 = vpop.f32.mrf.mxu0
        %v698 = vpop.f32.mrf.mxu0
        %v699 = vadd.f32 0.0, %v698
        %v700 = vpop.f32.mrf.mxu0
        %701 = vmatprep.mubr.bf16.mxu0 0
        %702 = vmatmul.mubr.bf16.gmra.mxu0 %v500
        %v703 = vpop.f32.mrf.mxu0
        %v704 = vadd.f32 0.0, %v703
        %v705 = vpop.f32.mrf.mxu0
        %v706 = vpop.f32.mrf.mxu0
        %v707 = vadd.f32 0.0, %v706
        %v708 = vpop.f32.mrf.mxu0
        %709 = vmatprep.mubr.bf16.mxu0 0
        %710 = vmatmul.mubr.bf16.gmra.mxu0 %v501
        %v711 = vpop.f32.mrf.mxu0
        %v712 = vadd.f32 0.0, %v711
        %v713 = vpop.f32.mrf.mxu0
        %v714 = vpop.f32.mrf.mxu0
        %v715 = vadd.f32 0.0, %v714
        %v716 = vpop.f32.mrf.mxu0
        %717 = vdwg.mxu0
        %v748 = vunpack.c.l.b16 %v294
        %v749 = vunpack.c.l.b16 %v295
        %v750 = vunpack.c.l.b16 %v296
        %v751 = vunpack.c.l.b16 %v297
        %v752 = vunpack.c.l.b16 %v298
        %v753 = vunpack.c.l.b16 %v299
        %v754 = vunpack.c.l.b16 %v300
        %v755 = vunpack.c.l.b16 %v301
        %v756 = vunpack.c.l.b16 %v302
        %v757 = vunpack.c.l.b16 %v303
        %v758 = vunpack.c.l.b16 %v304
        %v759 = vunpack.c.l.b16 %v305
        %v760 = vunpack.c.l.b16 %v306
        %v761 = vunpack.c.l.b16 %v307
        %v762 = vunpack.c.l.b16 %v308
        %v763 = vunpack.c.l.b16 %v309
        %v764 = vunpack.c.l.b16 %v310
        %v765 = vunpack.c.l.b16 %v311
        %v766 = vunpack.c.l.b16 %v312
        %v767 = vunpack.c.l.b16 %v313
        %v768 = vunpack.c.l.b16 %v314
        %v769 = vunpack.c.l.b16 %v315
        %v770 = vunpack.c.l.b16 %v316
        %v771 = vunpack.c.l.b16 %v317
        %v772 = vunpack.c.l.b16 %v318
        %v773 = vunpack.c.l.b16 %v319
        %v774 = vunpack.c.l.b16 %v320
        %v775 = vunpack.c.l.b16 %v321
        %v776 = vunpack.c.l.b16 %v322
        %v777 = vunpack.c.l.b16 %v323
        %v778 = vpack.c.b16 %v749, %v748
        %v779 = vpack.c.b16 %v751, %v750
        %v780 = vpack.c.b16 %v753, %v752
        %v781 = vpack.c.b16 %v755, %v754
        %v782 = vpack.c.b16 %v757, %v756
        %v783 = vpack.c.b16 %v759, %v758
        %v784 = vpack.c.b16 %v761, %v760
        %v785 = vpack.c.b16 %v763, %v762
        %v786 = vpack.c.b16 %v765, %v764
        %v787 = vpack.c.b16 %v767, %v766
        %v788 = vpack.c.b16 %v769, %v768
        %v789 = vpack.c.b16 %v771, %v770
        %v790 = vpack.c.b16 %v773, %v772
        %v791 = vpack.c.b16 %v775, %v774
        %v792 = vpack.c.b16 %v777, %v776
        %v824 = vunpack.c.l.b16 %v324
        %v825 = vunpack.c.l.b16 %v325
        %v826 = vunpack.c.l.b16 %v326
        %v827 = vunpack.c.l.b16 %v327
        %v828 = vunpack.c.l.b16 %v328
        %v829 = vunpack.c.l.b16 %v329
        %v830 = vunpack.c.l.b16 %v330
        %v831 = vunpack.c.l.b16 %v331
        %v832 = vunpack.c.l.b16 %v332
        %v833 = vunpack.c.l.b16 %v333
        %v834 = vunpack.c.l.b16 %v334
        %v835 = vunpack.c.l.b16 %v335
        %v836 = vunpack.c.l.b16 %v336
        %v837 = vunpack.c.l.b16 %v337
        %v838 = vunpack.c.l.b16 %v338
        %v839 = vunpack.c.l.b16 %v339
        %v840 = vpack.c.b16 %v825, %v824
        %v841 = vpack.c.b16 %v827, %v826
        %v842 = vpack.c.b16 %v829, %v828
        %v843 = vpack.c.b16 %v831, %v830
        %v844 = vpack.c.b16 %v833, %v832
        %v845 = vpack.c.b16 %v835, %v834
        %v846 = vpack.c.b16 %v837, %v836
        %v847 = vpack.c.b16 %v839, %v838
        %856 = vmatprep.subr.bf16.mxu0 0
        %857 = vmatpush1.bf16.msra.mxu0 %v847
        %858 = vmatprep.subr.bf16.mxu0 0
        %859 = vmatpush1.bf16.msra.mxu0 %v846
        %860 = vmatprep.subr.bf16.mxu0 0
        %861 = vmatpush1.bf16.msra.mxu0 %v845
        %862 = vmatprep.subr.bf16.mxu0 0
        %863 = vmatpush1.bf16.msra.mxu0 %v844
        %864 = vmatprep.subr.bf16.mxu0 0
        %865 = vmatpush1.bf16.msra.mxu0 %v843
        %866 = vmatprep.subr.bf16.mxu0 0
        %867 = vmatpush1.bf16.msra.mxu0 %v842
        %868 = vmatprep.subr.bf16.mxu0 0
        %869 = vmatpush1.bf16.msra.mxu0 %v841
        %870 = vmatprep.subr.bf16.mxu0 0
        %871 = vmatpush1.bf16.msra.mxu0 %v840
        %872 = vmatprep.subr.bf16.mxu0 0
        %873 = vmatpush2.bf16.msra.mxu0 0
        %874 = vmatprep.subr.bf16.mxu0 0
        %875 = vmatpush2.bf16.msra.mxu0 0
        %876 = vmatprep.subr.bf16.mxu0 0
        %877 = vmatpush2.bf16.msra.mxu0 0
        %878 = vmatprep.subr.bf16.mxu0 0
        %879 = vmatpush2.bf16.msra.mxu0 0
        %880 = vmatprep.subr.bf16.mxu0 0
        %881 = vmatpush2.bf16.msra.mxu0 0
        %882 = vmatprep.subr.bf16.mxu0 0
        %883 = vmatpush2.bf16.msra.mxu0 0
        %884 = vmatprep.subr.bf16.mxu0 0
        %885 = vmatpush2.bf16.msra.mxu0 0
        %886 = vmatprep.subr.bf16.mxu0 0
        %887 = vmatpush2.bf16.msra.mxu0 0
        %888 = vmatprep.mubr.bf16.mxu0 0
        %889 = vmatmul.mubr.bf16.gmra.mxu0 %v778
        %v890 = vpop.f32.mrf.mxu0
        %v891 = vadd.f32 %v600, %v890
        %v892 = vpop.f32.mrf.mxu0
        %v893 = vpop.f32.mrf.mxu0
        %v894 = vadd.f32 %v603, %v893
        %v895 = vpop.f32.mrf.mxu0
        %896 = vmatprep.mubr.bf16.mxu0 0
        %897 = vmatmul.mubr.bf16.gmra.mxu0 %v779
        %v898 = vpop.f32.mrf.mxu0
        %v899 = vadd.f32 %v608, %v898
        %v900 = vpop.f32.mrf.mxu0
        %v901 = vpop.f32.mrf.mxu0
        %v902 = vadd.f32 %v611, %v901
        %v903 = vpop.f32.mrf.mxu0
        %904 = vmatprep.mubr.bf16.mxu0 0
        %905 = vmatmul.mubr.bf16.gmra.mxu0 %v780
        %v906 = vpop.f32.mrf.mxu0
        %v907 = vadd.f32 %v616, %v906
        %v908 = vpop.f32.mrf.mxu0
        %v909 = vpop.f32.mrf.mxu0
        %v910 = vadd.f32 %v619, %v909
        %v911 = vpop.f32.mrf.mxu0
        %912 = vmatprep.mubr.bf16.mxu0 0
        %913 = vmatmul.mubr.bf16.gmra.mxu0 %v781
        %v914 = vpop.f32.mrf.mxu0
        %v915 = vadd.f32 %v624, %v914
        %v916 = vpop.f32.mrf.mxu0
        %v917 = vpop.f32.mrf.mxu0
        %v918 = vadd.f32 %v627, %v917
        %v919 = vpop.f32.mrf.mxu0
        %920 = vmatprep.mubr.bf16.mxu0 0
        %921 = vmatmul.mubr.bf16.gmra.mxu0 %v782
        %v922 = vpop.f32.mrf.mxu0
        %v923 = vadd.f32 %v632, %v922
        %v924 = vpop.f32.mrf.mxu0
        %v925 = vpop.f32.mrf.mxu0
        %v926 = vadd.f32 %v635, %v925
        %v927 = vpop.f32.mrf.mxu0
        %928 = vmatprep.mubr.bf16.mxu0 0
        %929 = vmatmul.mubr.bf16.gmra.mxu0 %v783
        %v930 = vpop.f32.mrf.mxu0
        %v931 = vadd.f32 %v640, %v930
        %v932 = vpop.f32.mrf.mxu0
        %v933 = vpop.f32.mrf.mxu0
        %v934 = vadd.f32 %v643, %v933
        %v935 = vpop.f32.mrf.mxu0
        %936 = vmatprep.mubr.bf16.mxu0 0
        %937 = vmatmul.mubr.bf16.gmra.mxu0 %v784
        %v938 = vpop.f32.mrf.mxu0
        %v939 = vadd.f32 %v648, %v938
        %v940 = vpop.f32.mrf.mxu0
        %v941 = vpop.f32.mrf.mxu0
        %v942 = vadd.f32 %v651, %v941
        %v943 = vpop.f32.mrf.mxu0
        %944 = vmatprep.mubr.bf16.mxu0 0
        %945 = vmatmul.mubr.bf16.gmra.mxu0 %v785
        %v946 = vpop.f32.mrf.mxu0
        %v947 = vadd.f32 %v656, %v946
        %v948 = vpop.f32.mrf.mxu0
        %v949 = vpop.f32.mrf.mxu0
        %v950 = vadd.f32 %v659, %v949
        %v951 = vpop.f32.mrf.mxu0
        %952 = vmatprep.mubr.bf16.mxu0 0
        %953 = vmatmul.mubr.bf16.gmra.mxu0 %v786
        %v954 = vpop.f32.mrf.mxu0
        %v955 = vadd.f32 %v664, %v954
        %v956 = vpop.f32.mrf.mxu0
        %v957 = vpop.f32.mrf.mxu0
        %v958 = vadd.f32 %v667, %v957
        %v959 = vpop.f32.mrf.mxu0
        %960 = vmatprep.mubr.bf16.mxu0 0
        %961 = vmatmul.mubr.bf16.gmra.mxu0 %v787
        %v962 = vpop.f32.mrf.mxu0
        %v963 = vadd.f32 %v672, %v962
        %v964 = vpop.f32.mrf.mxu0
        %v965 = vpop.f32.mrf.mxu0
        %v966 = vadd.f32 %v675, %v965
        %v967 = vpop.f32.mrf.mxu0
        %968 = vmatprep.mubr.bf16.mxu0 0
        %969 = vmatmul.mubr.bf16.gmra.mxu0 %v788
        %v970 = vpop.f32.mrf.mxu0
        %v971 = vadd.f32 %v680, %v970
        %v972 = vpop.f32.mrf.mxu0
        %v973 = vpop.f32.mrf.mxu0
        %v974 = vadd.f32 %v683, %v973
        %v975 = vpop.f32.mrf.mxu0
        %976 = vmatprep.mubr.bf16.mxu0 0
        %977 = vmatmul.mubr.bf16.gmra.mxu0 %v789
        %v978 = vpop.f32.mrf.mxu0
        %v979 = vadd.f32 %v688, %v978
        %v980 = vpop.f32.mrf.mxu0
        %v981 = vpop.f32.mrf.mxu0
        %v982 = vadd.f32 %v691, %v981
        %v983 = vpop.f32.mrf.mxu0
        %984 = vmatprep.mubr.bf16.mxu0 0
        %985 = vmatmul.mubr.bf16.gmra.mxu0 %v790
        %v986 = vpop.f32.mrf.mxu0
        %v987 = vadd.f32 %v696, %v986
        %v988 = vpop.f32.mrf.mxu0
        %v989 = vpop.f32.mrf.mxu0
        %v990 = vadd.f32 %v699, %v989
        %v991 = vpop.f32.mrf.mxu0
        %992 = vmatprep.mubr.bf16.mxu0 0
        %993 = vmatmul.mubr.bf16.gmra.mxu0 %v791
        %v994 = vpop.f32.mrf.mxu0
        %v995 = vadd.f32 %v704, %v994
        %v996 = vpop.f32.mrf.mxu0
        %v997 = vpop.f32.mrf.mxu0
        %v998 = vadd.f32 %v707, %v997
        %v999 = vpop.f32.mrf.mxu0
        %1000 = vmatprep.mubr.bf16.mxu0 0
        %1001 = vmatmul.mubr.bf16.gmra.mxu0 %v792
        %v1002 = vpop.f32.mrf.mxu0
        %v1003 = vadd.f32 %v712, %v1002
        %v1004 = vpop.f32.mrf.mxu0
        %v1005 = vpop.f32.mrf.mxu0
        %v1006 = vadd.f32 %v715, %v1005
        %v1007 = vpop.f32.mrf.mxu0
        %1008 = vdwg.mxu0
        %s1009 = scalar_lea.vmem [#allocation5], 256
        %v1010 = vld [vmem:[%s1009] sm:$0xf]
        %v1011 = vld [vmem:[%s1009 + $0x4] sm:$0xf]
        %v1012 = vld [vmem:[%s1009 + $0x8] sm:$0xf]
        %v1013 = vld [vmem:[%s1009 + $0xc] sm:$0xf]
        %v1014 = vld [vmem:[%s1009 + $0x10] sm:$0xf]
        %v1015 = vld [vmem:[%s1009 + $0x14] sm:$0xf]
        %v1016 = vld [vmem:[%s1009 + $0x18] sm:$0xf]
        %v1017 = vld [vmem:[%s1009 + $0x1c] sm:$0xf]
        %v1018 = vld [vmem:[%s1009 + $0x20] sm:$0xf]
        %v1019 = vld [vmem:[%s1009 + $0x24] sm:$0xf]
        %v1020 = vld [vmem:[%s1009 + $0x28] sm:$0xf]
        %v1021 = vld [vmem:[%s1009 + $0x2c] sm:$0xf]
        %v1022 = vld [vmem:[%s1009 + $0x30] sm:$0xf]
        %v1023 = vld [vmem:[%s1009 + $0x34] sm:$0xf]
        %v1024 = vld [vmem:[%s1009 + $0x38] sm:$0xf]
        %v1025 = vld [vmem:[%s1009 + $0x3c] sm:$0xf]
        %v1042 = vunpack.c.l.b16 %v1010
        %v1043 = vunpack.c.l.b16 %v1011
        %v1044 = vunpack.c.l.b16 %v1012
        %v1045 = vunpack.c.l.b16 %v1013
        %v1046 = vunpack.c.l.b16 %v1014
        %v1047 = vunpack.c.l.b16 %v1015
        %v1048 = vunpack.c.l.b16 %v1016
        %v1049 = vunpack.c.l.b16 %v1017
        %v1050 = vunpack.c.l.b16 %v1018
        %v1051 = vunpack.c.l.b16 %v1019
        %v1052 = vunpack.c.l.b16 %v1020
        %v1053 = vunpack.c.l.b16 %v1021
        %v1054 = vunpack.c.l.b16 %v1022
        %v1055 = vunpack.c.l.b16 %v1023
        %v1056 = vunpack.c.l.b16 %v1024
        %v1057 = vunpack.c.l.b16 %v1025
        %v1058 = vpack.c.b16 %v1043, %v1042
        %v1059 = vpack.c.b16 %v1045, %v1044
        %v1060 = vpack.c.b16 %v1047, %v1046
        %v1061 = vpack.c.b16 %v1049, %v1048
        %v1062 = vpack.c.b16 %v1051, %v1050
        %v1063 = vpack.c.b16 %v1053, %v1052
        %v1064 = vpack.c.b16 %v1055, %v1054
        %v1065 = vpack.c.b16 %v1057, %v1056
        %1074 = vmatprep.subr.bf16.mxu0 0
        %1075 = vmatpush1.bf16.msra.mxu0 %v1065
        %1076 = vmatprep.subr.bf16.mxu0 0
        %1077 = vmatpush1.bf16.msra.mxu0 %v1064
        %1078 = vmatprep.subr.bf16.mxu0 0
        %1079 = vmatpush1.bf16.msra.mxu0 %v1063
        %1080 = vmatprep.subr.bf16.mxu0 0
        %1081 = vmatpush1.bf16.msra.mxu0 %v1062
        %1082 = vmatprep.subr.bf16.mxu0 0
        %1083 = vmatpush1.bf16.msra.mxu0 %v1061
        %1084 = vmatprep.subr.bf16.mxu0 0
        %1085 = vmatpush1.bf16.msra.mxu0 %v1060
        %1086 = vmatprep.subr.bf16.mxu0 0
        %1087 = vmatpush1.bf16.msra.mxu0 %v1059
        %1088 = vmatprep.subr.bf16.mxu0 0
        %1089 = vmatpush1.bf16.msra.mxu0 %v1058
        %1090 = vmatprep.subr.bf16.mxu0 0
        %1091 = vmatpush2.bf16.msra.mxu0 0
        %1092 = vmatprep.subr.bf16.mxu0 0
        %1093 = vmatpush2.bf16.msra.mxu0 0
        %1094 = vmatprep.subr.bf16.mxu0 0
        %1095 = vmatpush2.bf16.msra.mxu0 0
        %1096 = vmatprep.subr.bf16.mxu0 0
        %1097 = vmatpush2.bf16.msra.mxu0 0
        %1098 = vmatprep.subr.bf16.mxu0 0
        %1099 = vmatpush2.bf16.msra.mxu0 0
        %1100 = vmatprep.subr.bf16.mxu0 0
        %1101 = vmatpush2.bf16.msra.mxu0 0
        %1102 = vmatprep.subr.bf16.mxu0 0
        %1103 = vmatpush2.bf16.msra.mxu0 0
        %1104 = vmatprep.subr.bf16.mxu0 0
        %1105 = vmatpush2.bf16.msra.mxu0 0
        %1106 = vmatprep.mubr.bf16.mxu0 0
        %1107 = vmatmul.mubr.bf16.gmra.mxu0 %v487
        %v1108 = vpop.f32.mrf.mxu0
        %v1109 = vadd.f32 0.0, %v1108
        %v1110 = vpop.f32.mrf.mxu0
        %v1111 = vpop.f32.mrf.mxu0
        %v1112 = vadd.f32 0.0, %v1111
        %v1113 = vpop.f32.mrf.mxu0
        %1114 = vmatprep.mubr.bf16.mxu0 0
        %1115 = vmatmul.mubr.bf16.gmra.mxu0 %v488
        %v1116 = vpop.f32.mrf.mxu0
        %v1117 = vadd.f32 0.0, %v1116
        %v1118 = vpop.f32.mrf.mxu0
        %v1119 = vpop.f32.mrf.mxu0
        %v1120 = vadd.f32 0.0, %v1119
        %v1121 = vpop.f32.mrf.mxu0
        %1122 = vmatprep.mubr.bf16.mxu0 0
        %1123 = vmatmul.mubr.bf16.gmra.mxu0 %v489
        %v1124 = vpop.f32.mrf.mxu0
        %v1125 = vadd.f32 0.0, %v1124
        %v1126 = vpop.f32.mrf.mxu0
        %v1127 = vpop.f32.mrf.mxu0
        %v1128 = vadd.f32 0.0, %v1127
        %v1129 = vpop.f32.mrf.mxu0
        %1130 = vmatprep.mubr.bf16.mxu0 0
        %1131 = vmatmul.mubr.bf16.gmra.mxu0 %v490
        %v1132 = vpop.f32.mrf.mxu0
        %v1133 = vadd.f32 0.0, %v1132
        %v1134 = vpop.f32.mrf.mxu0
        %v1135 = vpop.f32.mrf.mxu0
        %v1136 = vadd.f32 0.0, %v1135
        %v1137 = vpop.f32.mrf.mxu0
        %1138 = vmatprep.mubr.bf16.mxu0 0
        %1139 = vmatmul.mubr.bf16.gmra.mxu0 %v491
        %v1140 = vpop.f32.mrf.mxu0
        %v1141 = vadd.f32 0.0, %v1140
        %v1142 = vpop.f32.mrf.mxu0
        %v1143 = vpop.f32.mrf.mxu0
        %v1144 = vadd.f32 0.0, %v1143
        %v1145 = vpop.f32.mrf.mxu0
        %1146 = vmatprep.mubr.bf16.mxu0 0
        %1147 = vmatmul.mubr.bf16.gmra.mxu0 %v492
        %v1148 = vpop.f32.mrf.mxu0
        %v1149 = vadd.f32 0.0, %v1148
        %v1150 = vpop.f32.mrf.mxu0
        %v1151 = vpop.f32.mrf.mxu0
        %v1152 = vadd.f32 0.0, %v1151
        %v1153 = vpop.f32.mrf.mxu0
        %1154 = vmatprep.mubr.bf16.mxu0 0
        %1155 = vmatmul.mubr.bf16.gmra.mxu0 %v493
        %v1156 = vpop.f32.mrf.mxu0
        %v1157 = vadd.f32 0.0, %v1156
        %v1158 = vpop.f32.mrf.mxu0
        %v1159 = vpop.f32.mrf.mxu0
        %v1160 = vadd.f32 0.0, %v1159
        %v1161 = vpop.f32.mrf.mxu0
        %1162 = vmatprep.mubr.bf16.mxu0 0
        %1163 = vmatmul.mubr.bf16.gmra.mxu0 %v494
        %v1164 = vpop.f32.mrf.mxu0
        %v1165 = vadd.f32 0.0, %v1164
        %v1166 = vpop.f32.mrf.mxu0
        %v1167 = vpop.f32.mrf.mxu0
        %v1168 = vadd.f32 0.0, %v1167
        %v1169 = vpop.f32.mrf.mxu0
        %1170 = vmatprep.mubr.bf16.mxu0 0
        %1171 = vmatmul.mubr.bf16.gmra.mxu0 %v495
        %v1172 = vpop.f32.mrf.mxu0
        %v1173 = vadd.f32 0.0, %v1172
        %v1174 = vpop.f32.mrf.mxu0
        %v1175 = vpop.f32.mrf.mxu0
        %v1176 = vadd.f32 0.0, %v1175
        %v1177 = vpop.f32.mrf.mxu0
        %1178 = vmatprep.mubr.bf16.mxu0 0
        %1179 = vmatmul.mubr.bf16.gmra.mxu0 %v496
        %v1180 = vpop.f32.mrf.mxu0
        %v1181 = vadd.f32 0.0, %v1180
        %v1182 = vpop.f32.mrf.mxu0
        %v1183 = vpop.f32.mrf.mxu0
        %v1184 = vadd.f32 0.0, %v1183
        %v1185 = vpop.f32.mrf.mxu0
        %1186 = vmatprep.mubr.bf16.mxu0 0
        %1187 = vmatmul.mubr.bf16.gmra.mxu0 %v497
        %v1188 = vpop.f32.mrf.mxu0
        %v1189 = vadd.f32 0.0, %v1188
        %v1190 = vpop.f32.mrf.mxu0
        %v1191 = vpop.f32.mrf.mxu0
        %v1192 = vadd.f32 0.0, %v1191
        %v1193 = vpop.f32.mrf.mxu0
        %1194 = vmatprep.mubr.bf16.mxu0 0
        %1195 = vmatmul.mubr.bf16.gmra.mxu0 %v498
        %v1196 = vpop.f32.mrf.mxu0
        %v1197 = vadd.f32 0.0, %v1196
        %v1198 = vpop.f32.mrf.mxu0
        %v1199 = vpop.f32.mrf.mxu0
        %v1200 = vadd.f32 0.0, %v1199
        %v1201 = vpop.f32.mrf.mxu0
        %1202 = vmatprep.mubr.bf16.mxu0 0
        %1203 = vmatmul.mubr.bf16.gmra.mxu0 %v499
        %v1204 = vpop.f32.mrf.mxu0
        %v1205 = vadd.f32 0.0, %v1204
        %v1206 = vpop.f32.mrf.mxu0
        %v1207 = vpop.f32.mrf.mxu0
        %v1208 = vadd.f32 0.0, %v1207
        %v1209 = vpop.f32.mrf.mxu0
        %1210 = vmatprep.mubr.bf16.mxu0 0
        %1211 = vmatmul.mubr.bf16.gmra.mxu0 %v500
        %v1212 = vpop.f32.mrf.mxu0
        %v1213 = vadd.f32 0.0, %v1212
        %v1214 = vpop.f32.mrf.mxu0
        %v1215 = vpop.f32.mrf.mxu0
        %v1216 = vadd.f32 0.0, %v1215
        %v1217 = vpop.f32.mrf.mxu0
        %1218 = vmatprep.mubr.bf16.mxu0 0
        %1219 = vmatmul.mubr.bf16.gmra.mxu0 %v501
        %v1220 = vpop.f32.mrf.mxu0
        %v1221 = vadd.f32 0.0, %v1220
        %v1222 = vpop.f32.mrf.mxu0
        %v1223 = vpop.f32.mrf.mxu0
        %v1224 = vadd.f32 0.0, %v1223
        %v1225 = vpop.f32.mrf.mxu0
        %1226 = vdwg.mxu0
        %v1243 = vunpack.c.l.b16 %v341
        %v1244 = vunpack.c.l.b16 %v342
        %v1245 = vunpack.c.l.b16 %v343
        %v1246 = vunpack.c.l.b16 %v344
        %v1247 = vunpack.c.l.b16 %v345
        %v1248 = vunpack.c.l.b16 %v346
        %v1249 = vunpack.c.l.b16 %v347
        %v1250 = vunpack.c.l.b16 %v348
        %v1251 = vunpack.c.l.b16 %v349
        %v1252 = vunpack.c.l.b16 %v350
        %v1253 = vunpack.c.l.b16 %v351
        %v1254 = vunpack.c.l.b16 %v352
        %v1255 = vunpack.c.l.b16 %v353
        %v1256 = vunpack.c.l.b16 %v354
        %v1257 = vunpack.c.l.b16 %v355
        %v1258 = vunpack.c.l.b16 %v356
        %v1259 = vpack.c.b16 %v1244, %v1243
        %v1260 = vpack.c.b16 %v1246, %v1245
        %v1261 = vpack.c.b16 %v1248, %v1247
        %v1262 = vpack.c.b16 %v1250, %v1249
        %v1263 = vpack.c.b16 %v1252, %v1251
        %v1264 = vpack.c.b16 %v1254, %v1253
        %v1265 = vpack.c.b16 %v1256, %v1255
        %v1266 = vpack.c.b16 %v1258, %v1257
        %1275 = vmatprep.subr.bf16.mxu0 0
        %1276 = vmatpush1.bf16.msra.mxu0 %v1266
        %1277 = vmatprep.subr.bf16.mxu0 0
        %1278 = vmatpush1.bf16.msra.mxu0 %v1265
        %1279 = vmatprep.subr.bf16.mxu0 0
        %1280 = vmatpush1.bf16.msra.mxu0 %v1264
        %1281 = vmatprep.subr.bf16.mxu0 0
        %1282 = vmatpush1.bf16.msra.mxu0 %v1263
        %1283 = vmatprep.subr.bf16.mxu0 0
        %1284 = vmatpush1.bf16.msra.mxu0 %v1262
        %1285 = vmatprep.subr.bf16.mxu0 0
        %1286 = vmatpush1.bf16.msra.mxu0 %v1261
        %1287 = vmatprep.subr.bf16.mxu0 0
        %1288 = vmatpush1.bf16.msra.mxu0 %v1260
        %1289 = vmatprep.subr.bf16.mxu0 0
        %1290 = vmatpush1.bf16.msra.mxu0 %v1259
        %1291 = vmatprep.subr.bf16.mxu0 0
        %1292 = vmatpush2.bf16.msra.mxu0 0
        %1293 = vmatprep.subr.bf16.mxu0 0
        %1294 = vmatpush2.bf16.msra.mxu0 0
        %1295 = vmatprep.subr.bf16.mxu0 0
        %1296 = vmatpush2.bf16.msra.mxu0 0
        %1297 = vmatprep.subr.bf16.mxu0 0
        %1298 = vmatpush2.bf16.msra.mxu0 0
        %1299 = vmatprep.subr.bf16.mxu0 0
        %1300 = vmatpush2.bf16.msra.mxu0 0
        %1301 = vmatprep.subr.bf16.mxu0 0
        %1302 = vmatpush2.bf16.msra.mxu0 0
        %1303 = vmatprep.subr.bf16.mxu0 0
        %1304 = vmatpush2.bf16.msra.mxu0 0
        %1305 = vmatprep.subr.bf16.mxu0 0
        %1306 = vmatpush2.bf16.msra.mxu0 0
        %1307 = vmatprep.mubr.bf16.mxu0 0
        %1308 = vmatmul.mubr.bf16.gmra.mxu0 %v778
        %v1309 = vpop.f32.mrf.mxu0
        %v1310 = vadd.f32 %v1109, %v1309
        %v1311 = vpop.f32.mrf.mxu0
        %v1312 = vpop.f32.mrf.mxu0
        %v1313 = vadd.f32 %v1112, %v1312
        %v1314 = vpop.f32.mrf.mxu0
        %1315 = vmatprep.mubr.bf16.mxu0 0
        %1316 = vmatmul.mubr.bf16.gmra.mxu0 %v779
        %v1317 = vpop.f32.mrf.mxu0
        %v1318 = vadd.f32 %v1117, %v1317
        %v1319 = vpop.f32.mrf.mxu0
        %v1320 = vpop.f32.mrf.mxu0
        %v1321 = vadd.f32 %v1120, %v1320
        %v1322 = vpop.f32.mrf.mxu0
        %1323 = vmatprep.mubr.bf16.mxu0 0
        %1324 = vmatmul.mubr.bf16.gmra.mxu0 %v780
        %v1325 = vpop.f32.mrf.mxu0
        %v1326 = vadd.f32 %v1125, %v1325
        %v1327 = vpop.f32.mrf.mxu0
        %v1328 = vpop.f32.mrf.mxu0
        %v1329 = vadd.f32 %v1128, %v1328
        %v1330 = vpop.f32.mrf.mxu0
        %1331 = vmatprep.mubr.bf16.mxu0 0
        %1332 = vmatmul.mubr.bf16.gmra.mxu0 %v781
        %v1333 = vpop.f32.mrf.mxu0
        %v1334 = vadd.f32 %v1133, %v1333
        %v1335 = vpop.f32.mrf.mxu0
        %v1336 = vpop.f32.mrf.mxu0
        %v1337 = vadd.f32 %v1136, %v1336
        %v1338 = vpop.f32.mrf.mxu0
        %1339 = vmatprep.mubr.bf16.mxu0 0
        %1340 = vmatmul.mubr.bf16.gmra.mxu0 %v782
        %v1341 = vpop.f32.mrf.mxu0
        %v1342 = vadd.f32 %v1141, %v1341
        %v1343 = vpop.f32.mrf.mxu0
        %v1344 = vpop.f32.mrf.mxu0
        %v1345 = vadd.f32 %v1144, %v1344
        %v1346 = vpop.f32.mrf.mxu0
        %1347 = vmatprep.mubr.bf16.mxu0 0
        %1348 = vmatmul.mubr.bf16.gmra.mxu0 %v783
        %v1349 = vpop.f32.mrf.mxu0
        %v1350 = vadd.f32 %v1149, %v1349
        %v1351 = vpop.f32.mrf.mxu0
        %v1352 = vpop.f32.mrf.mxu0
        %v1353 = vadd.f32 %v1152, %v1352
        %v1354 = vpop.f32.mrf.mxu0
        %1355 = vmatprep.mubr.bf16.mxu0 0
        %1356 = vmatmul.mubr.bf16.gmra.mxu0 %v784
        %v1357 = vpop.f32.mrf.mxu0
        %v1358 = vadd.f32 %v1157, %v1357
        %v1359 = vpop.f32.mrf.mxu0
        %v1360 = vpop.f32.mrf.mxu0
        %v1361 = vadd.f32 %v1160, %v1360
        %v1362 = vpop.f32.mrf.mxu0
        %1363 = vmatprep.mubr.bf16.mxu0 0
        %1364 = vmatmul.mubr.bf16.gmra.mxu0 %v785
        %v1365 = vpop.f32.mrf.mxu0
        %v1366 = vadd.f32 %v1165, %v1365
        %v1367 = vpop.f32.mrf.mxu0
        %v1368 = vpop.f32.mrf.mxu0
        %v1369 = vadd.f32 %v1168, %v1368
        %v1370 = vpop.f32.mrf.mxu0
        %1371 = vmatprep.mubr.bf16.mxu0 0
        %1372 = vmatmul.mubr.bf16.gmra.mxu0 %v786
        %v1373 = vpop.f32.mrf.mxu0
        %v1374 = vadd.f32 %v1173, %v1373
        %v1375 = vpop.f32.mrf.mxu0
        %v1376 = vpop.f32.mrf.mxu0
        %v1377 = vadd.f32 %v1176, %v1376
        %v1378 = vpop.f32.mrf.mxu0
        %1379 = vmatprep.mubr.bf16.mxu0 0
        %1380 = vmatmul.mubr.bf16.gmra.mxu0 %v787
        %v1381 = vpop.f32.mrf.mxu0
        %v1382 = vadd.f32 %v1181, %v1381
        %v1383 = vpop.f32.mrf.mxu0
        %v1384 = vpop.f32.mrf.mxu0
        %v1385 = vadd.f32 %v1184, %v1384
        %v1386 = vpop.f32.mrf.mxu0
        %1387 = vmatprep.mubr.bf16.mxu0 0
        %1388 = vmatmul.mubr.bf16.gmra.mxu0 %v788
        %v1389 = vpop.f32.mrf.mxu0
        %v1390 = vadd.f32 %v1189, %v1389
        %v1391 = vpop.f32.mrf.mxu0
        %v1392 = vpop.f32.mrf.mxu0
        %v1393 = vadd.f32 %v1192, %v1392
        %v1394 = vpop.f32.mrf.mxu0
        %1395 = vmatprep.mubr.bf16.mxu0 0
        %1396 = vmatmul.mubr.bf16.gmra.mxu0 %v789
        %v1397 = vpop.f32.mrf.mxu0
        %v1398 = vadd.f32 %v1197, %v1397
        %v1399 = vpop.f32.mrf.mxu0
        %v1400 = vpop.f32.mrf.mxu0
        %v1401 = vadd.f32 %v1200, %v1400
        %v1402 = vpop.f32.mrf.mxu0
        %1403 = vmatprep.mubr.bf16.mxu0 0
        %1404 = vmatmul.mubr.bf16.gmra.mxu0 %v790
        %v1405 = vpop.f32.mrf.mxu0
        %v1406 = vadd.f32 %v1205, %v1405
        %v1407 = vpop.f32.mrf.mxu0
        %v1408 = vpop.f32.mrf.mxu0
        %v1409 = vadd.f32 %v1208, %v1408
        %v1410 = vpop.f32.mrf.mxu0
        %1411 = vmatprep.mubr.bf16.mxu0 0
        %1412 = vmatmul.mubr.bf16.gmra.mxu0 %v791
        %v1413 = vpop.f32.mrf.mxu0
        %v1414 = vadd.f32 %v1213, %v1413
        %v1415 = vpop.f32.mrf.mxu0
        %v1416 = vpop.f32.mrf.mxu0
        %v1417 = vadd.f32 %v1216, %v1416
        %v1418 = vpop.f32.mrf.mxu0
        %1419 = vmatprep.mubr.bf16.mxu0 0
        %1420 = vmatmul.mubr.bf16.gmra.mxu0 %v792
        %v1421 = vpop.f32.mrf.mxu0
        %v1422 = vadd.f32 %v1221, %v1421
        %v1423 = vpop.f32.mrf.mxu0
        %v1424 = vpop.f32.mrf.mxu0
        %v1425 = vadd.f32 %v1224, %v1424
        %v1426 = vpop.f32.mrf.mxu0
        %1427 = vdwg.mxu0
        %s1428 = scalar_lea.vmem [#allocation5], 320
        %v1429 = vld [vmem:[%s1428] sm:$0xf]
        %v1430 = vld [vmem:[%s1428 + $0x4] sm:$0xf]
        %v1431 = vld [vmem:[%s1428 + $0x8] sm:$0xf]
        %v1432 = vld [vmem:[%s1428 + $0xc] sm:$0xf]
        %v1433 = vld [vmem:[%s1428 + $0x10] sm:$0xf]
        %v1434 = vld [vmem:[%s1428 + $0x14] sm:$0xf]
        %v1435 = vld [vmem:[%s1428 + $0x18] sm:$0xf]
        %v1436 = vld [vmem:[%s1428 + $0x1c] sm:$0xf]
        %v1437 = vld [vmem:[%s1428 + $0x20] sm:$0xf]
        %v1438 = vld [vmem:[%s1428 + $0x24] sm:$0xf]
        %v1439 = vld [vmem:[%s1428 + $0x28] sm:$0xf]
        %v1440 = vld [vmem:[%s1428 + $0x2c] sm:$0xf]
        %v1441 = vld [vmem:[%s1428 + $0x30] sm:$0xf]
        %v1442 = vld [vmem:[%s1428 + $0x34] sm:$0xf]
        %v1443 = vld [vmem:[%s1428 + $0x38] sm:$0xf]
        %v1444 = vld [vmem:[%s1428 + $0x3c] sm:$0xf]
        %v1461 = vunpack.c.l.b16 %v1429
        %v1462 = vunpack.c.l.b16 %v1430
        %v1463 = vunpack.c.l.b16 %v1431
        %v1464 = vunpack.c.l.b16 %v1432
        %v1465 = vunpack.c.l.b16 %v1433
        %v1466 = vunpack.c.l.b16 %v1434
        %v1467 = vunpack.c.l.b16 %v1435
        %v1468 = vunpack.c.l.b16 %v1436
        %v1469 = vunpack.c.l.b16 %v1437
        %v1470 = vunpack.c.l.b16 %v1438
        %v1471 = vunpack.c.l.b16 %v1439
        %v1472 = vunpack.c.l.b16 %v1440
        %v1473 = vunpack.c.l.b16 %v1441
        %v1474 = vunpack.c.l.b16 %v1442
        %v1475 = vunpack.c.l.b16 %v1443
        %v1476 = vunpack.c.l.b16 %v1444
        %v1477 = vpack.c.b16 %v1462, %v1461
        %v1478 = vpack.c.b16 %v1464, %v1463
        %v1479 = vpack.c.b16 %v1466, %v1465
        %v1480 = vpack.c.b16 %v1468, %v1467
        %v1481 = vpack.c.b16 %v1470, %v1469
        %v1482 = vpack.c.b16 %v1472, %v1471
        %v1483 = vpack.c.b16 %v1474, %v1473
        %v1484 = vpack.c.b16 %v1476, %v1475
        %1493 = vmatprep.subr.bf16.mxu0 0
        %1494 = vmatpush1.bf16.msra.mxu0 %v1484
        %1495 = vmatprep.subr.bf16.mxu0 0
        %1496 = vmatpush1.bf16.msra.mxu0 %v1483
        %1497 = vmatprep.subr.bf16.mxu0 0
        %1498 = vmatpush1.bf16.msra.mxu0 %v1482
        %1499 = vmatprep.subr.bf16.mxu0 0
        %1500 = vmatpush1.bf16.msra.mxu0 %v1481
        %1501 = vmatprep.subr.bf16.mxu0 0
        %1502 = vmatpush1.bf16.msra.mxu0 %v1480
        %1503 = vmatprep.subr.bf16.mxu0 0
        %1504 = vmatpush1.bf16.msra.mxu0 %v1479
        %1505 = vmatprep.subr.bf16.mxu0 0
        %1506 = vmatpush1.bf16.msra.mxu0 %v1478
        %1507 = vmatprep.subr.bf16.mxu0 0
        %1508 = vmatpush1.bf16.msra.mxu0 %v1477
        %1509 = vmatprep.subr.bf16.mxu0 0
        %1510 = vmatpush2.bf16.msra.mxu0 0
        %1511 = vmatprep.subr.bf16.mxu0 0
        %1512 = vmatpush2.bf16.msra.mxu0 0
        %1513 = vmatprep.subr.bf16.mxu0 0
        %1514 = vmatpush2.bf16.msra.mxu0 0
        %1515 = vmatprep.subr.bf16.mxu0 0
        %1516 = vmatpush2.bf16.msra.mxu0 0
        %1517 = vmatprep.subr.bf16.mxu0 0
        %1518 = vmatpush2.bf16.msra.mxu0 0
        %1519 = vmatprep.subr.bf16.mxu0 0
        %1520 = vmatpush2.bf16.msra.mxu0 0
        %1521 = vmatprep.subr.bf16.mxu0 0
        %1522 = vmatpush2.bf16.msra.mxu0 0
        %1523 = vmatprep.subr.bf16.mxu0 0
        %1524 = vmatpush2.bf16.msra.mxu0 0
        %1525 = vmatprep.mubr.bf16.mxu0 0
        %1526 = vmatmul.mubr.bf16.gmra.mxu0 %v487
        %v1527 = vpop.f32.mrf.mxu0
        %v1528 = vadd.f32 0.0, %v1527
        %v1529 = vpop.f32.mrf.mxu0
        %v1530 = vpop.f32.mrf.mxu0
        %v1531 = vadd.f32 0.0, %v1530
        %v1532 = vpop.f32.mrf.mxu0
        %1533 = vmatprep.mubr.bf16.mxu0 0
        %1534 = vmatmul.mubr.bf16.gmra.mxu0 %v488
        %v1535 = vpop.f32.mrf.mxu0
        %v1536 = vadd.f32 0.0, %v1535
        %v1537 = vpop.f32.mrf.mxu0
        %v1538 = vpop.f32.mrf.mxu0
        %v1539 = vadd.f32 0.0, %v1538
        %v1540 = vpop.f32.mrf.mxu0
        %1541 = vmatprep.mubr.bf16.mxu0 0
        %1542 = vmatmul.mubr.bf16.gmra.mxu0 %v489
        %v1543 = vpop.f32.mrf.mxu0
        %v1544 = vadd.f32 0.0, %v1543
        %v1545 = vpop.f32.mrf.mxu0
        %v1546 = vpop.f32.mrf.mxu0
        %v1547 = vadd.f32 0.0, %v1546
        %v1548 = vpop.f32.mrf.mxu0
        %1549 = vmatprep.mubr.bf16.mxu0 0
        %1550 = vmatmul.mubr.bf16.gmra.mxu0 %v490
        %v1551 = vpop.f32.mrf.mxu0
        %v1552 = vadd.f32 0.0, %v1551
        %v1553 = vpop.f32.mrf.mxu0
        %v1554 = vpop.f32.mrf.mxu0
        %v1555 = vadd.f32 0.0, %v1554
        %v1556 = vpop.f32.mrf.mxu0
        %1557 = vmatprep.mubr.bf16.mxu0 0
        %1558 = vmatmul.mubr.bf16.gmra.mxu0 %v491
        %v1559 = vpop.f32.mrf.mxu0
        %v1560 = vadd.f32 0.0, %v1559
        %v1561 = vpop.f32.mrf.mxu0
        %v1562 = vpop.f32.mrf.mxu0
        %v1563 = vadd.f32 0.0, %v1562
        %v1564 = vpop.f32.mrf.mxu0
        %1565 = vmatprep.mubr.bf16.mxu0 0
        %1566 = vmatmul.mubr.bf16.gmra.mxu0 %v492
        %v1567 = vpop.f32.mrf.mxu0
        %v1568 = vadd.f32 0.0, %v1567
        %v1569 = vpop.f32.mrf.mxu0
        %v1570 = vpop.f32.mrf.mxu0
        %v1571 = vadd.f32 0.0, %v1570
        %v1572 = vpop.f32.mrf.mxu0
        %1573 = vmatprep.mubr.bf16.mxu0 0
        %1574 = vmatmul.mubr.bf16.gmra.mxu0 %v493
        %v1575 = vpop.f32.mrf.mxu0
        %v1576 = vadd.f32 0.0, %v1575
        %v1577 = vpop.f32.mrf.mxu0
        %v1578 = vpop.f32.mrf.mxu0
        %v1579 = vadd.f32 0.0, %v1578
        %v1580 = vpop.f32.mrf.mxu0
        %1581 = vmatprep.mubr.bf16.mxu0 0
        %1582 = vmatmul.mubr.bf16.gmra.mxu0 %v494
        %v1583 = vpop.f32.mrf.mxu0
        %v1584 = vadd.f32 0.0, %v1583
        %v1585 = vpop.f32.mrf.mxu0
        %v1586 = vpop.f32.mrf.mxu0
        %v1587 = vadd.f32 0.0, %v1586
        %v1588 = vpop.f32.mrf.mxu0
        %1589 = vmatprep.mubr.bf16.mxu0 0
        %1590 = vmatmul.mubr.bf16.gmra.mxu0 %v495
        %v1591 = vpop.f32.mrf.mxu0
        %v1592 = vadd.f32 0.0, %v1591
        %v1593 = vpop.f32.mrf.mxu0
        %v1594 = vpop.f32.mrf.mxu0
        %v1595 = vadd.f32 0.0, %v1594
        %v1596 = vpop.f32.mrf.mxu0
        %1597 = vmatprep.mubr.bf16.mxu0 0
        %1598 = vmatmul.mubr.bf16.gmra.mxu0 %v496
        %v1599 = vpop.f32.mrf.mxu0
        %v1600 = vadd.f32 0.0, %v1599
        %v1601 = vpop.f32.mrf.mxu0
        %v1602 = vpop.f32.mrf.mxu0
        %v1603 = vadd.f32 0.0, %v1602
        %v1604 = vpop.f32.mrf.mxu0
        %1605 = vmatprep.mubr.bf16.mxu0 0
        %1606 = vmatmul.mubr.bf16.gmra.mxu0 %v497
        %v1607 = vpop.f32.mrf.mxu0
        %v1608 = vadd.f32 0.0, %v1607
        %v1609 = vpop.f32.mrf.mxu0
        %v1610 = vpop.f32.mrf.mxu0
        %v1611 = vadd.f32 0.0, %v1610
        %v1612 = vpop.f32.mrf.mxu0
        %1613 = vmatprep.mubr.bf16.mxu0 0
        %1614 = vmatmul.mubr.bf16.gmra.mxu0 %v498
        %v1615 = vpop.f32.mrf.mxu0
        %v1616 = vadd.f32 0.0, %v1615
        %v1617 = vpop.f32.mrf.mxu0
        %v1618 = vpop.f32.mrf.mxu0
        %v1619 = vadd.f32 0.0, %v1618
        %v1620 = vpop.f32.mrf.mxu0
        %1621 = vmatprep.mubr.bf16.mxu0 0
        %1622 = vmatmul.mubr.bf16.gmra.mxu0 %v499
        %v1623 = vpop.f32.mrf.mxu0
        %v1624 = vadd.f32 0.0, %v1623
        %v1625 = vpop.f32.mrf.mxu0
        %v1626 = vpop.f32.mrf.mxu0
        %v1627 = vadd.f32 0.0, %v1626
        %v1628 = vpop.f32.mrf.mxu0
        %1629 = vmatprep.mubr.bf16.mxu0 0
        %1630 = vmatmul.mubr.bf16.gmra.mxu0 %v500
        %v1631 = vpop.f32.mrf.mxu0
        %v1632 = vadd.f32 0.0, %v1631
        %v1633 = vpop.f32.mrf.mxu0
        %v1634 = vpop.f32.mrf.mxu0
        %v1635 = vadd.f32 0.0, %v1634
        %v1636 = vpop.f32.mrf.mxu0
        %1637 = vmatprep.mubr.bf16.mxu0 0
        %1638 = vmatmul.mubr.bf16.gmra.mxu0 %v501
        %v1639 = vpop.f32.mrf.mxu0
        %v1640 = vadd.f32 0.0, %v1639
        %v1641 = vpop.f32.mrf.mxu0
        %v1642 = vpop.f32.mrf.mxu0
        %v1643 = vadd.f32 0.0, %v1642
        %v1644 = vpop.f32.mrf.mxu0
        %1645 = vdwg.mxu0
        %v1662 = vunpack.c.l.b16 %v358
        %v1663 = vunpack.c.l.b16 %v359
        %v1664 = vunpack.c.l.b16 %v360
        %v1665 = vunpack.c.l.b16 %v361
        %v1666 = vunpack.c.l.b16 %v362
        %v1667 = vunpack.c.l.b16 %v363
        %v1668 = vunpack.c.l.b16 %v364
        %v1669 = vunpack.c.l.b16 %v365
        %v1670 = vunpack.c.l.b16 %v366
        %v1671 = vunpack.c.l.b16 %v367
        %v1672 = vunpack.c.l.b16 %v368
        %v1673 = vunpack.c.l.b16 %v369
        %v1674 = vunpack.c.l.b16 %v370
        %v1675 = vunpack.c.l.b16 %v371
        %v1676 = vunpack.c.l.b16 %v372
        %v1677 = vunpack.c.l.b16 %v373
        %v1678 = vpack.c.b16 %v1663, %v1662
        %v1679 = vpack.c.b16 %v1665, %v1664
        %v1680 = vpack.c.b16 %v1667, %v1666
        %v1681 = vpack.c.b16 %v1669, %v1668
        %v1682 = vpack.c.b16 %v1671, %v1670
        %v1683 = vpack.c.b16 %v1673, %v1672
        %v1684 = vpack.c.b16 %v1675, %v1674
        %v1685 = vpack.c.b16 %v1677, %v1676
        %1694 = vmatprep.subr.bf16.mxu0 0
        %1695 = vmatpush1.bf16.msra.mxu0 %v1685
        %1696 = vmatprep.subr.bf16.mxu0 0
        %1697 = vmatpush1.bf16.msra.mxu0 %v1684
        %1698 = vmatprep.subr.bf16.mxu0 0
        %1699 = vmatpush1.bf16.msra.mxu0 %v1683
        %1700 = vmatprep.subr.bf16.mxu0 0
        %1701 = vmatpush1.bf16.msra.mxu0 %v1682
        %1702 = vmatprep.subr.bf16.mxu0 0
        %1703 = vmatpush1.bf16.msra.mxu0 %v1681
        %1704 = vmatprep.subr.bf16.mxu0 0
        %1705 = vmatpush1.bf16.msra.mxu0 %v1680
        %1706 = vmatprep.subr.bf16.mxu0 0
        %1707 = vmatpush1.bf16.msra.mxu0 %v1679
        %1708 = vmatprep.subr.bf16.mxu0 0
        %1709 = vmatpush1.bf16.msra.mxu0 %v1678
        %1710 = vmatprep.subr.bf16.mxu0 0
        %1711 = vmatpush2.bf16.msra.mxu0 0
        %1712 = vmatprep.subr.bf16.mxu0 0
        %1713 = vmatpush2.bf16.msra.mxu0 0
        %1714 = vmatprep.subr.bf16.mxu0 0
        %1715 = vmatpush2.bf16.msra.mxu0 0
        %1716 = vmatprep.subr.bf16.mxu0 0
        %1717 = vmatpush2.bf16.msra.mxu0 0
        %1718 = vmatprep.subr.bf16.mxu0 0
        %1719 = vmatpush2.bf16.msra.mxu0 0
        %1720 = vmatprep.subr.bf16.mxu0 0
        %1721 = vmatpush2.bf16.msra.mxu0 0
        %1722 = vmatprep.subr.bf16.mxu0 0
        %1723 = vmatpush2.bf16.msra.mxu0 0
        %1724 = vmatprep.subr.bf16.mxu0 0
        %1725 = vmatpush2.bf16.msra.mxu0 0
        %1726 = vmatprep.mubr.bf16.mxu0 0
        %1727 = vmatmul.mubr.bf16.gmra.mxu0 %v778
        %v1728 = vpop.f32.mrf.mxu0
        %v1729 = vadd.f32 %v1528, %v1728
        %v1730 = vpop.f32.mrf.mxu0
        %v1731 = vpop.f32.mrf.mxu0
        %v1732 = vadd.f32 %v1531, %v1731
        %v1733 = vpop.f32.mrf.mxu0
        %1734 = vmatprep.mubr.bf16.mxu0 0
        %1735 = vmatmul.mubr.bf16.gmra.mxu0 %v779
        %v1736 = vpop.f32.mrf.mxu0
        %v1737 = vadd.f32 %v1536, %v1736
        %v1738 = vpop.f32.mrf.mxu0
        %v1739 = vpop.f32.mrf.mxu0
        %v1740 = vadd.f32 %v1539, %v1739
        %v1741 = vpop.f32.mrf.mxu0
        %1742 = vmatprep.mubr.bf16.mxu0 0
        %1743 = vmatmul.mubr.bf16.gmra.mxu0 %v780
        %v1744 = vpop.f32.mrf.mxu0
        %v1745 = vadd.f32 %v1544, %v1744
        %v1746 = vpop.f32.mrf.mxu0
        %v1747 = vpop.f32.mrf.mxu0
        %v1748 = vadd.f32 %v1547, %v1747
        %v1749 = vpop.f32.mrf.mxu0
        %1750 = vmatprep.mubr.bf16.mxu0 0
        %1751 = vmatmul.mubr.bf16.gmra.mxu0 %v781
        %v1752 = vpop.f32.mrf.mxu0
        %v1753 = vadd.f32 %v1552, %v1752
        %v1754 = vpop.f32.mrf.mxu0
        %v1755 = vpop.f32.mrf.mxu0
        %v1756 = vadd.f32 %v1555, %v1755
        %v1757 = vpop.f32.mrf.mxu0
        %1758 = vmatprep.mubr.bf16.mxu0 0
        %1759 = vmatmul.mubr.bf16.gmra.mxu0 %v782
        %v1760 = vpop.f32.mrf.mxu0
        %v1761 = vadd.f32 %v1560, %v1760
        %v1762 = vpop.f32.mrf.mxu0
        %v1763 = vpop.f32.mrf.mxu0
        %v1764 = vadd.f32 %v1563, %v1763
        %v1765 = vpop.f32.mrf.mxu0
        %1766 = vmatprep.mubr.bf16.mxu0 0
        %1767 = vmatmul.mubr.bf16.gmra.mxu0 %v783
        %v1768 = vpop.f32.mrf.mxu0
        %v1769 = vadd.f32 %v1568, %v1768
        %v1770 = vpop.f32.mrf.mxu0
        %v1771 = vpop.f32.mrf.mxu0
        %v1772 = vadd.f32 %v1571, %v1771
        %v1773 = vpop.f32.mrf.mxu0
        %1774 = vmatprep.mubr.bf16.mxu0 0
        %1775 = vmatmul.mubr.bf16.gmra.mxu0 %v784
        %v1776 = vpop.f32.mrf.mxu0
        %v1777 = vadd.f32 %v1576, %v1776
        %v1778 = vpop.f32.mrf.mxu0
        %v1779 = vpop.f32.mrf.mxu0
        %v1780 = vadd.f32 %v1579, %v1779
        %v1781 = vpop.f32.mrf.mxu0
        %1782 = vmatprep.mubr.bf16.mxu0 0
        %1783 = vmatmul.mubr.bf16.gmra.mxu0 %v785
        %v1784 = vpop.f32.mrf.mxu0
        %v1785 = vadd.f32 %v1584, %v1784
        %v1786 = vpop.f32.mrf.mxu0
        %v1787 = vpop.f32.mrf.mxu0
        %v1788 = vadd.f32 %v1587, %v1787
        %v1789 = vpop.f32.mrf.mxu0
        %1790 = vmatprep.mubr.bf16.mxu0 0
        %1791 = vmatmul.mubr.bf16.gmra.mxu0 %v786
        %v1792 = vpop.f32.mrf.mxu0
        %v1793 = vadd.f32 %v1592, %v1792
        %v1794 = vpop.f32.mrf.mxu0
        %v1795 = vpop.f32.mrf.mxu0
        %v1796 = vadd.f32 %v1595, %v1795
        %v1797 = vpop.f32.mrf.mxu0
        %1798 = vmatprep.mubr.bf16.mxu0 0
        %1799 = vmatmul.mubr.bf16.gmra.mxu0 %v787
        %v1800 = vpop.f32.mrf.mxu0
        %v1801 = vadd.f32 %v1600, %v1800
        %v1802 = vpop.f32.mrf.mxu0
        %v1803 = vpop.f32.mrf.mxu0
        %v1804 = vadd.f32 %v1603, %v1803
        %v1805 = vpop.f32.mrf.mxu0
        %1806 = vmatprep.mubr.bf16.mxu0 0
        %1807 = vmatmul.mubr.bf16.gmra.mxu0 %v788
        %v1808 = vpop.f32.mrf.mxu0
        %v1809 = vadd.f32 %v1608, %v1808
        %v1810 = vpop.f32.mrf.mxu0
        %v1811 = vpop.f32.mrf.mxu0
        %v1812 = vadd.f32 %v1611, %v1811
        %v1813 = vpop.f32.mrf.mxu0
        %1814 = vmatprep.mubr.bf16.mxu0 0
        %1815 = vmatmul.mubr.bf16.gmra.mxu0 %v789
        %v1816 = vpop.f32.mrf.mxu0
        %v1817 = vadd.f32 %v1616, %v1816
        %v1818 = vpop.f32.mrf.mxu0
        %v1819 = vpop.f32.mrf.mxu0
        %v1820 = vadd.f32 %v1619, %v1819
        %v1821 = vpop.f32.mrf.mxu0
        %1822 = vmatprep.mubr.bf16.mxu0 0
        %1823 = vmatmul.mubr.bf16.gmra.mxu0 %v790
        %v1824 = vpop.f32.mrf.mxu0
        %v1825 = vadd.f32 %v1624, %v1824
        %v1826 = vpop.f32.mrf.mxu0
        %v1827 = vpop.f32.mrf.mxu0
        %v1828 = vadd.f32 %v1627, %v1827
        %v1829 = vpop.f32.mrf.mxu0
        %1830 = vmatprep.mubr.bf16.mxu0 0
        %1831 = vmatmul.mubr.bf16.gmra.mxu0 %v791
        %v1832 = vpop.f32.mrf.mxu0
        %v1833 = vadd.f32 %v1632, %v1832
        %v1834 = vpop.f32.mrf.mxu0
        %v1835 = vpop.f32.mrf.mxu0
        %v1836 = vadd.f32 %v1635, %v1835
        %v1837 = vpop.f32.mrf.mxu0
        %1838 = vmatprep.mubr.bf16.mxu0 0
        %1839 = vmatmul.mubr.bf16.gmra.mxu0 %v792
        %v1840 = vpop.f32.mrf.mxu0
        %v1841 = vadd.f32 %v1640, %v1840
        %v1842 = vpop.f32.mrf.mxu0
        %v1843 = vpop.f32.mrf.mxu0
        %v1844 = vadd.f32 %v1643, %v1843
        %v1845 = vpop.f32.mrf.mxu0
        %1846 = vdwg.mxu0
        %s1847 = sadd.s32 %s288, 2
        %s1848 = smul.u32 %s1847, 24
        %s1849 = sshra.s32 %s1848, 3
        %s1850 = sand.u32 %s1848, 7
        %s1851 = smul.addr %s1849, 4
        %s1852 = scalar_lea.vmem %s251, %s1851 [#allocation2]
        %v1853 = vld [vmem:[%s1852] sm:$0xf]
        %v1854 = vld [vmem:[%s1852 + $0x4] sm:$0xf]
        %v1855 = vld [vmem:[%s1852 + $0x8] sm:$0xf]
        %v1856 = vld [vmem:[%s1852 + $0xc] sm:$0xf]
        %v1857 = vld [vmem:[%s1852 + $0x10] sm:$0xf]
        %v1858 = vld [vmem:[%s1852 + $0x14] sm:$0xf]
        %v1859 = vld [vmem:[%s1852 + $0x18] sm:$0xf]
        %v1860 = vld [vmem:[%s1852 + $0x1c] sm:$0xf]
        %v1861 = vld [vmem:[%s1852 + $0x20] sm:$0xf]
        %v1862 = vld [vmem:[%s1852 + $0x24] sm:$0xf]
        %v1863 = vld [vmem:[%s1852 + $0x28] sm:$0xf]
        %v1864 = vld [vmem:[%s1852 + $0x2c] sm:$0xf]
        %v1865 = vld [vmem:[%s1852 + $0x30] sm:$0xf]
        %v1866 = vld [vmem:[%s1852 + $0x34] sm:$0xf]
        %v1867 = vld [vmem:[%s1852 + $0x38] sm:$0xf]
        %v1868 = vld [vmem:[%s1852 + $0x3c] sm:$0xf]
        %v1869 = vld [vmem:[%s1852 + $0x40] sm:$0xf]
        %v1870 = vld [vmem:[%s1852 + $0x44] sm:$0xf]
        %v1871 = vld [vmem:[%s1852 + $0x48] sm:$0xf]
        %v1872 = vld [vmem:[%s1852 + $0x4c] sm:$0xf]
        %v1873 = vld [vmem:[%s1852 + $0x50] sm:$0xf]
        %v1874 = vld [vmem:[%s1852 + $0x54] sm:$0xf]
        %v1875 = vld [vmem:[%s1852 + $0x58] sm:$0xf]
        %v1876 = vld [vmem:[%s1852 + $0x5c] sm:$0xf]
        %v1877 = vld [vmem:[%s1852 + $0x60] sm:$0xf]
        %v1878 = vld [vmem:[%s1852 + $0x64] sm:$0xf]
        %v1879 = vld [vmem:[%s1852 + $0x68] sm:$0xf]
        %v1880 = vld [vmem:[%s1852 + $0x6c] sm:$0xf]
        %v1881 = vld [vmem:[%s1852 + $0x70] sm:$0xf]
        %v1882 = vld [vmem:[%s1852 + $0x74] sm:$0xf]
        %s1883 = scalar_lea.vmem [#allocation5], 384
        %v1884 = vld [vmem:[%s1883] sm:$0xf]
        %v1885 = vld [vmem:[%s1883 + $0x4] sm:$0xf]
        %v1886 = vld [vmem:[%s1883 + $0x8] sm:$0xf]
        %v1887 = vld [vmem:[%s1883 + $0xc] sm:$0xf]
        %v1888 = vld [vmem:[%s1883 + $0x10] sm:$0xf]
        %v1889 = vld [vmem:[%s1883 + $0x14] sm:$0xf]
        %v1890 = vld [vmem:[%s1883 + $0x18] sm:$0xf]
        %v1891 = vld [vmem:[%s1883 + $0x1c] sm:$0xf]
        %v1892 = vld [vmem:[%s1883 + $0x20] sm:$0xf]
        %v1893 = vld [vmem:[%s1883 + $0x24] sm:$0xf]
        %v1894 = vld [vmem:[%s1883 + $0x28] sm:$0xf]
        %v1895 = vld [vmem:[%s1883 + $0x2c] sm:$0xf]
        %v1896 = vld [vmem:[%s1883 + $0x30] sm:$0xf]
        %v1897 = vld [vmem:[%s1883 + $0x34] sm:$0xf]
        %v1898 = vld [vmem:[%s1883 + $0x38] sm:$0xf]
        %v1899 = vld [vmem:[%s1883 + $0x3c] sm:$0xf]
        %v1930 = vunpack.c.l.b16 %v1853
        %v1931 = vunpack.c.l.b16 %v1854
        %v1932 = vunpack.c.l.b16 %v1855
        %v1933 = vunpack.c.l.b16 %v1856
        %v1934 = vunpack.c.l.b16 %v1857
        %v1935 = vunpack.c.l.b16 %v1858
        %v1936 = vunpack.c.l.b16 %v1859
        %v1937 = vunpack.c.l.b16 %v1860
        %v1938 = vunpack.c.l.b16 %v1861
        %v1939 = vunpack.c.l.b16 %v1862
        %v1940 = vunpack.c.l.b16 %v1863
        %v1941 = vunpack.c.l.b16 %v1864
        %v1942 = vunpack.c.l.b16 %v1865
        %v1943 = vunpack.c.l.b16 %v1866
        %v1944 = vunpack.c.l.b16 %v1867
        %v1945 = vunpack.c.l.b16 %v1868
        %v1946 = vunpack.c.l.b16 %v1869
        %v1947 = vunpack.c.l.b16 %v1870
        %v1948 = vunpack.c.l.b16 %v1871
        %v1949 = vunpack.c.l.b16 %v1872
        %v1950 = vunpack.c.l.b16 %v1873
        %v1951 = vunpack.c.l.b16 %v1874
        %v1952 = vunpack.c.l.b16 %v1875
        %v1953 = vunpack.c.l.b16 %v1876
        %v1954 = vunpack.c.l.b16 %v1877
        %v1955 = vunpack.c.l.b16 %v1878
        %v1956 = vunpack.c.l.b16 %v1879
        %v1957 = vunpack.c.l.b16 %v1880
        %v1958 = vunpack.c.l.b16 %v1881
        %v1959 = vunpack.c.l.b16 %v1882
        %v1960 = vpack.c.b16 %v1931, %v1930
        %v1961 = vpack.c.b16 %v1933, %v1932
        %v1962 = vpack.c.b16 %v1935, %v1934
        %v1963 = vpack.c.b16 %v1937, %v1936
        %v1964 = vpack.c.b16 %v1939, %v1938
        %v1965 = vpack.c.b16 %v1941, %v1940
        %v1966 = vpack.c.b16 %v1943, %v1942
        %v1967 = vpack.c.b16 %v1945, %v1944
        %v1968 = vpack.c.b16 %v1947, %v1946
        %v1969 = vpack.c.b16 %v1949, %v1948
        %v1970 = vpack.c.b16 %v1951, %v1950
        %v1971 = vpack.c.b16 %v1953, %v1952
        %v1972 = vpack.c.b16 %v1955, %v1954
        %v1973 = vpack.c.b16 %v1957, %v1956
        %v1974 = vpack.c.b16 %v1959, %v1958
        %v2006 = vunpack.c.l.b16 %v1884
        %v2007 = vunpack.c.l.b16 %v1885
        %v2008 = vunpack.c.l.b16 %v1886
        %v2009 = vunpack.c.l.b16 %v1887
        %v2010 = vunpack.c.l.b16 %v1888
        %v2011 = vunpack.c.l.b16 %v1889
        %v2012 = vunpack.c.l.b16 %v1890
        %v2013 = vunpack.c.l.b16 %v1891
        %v2014 = vunpack.c.l.b16 %v1892
        %v2015 = vunpack.c.l.b16 %v1893
        %v2016 = vunpack.c.l.b16 %v1894
        %v2017 = vunpack.c.l.b16 %v1895
        %v2018 = vunpack.c.l.b16 %v1896
        %v2019 = vunpack.c.l.b16 %v1897
        %v2020 = vunpack.c.l.b16 %v1898
        %v2021 = vunpack.c.l.b16 %v1899
        %v2022 = vpack.c.b16 %v2007, %v2006
        %v2023 = vpack.c.b16 %v2009, %v2008
        %v2024 = vpack.c.b16 %v2011, %v2010
        %v2025 = vpack.c.b16 %v2013, %v2012
        %v2026 = vpack.c.b16 %v2015, %v2014
        %v2027 = vpack.c.b16 %v2017, %v2016
        %v2028 = vpack.c.b16 %v2019, %v2018
        %v2029 = vpack.c.b16 %v2021, %v2020
        %2038 = vmatprep.subr.bf16.mxu0 0
        %2039 = vmatpush1.bf16.msra.mxu0 %v2029
        %2040 = vmatprep.subr.bf16.mxu0 0
        %2041 = vmatpush1.bf16.msra.mxu0 %v2028
        %2042 = vmatprep.subr.bf16.mxu0 0
        %2043 = vmatpush1.bf16.msra.mxu0 %v2027
        %2044 = vmatprep.subr.bf16.mxu0 0
        %2045 = vmatpush1.bf16.msra.mxu0 %v2026
        %2046 = vmatprep.subr.bf16.mxu0 0
        %2047 = vmatpush1.bf16.msra.mxu0 %v2025
        %2048 = vmatprep.subr.bf16.mxu0 0
        %2049 = vmatpush1.bf16.msra.mxu0 %v2024
        %2050 = vmatprep.subr.bf16.mxu0 0
        %2051 = vmatpush1.bf16.msra.mxu0 %v2023
        %2052 = vmatprep.subr.bf16.mxu0 0
        %2053 = vmatpush1.bf16.msra.mxu0 %v2022
        %2054 = vmatprep.subr.bf16.mxu0 0
        %2055 = vmatpush2.bf16.msra.mxu0 0
        %2056 = vmatprep.subr.bf16.mxu0 0
        %2057 = vmatpush2.bf16.msra.mxu0 0
        %2058 = vmatprep.subr.bf16.mxu0 0
        %2059 = vmatpush2.bf16.msra.mxu0 0
        %2060 = vmatprep.subr.bf16.mxu0 0
        %2061 = vmatpush2.bf16.msra.mxu0 0
        %2062 = vmatprep.subr.bf16.mxu0 0
        %2063 = vmatpush2.bf16.msra.mxu0 0
        %2064 = vmatprep.subr.bf16.mxu0 0
        %2065 = vmatpush2.bf16.msra.mxu0 0
        %2066 = vmatprep.subr.bf16.mxu0 0
        %2067 = vmatpush2.bf16.msra.mxu0 0
        %2068 = vmatprep.subr.bf16.mxu0 0
        %2069 = vmatpush2.bf16.msra.mxu0 0
        %2070 = vmatprep.mubr.bf16.mxu0 0
        %2071 = vmatmul.mubr.bf16.gmra.mxu0 %v1960
        %v2072 = vpop.f32.mrf.mxu0
        %v2073 = vadd.f32 0.0, %v2072
        %v2074 = vpop.f32.mrf.mxu0
        %v2075 = vpop.f32.mrf.mxu0
        %v2076 = vadd.f32 0.0, %v2075
        %v2077 = vpop.f32.mrf.mxu0
        %2078 = vmatprep.mubr.bf16.mxu0 0
        %2079 = vmatmul.mubr.bf16.gmra.mxu0 %v1961
        %v2080 = vpop.f32.mrf.mxu0
        %v2081 = vadd.f32 0.0, %v2080
        %v2082 = vpop.f32.mrf.mxu0
        %v2083 = vpop.f32.mrf.mxu0
        %v2084 = vadd.f32 0.0, %v2083
        %v2085 = vpop.f32.mrf.mxu0
        %2086 = vmatprep.mubr.bf16.mxu0 0
        %2087 = vmatmul.mubr.bf16.gmra.mxu0 %v1962
        %v2088 = vpop.f32.mrf.mxu0
        %v2089 = vadd.f32 0.0, %v2088
        %v2090 = vpop.f32.mrf.mxu0
        %v2091 = vpop.f32.mrf.mxu0
        %v2092 = vadd.f32 0.0, %v2091
        %v2093 = vpop.f32.mrf.mxu0
        %2094 = vmatprep.mubr.bf16.mxu0 0
        %2095 = vmatmul.mubr.bf16.gmra.mxu0 %v1963
        %v2096 = vpop.f32.mrf.mxu0
        %v2097 = vadd.f32 0.0, %v2096
        %v2098 = vpop.f32.mrf.mxu0
        %v2099 = vpop.f32.mrf.mxu0
        %v2100 = vadd.f32 0.0, %v2099
        %v2101 = vpop.f32.mrf.mxu0
        %2102 = vmatprep.mubr.bf16.mxu0 0
        %2103 = vmatmul.mubr.bf16.gmra.mxu0 %v1964
        %v2104 = vpop.f32.mrf.mxu0
        %v2105 = vadd.f32 0.0, %v2104
        %v2106 = vpop.f32.mrf.mxu0
        %v2107 = vpop.f32.mrf.mxu0
        %v2108 = vadd.f32 0.0, %v2107
        %v2109 = vpop.f32.mrf.mxu0
        %2110 = vmatprep.mubr.bf16.mxu0 0
        %2111 = vmatmul.mubr.bf16.gmra.mxu0 %v1965
        %v2112 = vpop.f32.mrf.mxu0
        %v2113 = vadd.f32 0.0, %v2112
        %v2114 = vpop.f32.mrf.mxu0
        %v2115 = vpop.f32.mrf.mxu0
        %v2116 = vadd.f32 0.0, %v2115
        %v2117 = vpop.f32.mrf.mxu0
        %2118 = vmatprep.mubr.bf16.mxu0 0
        %2119 = vmatmul.mubr.bf16.gmra.mxu0 %v1966
        %v2120 = vpop.f32.mrf.mxu0
        %v2121 = vadd.f32 0.0, %v2120
        %v2122 = vpop.f32.mrf.mxu0
        %v2123 = vpop.f32.mrf.mxu0
        %v2124 = vadd.f32 0.0, %v2123
        %v2125 = vpop.f32.mrf.mxu0
        %2126 = vmatprep.mubr.bf16.mxu0 0
        %2127 = vmatmul.mubr.bf16.gmra.mxu0 %v1967
        %v2128 = vpop.f32.mrf.mxu0
        %v2129 = vadd.f32 0.0, %v2128
        %v2130 = vpop.f32.mrf.mxu0
        %v2131 = vpop.f32.mrf.mxu0
        %v2132 = vadd.f32 0.0, %v2131
        %v2133 = vpop.f32.mrf.mxu0
        %2134 = vmatprep.mubr.bf16.mxu0 0
        %2135 = vmatmul.mubr.bf16.gmra.mxu0 %v1968
        %v2136 = vpop.f32.mrf.mxu0
        %v2137 = vadd.f32 0.0, %v2136
        %v2138 = vpop.f32.mrf.mxu0
        %v2139 = vpop.f32.mrf.mxu0
        %v2140 = vadd.f32 0.0, %v2139
        %v2141 = vpop.f32.mrf.mxu0
        %2142 = vmatprep.mubr.bf16.mxu0 0
        %2143 = vmatmul.mubr.bf16.gmra.mxu0 %v1969
        %v2144 = vpop.f32.mrf.mxu0
        %v2145 = vadd.f32 0.0, %v2144
        %v2146 = vpop.f32.mrf.mxu0
        %v2147 = vpop.f32.mrf.mxu0
        %v2148 = vadd.f32 0.0, %v2147
        %v2149 = vpop.f32.mrf.mxu0
        %2150 = vmatprep.mubr.bf16.mxu0 0
        %2151 = vmatmul.mubr.bf16.gmra.mxu0 %v1970
        %v2152 = vpop.f32.mrf.mxu0
        %v2153 = vadd.f32 0.0, %v2152
        %v2154 = vpop.f32.mrf.mxu0
        %v2155 = vpop.f32.mrf.mxu0
        %v2156 = vadd.f32 0.0, %v2155
        %v2157 = vpop.f32.mrf.mxu0
        %2158 = vmatprep.mubr.bf16.mxu0 0
        %2159 = vmatmul.mubr.bf16.gmra.mxu0 %v1971
        %v2160 = vpop.f32.mrf.mxu0
        %v2161 = vadd.f32 0.0, %v2160
        %v2162 = vpop.f32.mrf.mxu0
        %v2163 = vpop.f32.mrf.mxu0
        %v2164 = vadd.f32 0.0, %v2163
        %v2165 = vpop.f32.mrf.mxu0
        %2166 = vmatprep.mubr.bf16.mxu0 0
        %2167 = vmatmul.mubr.bf16.gmra.mxu0 %v1972
        %v2168 = vpop.f32.mrf.mxu0
        %v2169 = vadd.f32 0.0, %v2168
        %v2170 = vpop.f32.mrf.mxu0
        %v2171 = vpop.f32.mrf.mxu0
        %v2172 = vadd.f32 0.0, %v2171
        %v2173 = vpop.f32.mrf.mxu0
        %2174 = vmatprep.mubr.bf16.mxu0 0
        %2175 = vmatmul.mubr.bf16.gmra.mxu0 %v1973
        %v2176 = vpop.f32.mrf.mxu0
        %v2177 = vadd.f32 0.0, %v2176
        %v2178 = vpop.f32.mrf.mxu0
        %v2179 = vpop.f32.mrf.mxu0
        %v2180 = vadd.f32 0.0, %v2179
        %v2181 = vpop.f32.mrf.mxu0
        %2182 = vmatprep.mubr.bf16.mxu0 0
        %2183 = vmatmul.mubr.bf16.gmra.mxu0 %v1974
        %v2184 = vpop.f32.mrf.mxu0
        %v2185 = vadd.f32 0.0, %v2184
        %v2186 = vpop.f32.mrf.mxu0
        %v2187 = vpop.f32.mrf.mxu0
        %v2188 = vadd.f32 0.0, %v2187
        %v2189 = vpop.f32.mrf.mxu0
        %2190 = vdwg.mxu0
        %v2191 = vadd.f32 %v891, %v2073
        %v2192 = vadd.f32 %v894, %v2076
        %v2193 = vadd.f32 %v899, %v2081
        %v2194 = vadd.f32 %v902, %v2084
        %v2195 = vadd.f32 %v907, %v2089
        %v2196 = vadd.f32 %v910, %v2092
        %v2197 = vadd.f32 %v915, %v2097
        %v2198 = vadd.f32 %v918, %v2100
        %v2199 = vadd.f32 %v923, %v2105
        %v2200 = vadd.f32 %v926, %v2108
        %v2201 = vadd.f32 %v931, %v2113
        %v2202 = vadd.f32 %v934, %v2116
        %v2203 = vadd.f32 %v939, %v2121
        %v2204 = vadd.f32 %v942, %v2124
        %v2205 = vadd.f32 %v947, %v2129
        %v2206 = vadd.f32 %v950, %v2132
        %v2207 = vadd.f32 %v955, %v2137
        %v2208 = vadd.f32 %v958, %v2140
        %v2209 = vadd.f32 %v963, %v2145
        %v2210 = vadd.f32 %v966, %v2148
        %v2211 = vadd.f32 %v971, %v2153
        %v2212 = vadd.f32 %v974, %v2156
        %v2213 = vadd.f32 %v979, %v2161
        %v2214 = vadd.f32 %v982, %v2164
        %v2215 = vadd.f32 %v987, %v2169
        %v2216 = vadd.f32 %v990, %v2172
        %v2217 = vadd.f32 %v995, %v2177
        %v2218 = vadd.f32 %v998, %v2180
        %v2219 = vadd.f32 %v1003, %v2185
        %v2220 = vadd.f32 %v1006, %v2188
        %s2221 = scalar_lea.vmem [#allocation5], 448
        %v2222 = vld [vmem:[%s2221] sm:$0xf]
        %v2223 = vld [vmem:[%s2221 + $0x4] sm:$0xf]
        %v2224 = vld [vmem:[%s2221 + $0x8] sm:$0xf]
        %v2225 = vld [vmem:[%s2221 + $0xc] sm:$0xf]
        %v2226 = vld [vmem:[%s2221 + $0x10] sm:$0xf]
        %v2227 = vld [vmem:[%s2221 + $0x14] sm:$0xf]
        %v2228 = vld [vmem:[%s2221 + $0x18] sm:$0xf]
        %v2229 = vld [vmem:[%s2221 + $0x1c] sm:$0xf]
        %v2230 = vld [vmem:[%s2221 + $0x20] sm:$0xf]
        %v2231 = vld [vmem:[%s2221 + $0x24] sm:$0xf]
        %v2232 = vld [vmem:[%s2221 + $0x28] sm:$0xf]
        %v2233 = vld [vmem:[%s2221 + $0x2c] sm:$0xf]
        %v2234 = vld [vmem:[%s2221 + $0x30] sm:$0xf]
        %v2235 = vld [vmem:[%s2221 + $0x34] sm:$0xf]
        %v2236 = vld [vmem:[%s2221 + $0x38] sm:$0xf]
        %v2237 = vld [vmem:[%s2221 + $0x3c] sm:$0xf]
        %v2254 = vunpack.c.l.b16 %v2222
        %v2255 = vunpack.c.l.b16 %v2223
        %v2256 = vunpack.c.l.b16 %v2224
        %v2257 = vunpack.c.l.b16 %v2225
        %v2258 = vunpack.c.l.b16 %v2226
        %v2259 = vunpack.c.l.b16 %v2227
        %v2260 = vunpack.c.l.b16 %v2228
        %v2261 = vunpack.c.l.b16 %v2229
        %v2262 = vunpack.c.l.b16 %v2230
        %v2263 = vunpack.c.l.b16 %v2231
        %v2264 = vunpack.c.l.b16 %v2232
        %v2265 = vunpack.c.l.b16 %v2233
        %v2266 = vunpack.c.l.b16 %v2234
        %v2267 = vunpack.c.l.b16 %v2235
        %v2268 = vunpack.c.l.b16 %v2236
        %v2269 = vunpack.c.l.b16 %v2237
        %v2270 = vpack.c.b16 %v2255, %v2254
        %v2271 = vpack.c.b16 %v2257, %v2256
        %v2272 = vpack.c.b16 %v2259, %v2258
        %v2273 = vpack.c.b16 %v2261, %v2260
        %v2274 = vpack.c.b16 %v2263, %v2262
        %v2275 = vpack.c.b16 %v2265, %v2264
        %v2276 = vpack.c.b16 %v2267, %v2266
        %v2277 = vpack.c.b16 %v2269, %v2268
        %2286 = vmatprep.subr.bf16.mxu0 0
        %2287 = vmatpush1.bf16.msra.mxu0 %v2277
        %2288 = vmatprep.subr.bf16.mxu0 0
        %2289 = vmatpush1.bf16.msra.mxu0 %v2276
        %2290 = vmatprep.subr.bf16.mxu0 0
        %2291 = vmatpush1.bf16.msra.mxu0 %v2275
        %2292 = vmatprep.subr.bf16.mxu0 0
        %2293 = vmatpush1.bf16.msra.mxu0 %v2274
        %2294 = vmatprep.subr.bf16.mxu0 0
        %2295 = vmatpush1.bf16.msra.mxu0 %v2273
        %2296 = vmatprep.subr.bf16.mxu0 0
        %2297 = vmatpush1.bf16.msra.mxu0 %v2272
        %2298 = vmatprep.subr.bf16.mxu0 0
        %2299 = vmatpush1.bf16.msra.mxu0 %v2271
        %2300 = vmatprep.subr.bf16.mxu0 0
        %2301 = vmatpush1.bf16.msra.mxu0 %v2270
        %2302 = vmatprep.subr.bf16.mxu0 0
        %2303 = vmatpush2.bf16.msra.mxu0 0
        %2304 = vmatprep.subr.bf16.mxu0 0
        %2305 = vmatpush2.bf16.msra.mxu0 0
        %2306 = vmatprep.subr.bf16.mxu0 0
        %2307 = vmatpush2.bf16.msra.mxu0 0
        %2308 = vmatprep.subr.bf16.mxu0 0
        %2309 = vmatpush2.bf16.msra.mxu0 0
        %2310 = vmatprep.subr.bf16.mxu0 0
        %2311 = vmatpush2.bf16.msra.mxu0 0
        %2312 = vmatprep.subr.bf16.mxu0 0
        %2313 = vmatpush2.bf16.msra.mxu0 0
        %2314 = vmatprep.subr.bf16.mxu0 0
        %2315 = vmatpush2.bf16.msra.mxu0 0
        %2316 = vmatprep.subr.bf16.mxu0 0
        %2317 = vmatpush2.bf16.msra.mxu0 0
        %2318 = vmatprep.mubr.bf16.mxu0 0
        %2319 = vmatmul.mubr.bf16.gmra.mxu0 %v1960
        %v2320 = vpop.f32.mrf.mxu0
        %v2321 = vadd.f32 0.0, %v2320
        %v2322 = vpop.f32.mrf.mxu0
        %v2323 = vpop.f32.mrf.mxu0
        %v2324 = vadd.f32 0.0, %v2323
        %v2325 = vpop.f32.mrf.mxu0
        %2326 = vmatprep.mubr.bf16.mxu0 0
        %2327 = vmatmul.mubr.bf16.gmra.mxu0 %v1961
        %v2328 = vpop.f32.mrf.mxu0
        %v2329 = vadd.f32 0.0, %v2328
        %v2330 = vpop.f32.mrf.mxu0
        %v2331 = vpop.f32.mrf.mxu0
        %v2332 = vadd.f32 0.0, %v2331
        %v2333 = vpop.f32.mrf.mxu0
        %2334 = vmatprep.mubr.bf16.mxu0 0
        %2335 = vmatmul.mubr.bf16.gmra.mxu0 %v1962
        %v2336 = vpop.f32.mrf.mxu0
        %v2337 = vadd.f32 0.0, %v2336
        %v2338 = vpop.f32.mrf.mxu0
        %v2339 = vpop.f32.mrf.mxu0
        %v2340 = vadd.f32 0.0, %v2339
        %v2341 = vpop.f32.mrf.mxu0
        %2342 = vmatprep.mubr.bf16.mxu0 0
        %2343 = vmatmul.mubr.bf16.gmra.mxu0 %v1963
        %v2344 = vpop.f32.mrf.mxu0
        %v2345 = vadd.f32 0.0, %v2344
        %v2346 = vpop.f32.mrf.mxu0
        %v2347 = vpop.f32.mrf.mxu0
        %v2348 = vadd.f32 0.0, %v2347
        %v2349 = vpop.f32.mrf.mxu0
        %2350 = vmatprep.mubr.bf16.mxu0 0
        %2351 = vmatmul.mubr.bf16.gmra.mxu0 %v1964
        %v2352 = vpop.f32.mrf.mxu0
        %v2353 = vadd.f32 0.0, %v2352
        %v2354 = vpop.f32.mrf.mxu0
        %v2355 = vpop.f32.mrf.mxu0
        %v2356 = vadd.f32 0.0, %v2355
        %v2357 = vpop.f32.mrf.mxu0
        %2358 = vmatprep.mubr.bf16.mxu0 0
        %2359 = vmatmul.mubr.bf16.gmra.mxu0 %v1965
        %v2360 = vpop.f32.mrf.mxu0
        %v2361 = vadd.f32 0.0, %v2360
        %v2362 = vpop.f32.mrf.mxu0
        %v2363 = vpop.f32.mrf.mxu0
        %v2364 = vadd.f32 0.0, %v2363
        %v2365 = vpop.f32.mrf.mxu0
        %2366 = vmatprep.mubr.bf16.mxu0 0
        %2367 = vmatmul.mubr.bf16.gmra.mxu0 %v1966
        %v2368 = vpop.f32.mrf.mxu0
        %v2369 = vadd.f32 0.0, %v2368
        %v2370 = vpop.f32.mrf.mxu0
        %v2371 = vpop.f32.mrf.mxu0
        %v2372 = vadd.f32 0.0, %v2371
        %v2373 = vpop.f32.mrf.mxu0
        %2374 = vmatprep.mubr.bf16.mxu0 0
        %2375 = vmatmul.mubr.bf16.gmra.mxu0 %v1967
        %v2376 = vpop.f32.mrf.mxu0
        %v2377 = vadd.f32 0.0, %v2376
        %v2378 = vpop.f32.mrf.mxu0
        %v2379 = vpop.f32.mrf.mxu0
        %v2380 = vadd.f32 0.0, %v2379
        %v2381 = vpop.f32.mrf.mxu0
        %2382 = vmatprep.mubr.bf16.mxu0 0
        %2383 = vmatmul.mubr.bf16.gmra.mxu0 %v1968
        %v2384 = vpop.f32.mrf.mxu0
        %v2385 = vadd.f32 0.0, %v2384
        %v2386 = vpop.f32.mrf.mxu0
        %v2387 = vpop.f32.mrf.mxu0
        %v2388 = vadd.f32 0.0, %v2387
        %v2389 = vpop.f32.mrf.mxu0
        %2390 = vmatprep.mubr.bf16.mxu0 0
        %2391 = vmatmul.mubr.bf16.gmra.mxu0 %v1969
        %v2392 = vpop.f32.mrf.mxu0
        %v2393 = vadd.f32 0.0, %v2392
        %v2394 = vpop.f32.mrf.mxu0
        %v2395 = vpop.f32.mrf.mxu0
        %v2396 = vadd.f32 0.0, %v2395
        %v2397 = vpop.f32.mrf.mxu0
        %2398 = vmatprep.mubr.bf16.mxu0 0
        %2399 = vmatmul.mubr.bf16.gmra.mxu0 %v1970
        %v2400 = vpop.f32.mrf.mxu0
        %v2401 = vadd.f32 0.0, %v2400
        %v2402 = vpop.f32.mrf.mxu0
        %v2403 = vpop.f32.mrf.mxu0
        %v2404 = vadd.f32 0.0, %v2403
        %v2405 = vpop.f32.mrf.mxu0
        %2406 = vmatprep.mubr.bf16.mxu0 0
        %2407 = vmatmul.mubr.bf16.gmra.mxu0 %v1971
        %v2408 = vpop.f32.mrf.mxu0
        %v2409 = vadd.f32 0.0, %v2408
        %v2410 = vpop.f32.mrf.mxu0
        %v2411 = vpop.f32.mrf.mxu0
        %v2412 = vadd.f32 0.0, %v2411
        %v2413 = vpop.f32.mrf.mxu0
        %2414 = vmatprep.mubr.bf16.mxu0 0
        %2415 = vmatmul.mubr.bf16.gmra.mxu0 %v1972
        %v2416 = vpop.f32.mrf.mxu0
        %v2417 = vadd.f32 0.0, %v2416
        %v2418 = vpop.f32.mrf.mxu0
        %v2419 = vpop.f32.mrf.mxu0
        %v2420 = vadd.f32 0.0, %v2419
        %v2421 = vpop.f32.mrf.mxu0
        %2422 = vmatprep.mubr.bf16.mxu0 0
        %2423 = vmatmul.mubr.bf16.gmra.mxu0 %v1973
        %v2424 = vpop.f32.mrf.mxu0
        %v2425 = vadd.f32 0.0, %v2424
        %v2426 = vpop.f32.mrf.mxu0
        %v2427 = vpop.f32.mrf.mxu0
        %v2428 = vadd.f32 0.0, %v2427
        %v2429 = vpop.f32.mrf.mxu0
        %2430 = vmatprep.mubr.bf16.mxu0 0
        %2431 = vmatmul.mubr.bf16.gmra.mxu0 %v1974
        %v2432 = vpop.f32.mrf.mxu0
        %v2433 = vadd.f32 0.0, %v2432
        %v2434 = vpop.f32.mrf.mxu0
        %v2435 = vpop.f32.mrf.mxu0
        %v2436 = vadd.f32 0.0, %v2435
        %v2437 = vpop.f32.mrf.mxu0
        %2438 = vdwg.mxu0
        %v2439 = vadd.f32 %v1310, %v2321
        %v2440 = vadd.f32 %v1313, %v2324
        %v2441 = vadd.f32 %v1318, %v2329
        %v2442 = vadd.f32 %v1321, %v2332
        %v2443 = vadd.f32 %v1326, %v2337
        %v2444 = vadd.f32 %v1329, %v2340
        %v2445 = vadd.f32 %v1334, %v2345
        %v2446 = vadd.f32 %v1337, %v2348
        %v2447 = vadd.f32 %v1342, %v2353
        %v2448 = vadd.f32 %v1345, %v2356
        %v2449 = vadd.f32 %v1350, %v2361
        %v2450 = vadd.f32 %v1353, %v2364
        %v2451 = vadd.f32 %v1358, %v2369
        %v2452 = vadd.f32 %v1361, %v2372
        %v2453 = vadd.f32 %v1366, %v2377
        %v2454 = vadd.f32 %v1369, %v2380
        %v2455 = vadd.f32 %v1374, %v2385
        %v2456 = vadd.f32 %v1377, %v2388
        %v2457 = vadd.f32 %v1382, %v2393
        %v2458 = vadd.f32 %v1385, %v2396
        %v2459 = vadd.f32 %v1390, %v2401
        %v2460 = vadd.f32 %v1393, %v2404
        %v2461 = vadd.f32 %v1398, %v2409
        %v2462 = vadd.f32 %v1401, %v2412
        %v2463 = vadd.f32 %v1406, %v2417
        %v2464 = vadd.f32 %v1409, %v2420
        %v2465 = vadd.f32 %v1414, %v2425
        %v2466 = vadd.f32 %v1417, %v2428
        %v2467 = vadd.f32 %v1422, %v2433
        %v2468 = vadd.f32 %v1425, %v2436
        %s2469 = scalar_lea.vmem [#allocation5], 512
        %v2470 = vld [vmem:[%s2469] sm:$0xf]
        %v2471 = vld [vmem:[%s2469 + $0x4] sm:$0xf]
        %v2472 = vld [vmem:[%s2469 + $0x8] sm:$0xf]
        %v2473 = vld [vmem:[%s2469 + $0xc] sm:$0xf]
        %v2474 = vld [vmem:[%s2469 + $0x10] sm:$0xf]
        %v2475 = vld [vmem:[%s2469 + $0x14] sm:$0xf]
        %v2476 = vld [vmem:[%s2469 + $0x18] sm:$0xf]
        %v2477 = vld [vmem:[%s2469 + $0x1c] sm:$0xf]
        %v2478 = vld [vmem:[%s2469 + $0x20] sm:$0xf]
        %v2479 = vld [vmem:[%s2469 + $0x24] sm:$0xf]
        %v2480 = vld [vmem:[%s2469 + $0x28] sm:$0xf]
        %v2481 = vld [vmem:[%s2469 + $0x2c] sm:$0xf]
        %v2482 = vld [vmem:[%s2469 + $0x30] sm:$0xf]
        %v2483 = vld [vmem:[%s2469 + $0x34] sm:$0xf]
        %v2484 = vld [vmem:[%s2469 + $0x38] sm:$0xf]
        %v2485 = vld [vmem:[%s2469 + $0x3c] sm:$0xf]
        %v2502 = vunpack.c.l.b16 %v2470
        %v2503 = vunpack.c.l.b16 %v2471
        %v2504 = vunpack.c.l.b16 %v2472
        %v2505 = vunpack.c.l.b16 %v2473
        %v2506 = vunpack.c.l.b16 %v2474
        %v2507 = vunpack.c.l.b16 %v2475
        %v2508 = vunpack.c.l.b16 %v2476
        %v2509 = vunpack.c.l.b16 %v2477
        %v2510 = vunpack.c.l.b16 %v2478
        %v2511 = vunpack.c.l.b16 %v2479
        %v2512 = vunpack.c.l.b16 %v2480
        %v2513 = vunpack.c.l.b16 %v2481
        %v2514 = vunpack.c.l.b16 %v2482
        %v2515 = vunpack.c.l.b16 %v2483
        %v2516 = vunpack.c.l.b16 %v2484
        %v2517 = vunpack.c.l.b16 %v2485
        %v2518 = vpack.c.b16 %v2503, %v2502
        %v2519 = vpack.c.b16 %v2505, %v2504
        %v2520 = vpack.c.b16 %v2507, %v2506
        %v2521 = vpack.c.b16 %v2509, %v2508
        %v2522 = vpack.c.b16 %v2511, %v2510
        %v2523 = vpack.c.b16 %v2513, %v2512
        %v2524 = vpack.c.b16 %v2515, %v2514
        %v2525 = vpack.c.b16 %v2517, %v2516
        %2534 = vmatprep.subr.bf16.mxu0 0
        %2535 = vmatpush1.bf16.msra.mxu0 %v2525
        %2536 = vmatprep.subr.bf16.mxu0 0
        %2537 = vmatpush1.bf16.msra.mxu0 %v2524
        %2538 = vmatprep.subr.bf16.mxu0 0
        %2539 = vmatpush1.bf16.msra.mxu0 %v2523
        %2540 = vmatprep.subr.bf16.mxu0 0
        %2541 = vmatpush1.bf16.msra.mxu0 %v2522
        %2542 = vmatprep.subr.bf16.mxu0 0
        %2543 = vmatpush1.bf16.msra.mxu0 %v2521
        %2544 = vmatprep.subr.bf16.mxu0 0
        %2545 = vmatpush1.bf16.msra.mxu0 %v2520
        %2546 = vmatprep.subr.bf16.mxu0 0
        %2547 = vmatpush1.bf16.msra.mxu0 %v2519
        %2548 = vmatprep.subr.bf16.mxu0 0
        %2549 = vmatpush1.bf16.msra.mxu0 %v2518
        %2550 = vmatprep.subr.bf16.mxu0 0
        %2551 = vmatpush2.bf16.msra.mxu0 0
        %2552 = vmatprep.subr.bf16.mxu0 0
        %2553 = vmatpush2.bf16.msra.mxu0 0
        %2554 = vmatprep.subr.bf16.mxu0 0
        %2555 = vmatpush2.bf16.msra.mxu0 0
        %2556 = vmatprep.subr.bf16.mxu0 0
        %2557 = vmatpush2.bf16.msra.mxu0 0
        %2558 = vmatprep.subr.bf16.mxu0 0
        %2559 = vmatpush2.bf16.msra.mxu0 0
        %2560 = vmatprep.subr.bf16.mxu0 0
        %2561 = vmatpush2.bf16.msra.mxu0 0
        %2562 = vmatprep.subr.bf16.mxu0 0
        %2563 = vmatpush2.bf16.msra.mxu0 0
        %2564 = vmatprep.subr.bf16.mxu0 0
        %2565 = vmatpush2.bf16.msra.mxu0 0
        %2566 = vmatprep.mubr.bf16.mxu0 0
        %2567 = vmatmul.mubr.bf16.gmra.mxu0 %v1960
        %v2568 = vpop.f32.mrf.mxu0
        %v2569 = vadd.f32 0.0, %v2568
        %v2570 = vpop.f32.mrf.mxu0
        %v2571 = vpop.f32.mrf.mxu0
        %v2572 = vadd.f32 0.0, %v2571
        %v2573 = vpop.f32.mrf.mxu0
        %2574 = vmatprep.mubr.bf16.mxu0 0
        %2575 = vmatmul.mubr.bf16.gmra.mxu0 %v1961
        %v2576 = vpop.f32.mrf.mxu0
        %v2577 = vadd.f32 0.0, %v2576
        %v2578 = vpop.f32.mrf.mxu0
        %v2579 = vpop.f32.mrf.mxu0
        %v2580 = vadd.f32 0.0, %v2579
        %v2581 = vpop.f32.mrf.mxu0
        %2582 = vmatprep.mubr.bf16.mxu0 0
        %2583 = vmatmul.mubr.bf16.gmra.mxu0 %v1962
        %v2584 = vpop.f32.mrf.mxu0
        %v2585 = vadd.f32 0.0, %v2584
        %v2586 = vpop.f32.mrf.mxu0
        %v2587 = vpop.f32.mrf.mxu0
        %v2588 = vadd.f32 0.0, %v2587
        %v2589 = vpop.f32.mrf.mxu0
        %2590 = vmatprep.mubr.bf16.mxu0 0
        %2591 = vmatmul.mubr.bf16.gmra.mxu0 %v1963
        %v2592 = vpop.f32.mrf.mxu0
        %v2593 = vadd.f32 0.0, %v2592
        %v2594 = vpop.f32.mrf.mxu0
        %v2595 = vpop.f32.mrf.mxu0
        %v2596 = vadd.f32 0.0, %v2595
        %v2597 = vpop.f32.mrf.mxu0
        %2598 = vmatprep.mubr.bf16.mxu0 0
        %2599 = vmatmul.mubr.bf16.gmra.mxu0 %v1964
        %v2600 = vpop.f32.mrf.mxu0
        %v2601 = vadd.f32 0.0, %v2600
        %v2602 = vpop.f32.mrf.mxu0
        %v2603 = vpop.f32.mrf.mxu0
        %v2604 = vadd.f32 0.0, %v2603
        %v2605 = vpop.f32.mrf.mxu0
        %2606 = vmatprep.mubr.bf16.mxu0 0
        %2607 = vmatmul.mubr.bf16.gmra.mxu0 %v1965
        %v2608 = vpop.f32.mrf.mxu0
        %v2609 = vadd.f32 0.0, %v2608
        %v2610 = vpop.f32.mrf.mxu0
        %v2611 = vpop.f32.mrf.mxu0
        %v2612 = vadd.f32 0.0, %v2611
        %v2613 = vpop.f32.mrf.mxu0
        %2614 = vmatprep.mubr.bf16.mxu0 0
        %2615 = vmatmul.mubr.bf16.gmra.mxu0 %v1966
        %v2616 = vpop.f32.mrf.mxu0
        %v2617 = vadd.f32 0.0, %v2616
        %v2618 = vpop.f32.mrf.mxu0
        %v2619 = vpop.f32.mrf.mxu0
        %v2620 = vadd.f32 0.0, %v2619
        %v2621 = vpop.f32.mrf.mxu0
        %2622 = vmatprep.mubr.bf16.mxu0 0
        %2623 = vmatmul.mubr.bf16.gmra.mxu0 %v1967
        %v2624 = vpop.f32.mrf.mxu0
        %v2625 = vadd.f32 0.0, %v2624
        %v2626 = vpop.f32.mrf.mxu0
        %v2627 = vpop.f32.mrf.mxu0
        %v2628 = vadd.f32 0.0, %v2627
        %v2629 = vpop.f32.mrf.mxu0
        %2630 = vmatprep.mubr.bf16.mxu0 0
        %2631 = vmatmul.mubr.bf16.gmra.mxu0 %v1968
        %v2632 = vpop.f32.mrf.mxu0
        %v2633 = vadd.f32 0.0, %v2632
        %v2634 = vpop.f32.mrf.mxu0
        %v2635 = vpop.f32.mrf.mxu0
        %v2636 = vadd.f32 0.0, %v2635
        %v2637 = vpop.f32.mrf.mxu0
        %2638 = vmatprep.mubr.bf16.mxu0 0
        %2639 = vmatmul.mubr.bf16.gmra.mxu0 %v1969
        %v2640 = vpop.f32.mrf.mxu0
        %v2641 = vadd.f32 0.0, %v2640
        %v2642 = vpop.f32.mrf.mxu0
        %v2643 = vpop.f32.mrf.mxu0
        %v2644 = vadd.f32 0.0, %v2643
        %v2645 = vpop.f32.mrf.mxu0
        %2646 = vmatprep.mubr.bf16.mxu0 0
        %2647 = vmatmul.mubr.bf16.gmra.mxu0 %v1970
        %v2648 = vpop.f32.mrf.mxu0
        %v2649 = vadd.f32 0.0, %v2648
        %v2650 = vpop.f32.mrf.mxu0
        %v2651 = vpop.f32.mrf.mxu0
        %v2652 = vadd.f32 0.0, %v2651
        %v2653 = vpop.f32.mrf.mxu0
        %2654 = vmatprep.mubr.bf16.mxu0 0
        %2655 = vmatmul.mubr.bf16.gmra.mxu0 %v1971
        %v2656 = vpop.f32.mrf.mxu0
        %v2657 = vadd.f32 0.0, %v2656
        %v2658 = vpop.f32.mrf.mxu0
        %v2659 = vpop.f32.mrf.mxu0
        %v2660 = vadd.f32 0.0, %v2659
        %v2661 = vpop.f32.mrf.mxu0
        %2662 = vmatprep.mubr.bf16.mxu0 0
        %2663 = vmatmul.mubr.bf16.gmra.mxu0 %v1972
        %v2664 = vpop.f32.mrf.mxu0
        %v2665 = vadd.f32 0.0, %v2664
        %v2666 = vpop.f32.mrf.mxu0
        %v2667 = vpop.f32.mrf.mxu0
        %v2668 = vadd.f32 0.0, %v2667
        %v2669 = vpop.f32.mrf.mxu0
        %2670 = vmatprep.mubr.bf16.mxu0 0
        %2671 = vmatmul.mubr.bf16.gmra.mxu0 %v1973
        %v2672 = vpop.f32.mrf.mxu0
        %v2673 = vadd.f32 0.0, %v2672
        %v2674 = vpop.f32.mrf.mxu0
        %v2675 = vpop.f32.mrf.mxu0
        %v2676 = vadd.f32 0.0, %v2675
        %v2677 = vpop.f32.mrf.mxu0
        %2678 = vmatprep.mubr.bf16.mxu0 0
        %2679 = vmatmul.mubr.bf16.gmra.mxu0 %v1974
        %v2680 = vpop.f32.mrf.mxu0
        %v2681 = vadd.f32 0.0, %v2680
        %v2682 = vpop.f32.mrf.mxu0
        %v2683 = vpop.f32.mrf.mxu0
        %v2684 = vadd.f32 0.0, %v2683
        %v2685 = vpop.f32.mrf.mxu0
        %2686 = vdwg.mxu0
        %v2687 = vadd.f32 %v1729, %v2569
        %v2688 = vadd.f32 %v1732, %v2572
        %v2689 = vadd.f32 %v1737, %v2577
        %v2690 = vadd.f32 %v1740, %v2580
        %v2691 = vadd.f32 %v1745, %v2585
        %v2692 = vadd.f32 %v1748, %v2588
        %v2693 = vadd.f32 %v1753, %v2593
        %v2694 = vadd.f32 %v1756, %v2596
        %v2695 = vadd.f32 %v1761, %v2601
        %v2696 = vadd.f32 %v1764, %v2604
        %v2697 = vadd.f32 %v1769, %v2609
        %v2698 = vadd.f32 %v1772, %v2612
        %v2699 = vadd.f32 %v1777, %v2617
        %v2700 = vadd.f32 %v1780, %v2620
        %v2701 = vadd.f32 %v1785, %v2625
        %v2702 = vadd.f32 %v1788, %v2628
        %v2703 = vadd.f32 %v1793, %v2633
        %v2704 = vadd.f32 %v1796, %v2636
        %v2705 = vadd.f32 %v1801, %v2641
        %v2706 = vadd.f32 %v1804, %v2644
        %v2707 = vadd.f32 %v1809, %v2649
        %v2708 = vadd.f32 %v1812, %v2652
        %v2709 = vadd.f32 %v1817, %v2657
        %v2710 = vadd.f32 %v1820, %v2660
        %v2711 = vadd.f32 %v1825, %v2665
        %v2712 = vadd.f32 %v1828, %v2668
        %v2713 = vadd.f32 %v1833, %v2673
        %v2714 = vadd.f32 %v1836, %v2676
        %v2715 = vadd.f32 %v1841, %v2681
        %v2716 = vadd.f32 %v1844, %v2684
        %v2717 = vrot.slane %v2439, 7
        %v2718 = vrot.slane %v2440, 7
        %v2719 = vrot.slane %v2441, 7
        %v2720 = vrot.slane %v2442, 7
        %v2721 = vrot.slane %v2443, 7
        %v2722 = vrot.slane %v2444, 7
        %v2723 = vrot.slane %v2445, 7
        %v2724 = vrot.slane %v2446, 7
        %v2725 = vrot.slane %v2447, 7
        %v2726 = vrot.slane %v2448, 7
        %v2727 = vrot.slane %v2449, 7
        %v2728 = vrot.slane %v2450, 7
        %v2729 = vrot.slane %v2451, 7
        %v2730 = vrot.slane %v2452, 7
        %v2731 = vrot.slane %v2453, 7
        %v2732 = vrot.slane %v2454, 7
        %v2733 = vrot.slane %v2455, 7
        %v2734 = vrot.slane %v2456, 7
        %v2735 = vrot.slane %v2457, 7
        %v2736 = vrot.slane %v2458, 7
        %v2737 = vrot.slane %v2459, 7
        %v2738 = vrot.slane %v2460, 7
        %v2739 = vrot.slane %v2461, 7
        %v2740 = vrot.slane %v2462, 7
        %v2741 = vrot.slane %v2463, 7
        %v2742 = vrot.slane %v2464, 7
        %v2743 = vrot.slane %v2465, 7
        %v2744 = vrot.slane %v2466, 7
        %v2745 = vrot.slane %v2467, 7
        %v2746 = vrot.slane %v2468, 7
        %v2747 = vlaneseq
        %v2748 = vshrl.u32 %v2747, 7
        %vm2749 = vcmp.lt.s32.totalorder %v2748, 1
        %v2750 = vsel %vm2749, %v2745, %v2746
        %v2751 = vsel %vm2749, %v2744, %v2745
        %v2752 = vsel %vm2749, %v2743, %v2744
        %v2753 = vsel %vm2749, %v2742, %v2743
        %v2754 = vsel %vm2749, %v2741, %v2742
        %v2755 = vsel %vm2749, %v2740, %v2741
        %v2756 = vsel %vm2749, %v2739, %v2740
        %v2757 = vsel %vm2749, %v2738, %v2739
        %v2758 = vsel %vm2749, %v2737, %v2738
        %v2759 = vsel %vm2749, %v2736, %v2737
        %v2760 = vsel %vm2749, %v2735, %v2736
        %v2761 = vsel %vm2749, %v2734, %v2735
        %v2762 = vsel %vm2749, %v2733, %v2734
        %v2763 = vsel %vm2749, %v2732, %v2733
        %v2764 = vsel %vm2749, %v2731, %v2732
        %v2765 = vsel %vm2749, %v2730, %v2731
        %v2766 = vsel %vm2749, %v2729, %v2730
        %v2767 = vsel %vm2749, %v2728, %v2729
        %v2768 = vsel %vm2749, %v2727, %v2728
        %v2769 = vsel %vm2749, %v2726, %v2727
        %v2770 = vsel %vm2749, %v2725, %v2726
        %v2771 = vsel %vm2749, %v2724, %v2725
        %v2772 = vsel %vm2749, %v2723, %v2724
        %v2773 = vsel %vm2749, %v2722, %v2723
        %v2774 = vsel %vm2749, %v2721, %v2722
        %v2775 = vsel %vm2749, %v2720, %v2721
        %v2776 = vsel %vm2749, %v2719, %v2720
        %v2777 = vsel %vm2749, %v2718, %v2719
        %v2778 = vsel %vm2749, %v2717, %v2718
        %v2779 = vsel %vm2749, %v2746, %v2717
        %v2780 = vadd.f32 %v2687, %v2779
        %v2781 = vadd.f32 %v2688, %v2778
        %v2782 = vadd.f32 %v2689, %v2777
        %v2783 = vadd.f32 %v2690, %v2776
        %v2784 = vadd.f32 %v2691, %v2775
        %v2785 = vadd.f32 %v2692, %v2774
        %v2786 = vadd.f32 %v2693, %v2773
        %v2787 = vadd.f32 %v2694, %v2772
        %v2788 = vadd.f32 %v2695, %v2771
        %v2789 = vadd.f32 %v2696, %v2770
        %v2790 = vadd.f32 %v2697, %v2769
        %v2791 = vadd.f32 %v2698, %v2768
        %v2792 = vadd.f32 %v2699, %v2767
        %v2793 = vadd.f32 %v2700, %v2766
        %v2794 = vadd.f32 %v2701, %v2765
        %v2795 = vadd.f32 %v2702, %v2764
        %v2796 = vadd.f32 %v2703, %v2763
        %v2797 = vadd.f32 %v2704, %v2762
        %v2798 = vadd.f32 %v2705, %v2761
        %v2799 = vadd.f32 %v2706, %v2760
        %v2800 = vadd.f32 %v2707, %v2759
        %v2801 = vadd.f32 %v2708, %v2758
        %v2802 = vadd.f32 %v2709, %v2757
        %v2803 = vadd.f32 %v2710, %v2756
        %v2804 = vadd.f32 %v2711, %v2755
        %v2805 = vadd.f32 %v2712, %v2754
        %v2806 = vadd.f32 %v2713, %v2753
        %v2807 = vadd.f32 %v2714, %v2752
        %v2808 = vadd.f32 %v2715, %v2751
        %v2809 = vadd.f32 %v2716, %v2750
        %v2810 = vrot.slane %v2191, 6
        %v2811 = vrot.slane %v2192, 6
        %v2812 = vrot.slane %v2193, 6
        %v2813 = vrot.slane %v2194, 6
        %v2814 = vrot.slane %v2195, 6
        %v2815 = vrot.slane %v2196, 6
        %v2816 = vrot.slane %v2197, 6
        %v2817 = vrot.slane %v2198, 6
        %v2818 = vrot.slane %v2199, 6
        %v2819 = vrot.slane %v2200, 6
        %v2820 = vrot.slane %v2201, 6
        %v2821 = vrot.slane %v2202, 6
        %v2822 = vrot.slane %v2203, 6
        %v2823 = vrot.slane %v2204, 6
        %v2824 = vrot.slane %v2205, 6
        %v2825 = vrot.slane %v2206, 6
        %v2826 = vrot.slane %v2207, 6
        %v2827 = vrot.slane %v2208, 6
        %v2828 = vrot.slane %v2209, 6
        %v2829 = vrot.slane %v2210, 6
        %v2830 = vrot.slane %v2211, 6
        %v2831 = vrot.slane %v2212, 6
        %v2832 = vrot.slane %v2213, 6
        %v2833 = vrot.slane %v2214, 6
        %v2834 = vrot.slane %v2215, 6
        %v2835 = vrot.slane %v2216, 6
        %v2836 = vrot.slane %v2217, 6
        %v2837 = vrot.slane %v2218, 6
        %v2838 = vrot.slane %v2219, 6
        %v2839 = vrot.slane %v2220, 6
        %vm2840 = vcmp.lt.s32.totalorder %v2748, 2
        %v2841 = vsel %vm2840, %v2838, %v2839
        %v2842 = vsel %vm2840, %v2837, %v2838
        %v2843 = vsel %vm2840, %v2836, %v2837
        %v2844 = vsel %vm2840, %v2835, %v2836
        %v2845 = vsel %vm2840, %v2834, %v2835
        %v2846 = vsel %vm2840, %v2833, %v2834
        %v2847 = vsel %vm2840, %v2832, %v2833
        %v2848 = vsel %vm2840, %v2831, %v2832
        %v2849 = vsel %vm2840, %v2830, %v2831
        %v2850 = vsel %vm2840, %v2829, %v2830
        %v2851 = vsel %vm2840, %v2828, %v2829
        %v2852 = vsel %vm2840, %v2827, %v2828
        %v2853 = vsel %vm2840, %v2826, %v2827
        %v2854 = vsel %vm2840, %v2825, %v2826
        %v2855 = vsel %vm2840, %v2824, %v2825
        %v2856 = vsel %vm2840, %v2823, %v2824
        %v2857 = vsel %vm2840, %v2822, %v2823
        %v2858 = vsel %vm2840, %v2821, %v2822
        %v2859 = vsel %vm2840, %v2820, %v2821
        %v2860 = vsel %vm2840, %v2819, %v2820
        %v2861 = vsel %vm2840, %v2818, %v2819
        %v2862 = vsel %vm2840, %v2817, %v2818
        %v2863 = vsel %vm2840, %v2816, %v2817
        %v2864 = vsel %vm2840, %v2815, %v2816
        %v2865 = vsel %vm2840, %v2814, %v2815
        %v2866 = vsel %vm2840, %v2813, %v2814
        %v2867 = vsel %vm2840, %v2812, %v2813
        %v2868 = vsel %vm2840, %v2811, %v2812
        %v2869 = vsel %vm2840, %v2810, %v2811
        %v2870 = vsel %vm2840, %v2839, %v2810
        %v2871 = vadd.f32 %v2780, %v2870
        %v2872 = vadd.f32 %v2781, %v2869
        %v2873 = vadd.f32 %v2782, %v2868
        %v2874 = vadd.f32 %v2783, %v2867
        %v2875 = vadd.f32 %v2784, %v2866
        %v2876 = vadd.f32 %v2785, %v2865
        %v2877 = vadd.f32 %v2786, %v2864
        %v2878 = vadd.f32 %v2787, %v2863
        %v2879 = vadd.f32 %v2788, %v2862
        %v2880 = vadd.f32 %v2789, %v2861
        %v2881 = vadd.f32 %v2790, %v2860
        %v2882 = vadd.f32 %v2791, %v2859
        %v2883 = vadd.f32 %v2792, %v2858
        %v2884 = vadd.f32 %v2793, %v2857
        %v2885 = vadd.f32 %v2794, %v2856
        %v2886 = vadd.f32 %v2795, %v2855
        %v2887 = vadd.f32 %v2796, %v2854
        %v2888 = vadd.f32 %v2797, %v2853
        %v2889 = vadd.f32 %v2798, %v2852
        %v2890 = vadd.f32 %v2799, %v2851
        %v2891 = vadd.f32 %v2800, %v2850
        %v2892 = vadd.f32 %v2801, %v2849
        %v2893 = vadd.f32 %v2802, %v2848
        %v2894 = vadd.f32 %v2803, %v2847
        %v2895 = vadd.f32 %v2804, %v2846
        %v2896 = vadd.f32 %v2805, %v2845
        %v2897 = vadd.f32 %v2806, %v2844
        %v2898 = vadd.f32 %v2807, %v2843
        %v2899 = vadd.f32 %v2808, %v2842
        %v2900 = vadd.f32 %v2809, %v2841
        %v2901 = vld [vmem:[%s2] sm:$0x1]
        %v2903 = vlaneseq
        %v2904 = vshrl.u32 %v2903, 7
        %v2905 = vsub.s32 0, %v2904
        %v2906 = vrot.slane %v2901, %v2905
        %v2908 = vadd.f32 %v2871, %v2906
        %v2909 = vadd.f32 %v2872, %v2906
        %v2910 = vadd.f32 %v2873, %v2906
        %v2911 = vadd.f32 %v2874, %v2906
        %v2912 = vadd.f32 %v2875, %v2906
        %v2913 = vadd.f32 %v2876, %v2906
        %v2914 = vadd.f32 %v2877, %v2906
        %v2915 = vadd.f32 %v2878, %v2906
        %v2916 = vadd.f32 %v2879, %v2906
        %v2917 = vadd.f32 %v2880, %v2906
        %v2918 = vadd.f32 %v2881, %v2906
        %v2919 = vadd.f32 %v2882, %v2906
        %v2920 = vadd.f32 %v2883, %v2906
        %v2921 = vadd.f32 %v2884, %v2906
        %v2922 = vadd.f32 %v2885, %v2906
        %v2923 = vadd.f32 %v2886, %v2906
        %v2924 = vadd.f32 %v2887, %v2906
        %v2925 = vadd.f32 %v2888, %v2906
        %v2926 = vadd.f32 %v2889, %v2906
        %v2927 = vadd.f32 %v2890, %v2906
        %v2928 = vadd.f32 %v2891, %v2906
        %v2929 = vadd.f32 %v2892, %v2906
        %v2930 = vadd.f32 %v2893, %v2906
        %v2931 = vadd.f32 %v2894, %v2906
        %v2932 = vadd.f32 %v2895, %v2906
        %v2933 = vadd.f32 %v2896, %v2906
        %v2934 = vadd.f32 %v2897, %v2906
        %v2935 = vadd.f32 %v2898, %v2906
        %v2936 = vadd.f32 %v2899, %v2906
        %v2937 = vadd.f32 %v2900, %v2906
        %v2938 = vmax.f32 %v2908, 0.0
        %v2939 = vmax.f32 %v2909, 0.0
        %v2940 = vmax.f32 %v2910, 0.0
        %v2941 = vmax.f32 %v2911, 0.0
        %v2942 = vmax.f32 %v2912, 0.0
        %v2943 = vmax.f32 %v2913, 0.0
        %v2944 = vmax.f32 %v2914, 0.0
        %v2945 = vmax.f32 %v2915, 0.0
        %v2946 = vmax.f32 %v2916, 0.0
        %v2947 = vmax.f32 %v2917, 0.0
        %v2948 = vmax.f32 %v2918, 0.0
        %v2949 = vmax.f32 %v2919, 0.0
        %v2950 = vmax.f32 %v2920, 0.0
        %v2951 = vmax.f32 %v2921, 0.0
        %v2952 = vmax.f32 %v2922, 0.0
        %v2953 = vmax.f32 %v2923, 0.0
        %v2954 = vmax.f32 %v2924, 0.0
        %v2955 = vmax.f32 %v2925, 0.0
        %v2956 = vmax.f32 %v2926, 0.0
        %v2957 = vmax.f32 %v2927, 0.0
        %v2958 = vmax.f32 %v2928, 0.0
        %v2959 = vmax.f32 %v2929, 0.0
        %v2960 = vmax.f32 %v2930, 0.0
        %v2961 = vmax.f32 %v2931, 0.0
        %v2962 = vmax.f32 %v2932, 0.0
        %v2963 = vmax.f32 %v2933, 0.0
        %v2964 = vmax.f32 %v2934, 0.0
        %v2965 = vmax.f32 %v2935, 0.0
        %v2966 = vmax.f32 %v2936, 0.0
        %v2967 = vmax.f32 %v2937, 0.0
        %v2968 = vadd.s32 %v2748, 8
        %v2969 = vadd.s32 %v2748, 16
        %s2970 = ssub.s32 %s288, 1
        %v2971 = vstv %s2970
        %v2972 = vadd.s32 %v2971, 1
        %v2973 = vadd.s32 %v2971, 2
        %v2974 = vadd.s32 %v2971, 3
        %v2975 = vadd.s32 %v2971, 4
        %v2976 = vadd.s32 %v2971, 5
        %v2977 = vadd.s32 %v2971, 6
        %v2978 = vadd.s32 %v2971, 7
        %v2979 = vadd.s32 %v2971, 8
        %v2980 = vadd.s32 %v2971, 9
        %vm2981 = vcmp.ge.s32.totalorder %v2971, 0
        %vm2982 = vcmp.ge.s32.totalorder %v2972, 0
        %vm2983 = vcmp.ge.s32.totalorder %v2973, 0
        %vm2984 = vcmp.ge.s32.totalorder %v2974, 0
        %vm2985 = vcmp.ge.s32.totalorder %v2975, 0
        %vm2986 = vcmp.ge.s32.totalorder %v2976, 0
        %vm2987 = vcmp.ge.s32.totalorder %v2977, 0
        %vm2988 = vcmp.ge.s32.totalorder %v2978, 0
        %vm2989 = vcmp.ge.s32.totalorder %v2979, 0
        %vm2990 = vcmp.ge.s32.totalorder %v2980, 0
        %vm2991 = vcmp.lt.s32.totalorder %v2971, 16
        %vm2992 = vcmp.lt.s32.totalorder %v2972, 16
        %vm2993 = vcmp.lt.s32.totalorder %v2973, 16
        %vm2994 = vcmp.lt.s32.totalorder %v2974, 16
        %vm2995 = vcmp.lt.s32.totalorder %v2975, 16
        %vm2996 = vcmp.lt.s32.totalorder %v2976, 16
        %vm2997 = vcmp.lt.s32.totalorder %v2977, 16
        %vm2998 = vcmp.lt.s32.totalorder %v2978, 16
        %vm2999 = vcmp.lt.s32.totalorder %v2979, 16
        %vm3000 = vcmp.lt.s32.totalorder %v2980, 16
        %vm3001 = vmand %vm2981, %vm2991
        %vm3002 = vmand %vm2982, %vm2992
        %vm3003 = vmand %vm2983, %vm2993
        %vm3004 = vmand %vm2984, %vm2994
        %vm3005 = vmand %vm2985, %vm2995
        %vm3006 = vmand %vm2986, %vm2996
        %vm3007 = vmand %vm2987, %vm2997
        %vm3008 = vmand %vm2988, %vm2998
        %vm3009 = vmand %vm2989, %vm2999
        %vm3010 = vmand %vm2990, %vm3000
        %vm3011 = vcmp.ge.s32.totalorder %v2748, 1
        %vm3012 = vcmp.ge.s32.totalorder %v2968, 1
        %vm3013 = vcmp.ge.s32.totalorder %v2969, 1
        %vm3014 = vmand %vm3001, %vm3011
        %vm3015 = vmand %vm3001, %vm3012
        %vm3016 = vmand %vm3001, %vm3013
        %vm3017 = vmand %vm3002, %vm3011
        %vm3018 = vmand %vm3002, %vm3012
        %vm3019 = vmand %vm3002, %vm3013
        %vm3020 = vmand %vm3003, %vm3011
        %vm3021 = vmand %vm3003, %vm3012
        %vm3022 = vmand %vm3003, %vm3013
        %vm3023 = vmand %vm3004, %vm3011
        %vm3024 = vmand %vm3004, %vm3012
        %vm3025 = vmand %vm3004, %vm3013
        %vm3026 = vmand %vm3005, %vm3011
        %vm3027 = vmand %vm3005, %vm3012
        %vm3028 = vmand %vm3005, %vm3013
        %vm3029 = vmand %vm3006, %vm3011
        %vm3030 = vmand %vm3006, %vm3012
        %vm3031 = vmand %vm3006, %vm3013
        %vm3032 = vmand %vm3007, %vm3011
        %vm3033 = vmand %vm3007, %vm3012
        %vm3034 = vmand %vm3007, %vm3013
        %vm3035 = vmand %vm3008, %vm3011
        %vm3036 = vmand %vm3008, %vm3012
        %vm3037 = vmand %vm3008, %vm3013
        %vm3038 = vmand %vm3009, %vm3011
        %vm3039 = vmand %vm3009, %vm3012
        %vm3040 = vmand %vm3009, %vm3013
        %vm3041 = vmand %vm3010, %vm3011
        %vm3042 = vmand %vm3010, %vm3012
        %vm3043 = vmand %vm3010, %vm3013
        %vm3044 = vcmp.le.s32.totalorder %v2748, 16
        %vm3045 = vcmp.le.s32.totalorder %v2968, 16
        %vm3046 = vcmp.le.s32.totalorder %v2969, 16
        %vm3047 = vmand %vm3014, %vm3044
        %vm3048 = vmand %vm3015, %vm3045
        %vm3049 = vmand %vm3016, %vm3046
        %vm3050 = vmand %vm3017, %vm3044
        %vm3051 = vmand %vm3018, %vm3045
        %vm3052 = vmand %vm3019, %vm3046
        %vm3053 = vmand %vm3020, %vm3044
        %vm3054 = vmand %vm3021, %vm3045
        %vm3055 = vmand %vm3022, %vm3046
        %vm3056 = vmand %vm3023, %vm3044
        %vm3057 = vmand %vm3024, %vm3045
        %vm3058 = vmand %vm3025, %vm3046
        %vm3059 = vmand %vm3026, %vm3044
        %vm3060 = vmand %vm3027, %vm3045
        %vm3061 = vmand %vm3028, %vm3046
        %vm3062 = vmand %vm3029, %vm3044
        %vm3063 = vmand %vm3030, %vm3045
        %vm3064 = vmand %vm3031, %vm3046
        %vm3065 = vmand %vm3032, %vm3044
        %vm3066 = vmand %vm3033, %vm3045
        %vm3067 = vmand %vm3034, %vm3046
        %vm3068 = vmand %vm3035, %vm3044
        %vm3069 = vmand %vm3036, %vm3045
        %vm3070 = vmand %vm3037, %vm3046
        %vm3071 = vmand %vm3038, %vm3044
        %vm3072 = vmand %vm3039, %vm3045
        %vm3073 = vmand %vm3040, %vm3046
        %vm3074 = vmand %vm3041, %vm3044
        %vm3075 = vmand %vm3042, %vm3045
        %vm3076 = vmand %vm3043, %vm3046
        %v3077 = vsel %vm3047, 1, 0
        %v3078 = vsel %vm3048, 1, 0
        %v3079 = vsel %vm3049, 1, 0
        %v3080 = vsel %vm3050, 1, 0
        %v3081 = vsel %vm3051, 1, 0
        %v3082 = vsel %vm3052, 1, 0
        %v3083 = vsel %vm3053, 1, 0
        %v3084 = vsel %vm3054, 1, 0
        %v3085 = vsel %vm3055, 1, 0
        %v3086 = vsel %vm3056, 1, 0
        %v3087 = vsel %vm3057, 1, 0
        %v3088 = vsel %vm3058, 1, 0
        %v3089 = vsel %vm3059, 1, 0
        %v3090 = vsel %vm3060, 1, 0
        %v3091 = vsel %vm3061, 1, 0
        %v3092 = vsel %vm3062, 1, 0
        %v3093 = vsel %vm3063, 1, 0
        %v3094 = vsel %vm3064, 1, 0
        %v3095 = vsel %vm3065, 1, 0
        %v3096 = vsel %vm3066, 1, 0
        %v3097 = vsel %vm3067, 1, 0
        %v3098 = vsel %vm3068, 1, 0
        %v3099 = vsel %vm3069, 1, 0
        %v3100 = vsel %vm3070, 1, 0
        %v3101 = vsel %vm3071, 1, 0
        %v3102 = vsel %vm3072, 1, 0
        %v3103 = vsel %vm3073, 1, 0
        %v3104 = vsel %vm3074, 1, 0
        %v3105 = vsel %vm3075, 1, 0
        %v3106 = vsel %vm3076, 1, 0
        %vm3107 = vcmp.eq.s32.totalorder %v3077, 1
        %vm3108 = vcmp.eq.s32.totalorder %v3078, 1
        %vm3109 = vcmp.eq.s32.totalorder %v3079, 1
        %vm3110 = vcmp.eq.s32.totalorder %v3080, 1
        %vm3111 = vcmp.eq.s32.totalorder %v3081, 1
        %vm3112 = vcmp.eq.s32.totalorder %v3082, 1
        %vm3113 = vcmp.eq.s32.totalorder %v3083, 1
        %vm3114 = vcmp.eq.s32.totalorder %v3084, 1
        %vm3115 = vcmp.eq.s32.totalorder %v3085, 1
        %vm3116 = vcmp.eq.s32.totalorder %v3086, 1
        %vm3117 = vcmp.eq.s32.totalorder %v3087, 1
        %vm3118 = vcmp.eq.s32.totalorder %v3088, 1
        %vm3119 = vcmp.eq.s32.totalorder %v3089, 1
        %vm3120 = vcmp.eq.s32.totalorder %v3090, 1
        %vm3121 = vcmp.eq.s32.totalorder %v3091, 1
        %vm3122 = vcmp.eq.s32.totalorder %v3092, 1
        %vm3123 = vcmp.eq.s32.totalorder %v3093, 1
        %vm3124 = vcmp.eq.s32.totalorder %v3094, 1
        %vm3125 = vcmp.eq.s32.totalorder %v3095, 1
        %vm3126 = vcmp.eq.s32.totalorder %v3096, 1
        %vm3127 = vcmp.eq.s32.totalorder %v3097, 1
        %vm3128 = vcmp.eq.s32.totalorder %v3098, 1
        %vm3129 = vcmp.eq.s32.totalorder %v3099, 1
        %vm3130 = vcmp.eq.s32.totalorder %v3100, 1
        %vm3131 = vcmp.eq.s32.totalorder %v3101, 1
        %vm3132 = vcmp.eq.s32.totalorder %v3102, 1
        %vm3133 = vcmp.eq.s32.totalorder %v3103, 1
        %vm3134 = vcmp.eq.s32.totalorder %v3104, 1
        %vm3135 = vcmp.eq.s32.totalorder %v3105, 1
        %vm3136 = vcmp.eq.s32.totalorder %v3106, 1
        %v3137 = vsel %vm3107, %v2938, 0.0
        %v3138 = vsel %vm3108, %v2939, 0.0
        %v3139 = vsel %vm3109, %v2940, 0.0
        %v3140 = vsel %vm3110, %v2941, 0.0
        %v3141 = vsel %vm3111, %v2942, 0.0
        %v3142 = vsel %vm3112, %v2943, 0.0
        %v3143 = vsel %vm3113, %v2944, 0.0
        %v3144 = vsel %vm3114, %v2945, 0.0
        %v3145 = vsel %vm3115, %v2946, 0.0
        %v3146 = vsel %vm3116, %v2947, 0.0
        %v3147 = vsel %vm3117, %v2948, 0.0
        %v3148 = vsel %vm3118, %v2949, 0.0
        %v3149 = vsel %vm3119, %v2950, 0.0
        %v3150 = vsel %vm3120, %v2951, 0.0
        %v3151 = vsel %vm3121, %v2952, 0.0
        %v3152 = vsel %vm3122, %v2953, 0.0
        %v3153 = vsel %vm3123, %v2954, 0.0
        %v3154 = vsel %vm3124, %v2955, 0.0
        %v3155 = vsel %vm3125, %v2956, 0.0
        %v3156 = vsel %vm3126, %v2957, 0.0
        %v3157 = vsel %vm3127, %v2958, 0.0
        %v3158 = vsel %vm3128, %v2959, 0.0
        %v3159 = vsel %vm3129, %v2960, 0.0
        %v3160 = vsel %vm3130, %v2961, 0.0
        %v3161 = vsel %vm3131, %v2962, 0.0
        %v3162 = vsel %vm3132, %v2963, 0.0
        %v3163 = vsel %vm3133, %v2964, 0.0
        %v3164 = vsel %vm3134, %v2965, 0.0
        %v3165 = vsel %vm3135, %v2966, 0.0
        %v3166 = vsel %vm3136, %v2967, 0.0
        %v3167 = vpack.c.bf16 %v3138, %v3137
        %v3168 = vpack.c.bf16 %v3139, %v3139
        %v3169 = vpack.c.bf16 %v3141, %v3140
        %v3170 = vpack.c.bf16 %v3142, %v3142
        %v3171 = vpack.c.bf16 %v3144, %v3143
        %v3172 = vpack.c.bf16 %v3145, %v3145
        %v3173 = vpack.c.bf16 %v3147, %v3146
        %v3174 = vpack.c.bf16 %v3148, %v3148
        %v3175 = vpack.c.bf16 %v3150, %v3149
        %v3176 = vpack.c.bf16 %v3151, %v3151
        %v3177 = vpack.c.bf16 %v3153, %v3152
        %v3178 = vpack.c.bf16 %v3154, %v3154
        %v3179 = vpack.c.bf16 %v3156, %v3155
        %v3180 = vpack.c.bf16 %v3157, %v3157
        %v3181 = vpack.c.bf16 %v3159, %v3158
        %v3182 = vpack.c.bf16 %v3160, %v3160
        %v3183 = vpack.c.bf16 %v3162, %v3161
        %v3184 = vpack.c.bf16 %v3163, %v3163
        %v3185 = vpack.c.bf16 %v3165, %v3164
        %v3186 = vpack.c.bf16 %v3166, %v3166
        %v3203 = vunpack.c.l.b16 %v3167
        %v3204 = vunpack.c.h.b16 %v3167
        %v3205 = vunpack.c.l.b16 %v3168
        %v3206 = vunpack.c.l.b16 %v3169
        %v3207 = vunpack.c.h.b16 %v3169
        %v3208 = vunpack.c.l.b16 %v3170
        %v3209 = vunpack.c.l.b16 %v3171
        %v3210 = vunpack.c.h.b16 %v3171
        %v3211 = vunpack.c.l.b16 %v3172
        %v3212 = vunpack.c.l.b16 %v3173
        %v3213 = vunpack.c.h.b16 %v3173
        %v3214 = vunpack.c.l.b16 %v3174
        %v3215 = vunpack.c.l.b16 %v3175
        %v3216 = vunpack.c.h.b16 %v3175
        %v3217 = vunpack.c.l.b16 %v3176
        %v3218 = vunpack.c.l.b16 %v3177
        %v3219 = vunpack.c.h.b16 %v3177
        %v3220 = vunpack.c.l.b16 %v3178
        %v3221 = vunpack.c.l.b16 %v3179
        %v3222 = vunpack.c.h.b16 %v3179
        %v3223 = vunpack.c.l.b16 %v3180
        %v3224 = vunpack.c.l.b16 %v3181
        %v3225 = vunpack.c.h.b16 %v3181
        %v3226 = vunpack.c.l.b16 %v3182
        %v3227 = vld [vmem:[#allocation7] sm:$0xf]
        %v3228 = vld [vmem:[#allocation7 + $0x4] sm:$0xf]
        %v3229 = vld [vmem:[#allocation7 + $0x8] sm:$0xf]
        %v3230 = vld [vmem:[#allocation7 + $0xc] sm:$0xf]
        %v3231 = vld [vmem:[#allocation7 + $0x10] sm:$0xf]
        %v3232 = vld [vmem:[#allocation7 + $0x14] sm:$0xf]
        %v3233 = vld [vmem:[#allocation7 + $0x18] sm:$0xf]
        %v3234 = vld [vmem:[#allocation7 + $0x1c] sm:$0xf]
        %v3235 = vld [vmem:[#allocation7 + $0x20] sm:$0xf]
        %v3236 = vld [vmem:[#allocation7 + $0x24] sm:$0xf]
        %v3237 = vld [vmem:[#allocation7 + $0x28] sm:$0xf]
        %v3238 = vld [vmem:[#allocation7 + $0x2c] sm:$0xf]
        %v3239 = vld [vmem:[#allocation7 + $0x30] sm:$0xf]
        %v3240 = vld [vmem:[#allocation7 + $0x34] sm:$0xf]
        %v3241 = vld [vmem:[#allocation7 + $0x38] sm:$0xf]
        %v3242 = vld [vmem:[#allocation7 + $0x3c] sm:$0xf]
        %s3243 = scalar_lea.vmem [#allocation7], 64
        %v3244 = vld [vmem:[%s3243] sm:$0xf]
        %v3245 = vld [vmem:[%s3243 + $0x4] sm:$0xf]
        %v3246 = vld [vmem:[%s3243 + $0x8] sm:$0xf]
        %v3247 = vld [vmem:[%s3243 + $0xc] sm:$0xf]
        %v3248 = vld [vmem:[%s3243 + $0x10] sm:$0xf]
        %v3249 = vld [vmem:[%s3243 + $0x14] sm:$0xf]
        %v3250 = vld [vmem:[%s3243 + $0x18] sm:$0xf]
        %v3251 = vld [vmem:[%s3243 + $0x1c] sm:$0xf]
        %v3252 = vld [vmem:[%s3243 + $0x20] sm:$0xf]
        %v3253 = vld [vmem:[%s3243 + $0x24] sm:$0xf]
        %v3254 = vld [vmem:[%s3243 + $0x28] sm:$0xf]
        %v3255 = vld [vmem:[%s3243 + $0x2c] sm:$0xf]
        %v3256 = vld [vmem:[%s3243 + $0x30] sm:$0xf]
        %v3257 = vld [vmem:[%s3243 + $0x34] sm:$0xf]
        %v3258 = vld [vmem:[%s3243 + $0x38] sm:$0xf]
        %v3259 = vld [vmem:[%s3243 + $0x3c] sm:$0xf]
        %s3260 = scalar_lea.vmem [#allocation7], 128
        %v3261 = vld [vmem:[%s3260] sm:$0xf]
        %v3262 = vld [vmem:[%s3260 + $0x4] sm:$0xf]
        %v3263 = vld [vmem:[%s3260 + $0x8] sm:$0xf]
        %v3264 = vld [vmem:[%s3260 + $0xc] sm:$0xf]
        %v3265 = vld [vmem:[%s3260 + $0x10] sm:$0xf]
        %v3266 = vld [vmem:[%s3260 + $0x14] sm:$0xf]
        %v3267 = vld [vmem:[%s3260 + $0x18] sm:$0xf]
        %v3268 = vld [vmem:[%s3260 + $0x1c] sm:$0xf]
        %v3269 = vld [vmem:[%s3260 + $0x20] sm:$0xf]
        %v3270 = vld [vmem:[%s3260 + $0x24] sm:$0xf]
        %v3271 = vld [vmem:[%s3260 + $0x28] sm:$0xf]
        %v3272 = vld [vmem:[%s3260 + $0x2c] sm:$0xf]
        %v3273 = vld [vmem:[%s3260 + $0x30] sm:$0xf]
        %v3274 = vld [vmem:[%s3260 + $0x34] sm:$0xf]
        %v3275 = vld [vmem:[%s3260 + $0x38] sm:$0xf]
        %v3276 = vld [vmem:[%s3260 + $0x3c] sm:$0xf]
        %v3279 = vunpack.c.l.b16 %v3183
        %v3280 = vunpack.c.h.b16 %v3183
        %v3281 = vunpack.c.l.b16 %v3184
        %s3282 = scalar_lea.vmem [#allocation7], 192
        %v3283 = vld [vmem:[%s3282] sm:$0xf]
        %v3284 = vld [vmem:[%s3282 + $0x4] sm:$0xf]
        %v3285 = vld [vmem:[%s3282 + $0x8] sm:$0xf]
        %v3286 = vld [vmem:[%s3282 + $0xc] sm:$0xf]
        %v3287 = vld [vmem:[%s3282 + $0x10] sm:$0xf]
        %v3288 = vld [vmem:[%s3282 + $0x14] sm:$0xf]
        %v3289 = vld [vmem:[%s3282 + $0x18] sm:$0xf]
        %v3290 = vld [vmem:[%s3282 + $0x1c] sm:$0xf]
        %v3291 = vld [vmem:[%s3282 + $0x20] sm:$0xf]
        %v3292 = vld [vmem:[%s3282 + $0x24] sm:$0xf]
        %v3293 = vld [vmem:[%s3282 + $0x28] sm:$0xf]
        %v3294 = vld [vmem:[%s3282 + $0x2c] sm:$0xf]
        %v3295 = vld [vmem:[%s3282 + $0x30] sm:$0xf]
        %v3296 = vld [vmem:[%s3282 + $0x34] sm:$0xf]
        %v3297 = vld [vmem:[%s3282 + $0x38] sm:$0xf]
        %v3298 = vld [vmem:[%s3282 + $0x3c] sm:$0xf]
        %v3299 = vpack.c.b16 %v3207, %v3206
        %v3300 = vpack.c.b16 %v3209, %v3208
        %v3301 = vpack.c.b16 %v3211, %v3210
        %v3302 = vpack.c.b16 %v3213, %v3212
        %v3303 = vpack.c.b16 %v3215, %v3214
        %v3304 = vpack.c.b16 %v3217, %v3216
        %v3305 = vpack.c.b16 %v3219, %v3218
        %v3306 = vpack.c.b16 %v3221, %v3220
        %v3307 = vpack.c.b16 %v3223, %v3222
        %v3308 = vpack.c.b16 %v3225, %v3224
        %v3309 = vpack.c.b16 %v3279, %v3226
        %v3310 = vpack.c.b16 %v3281, %v3280
        %v3339 = vunpack.c.l.b16 %v3283
        %v3340 = vunpack.c.l.b16 %v3284
        %v3341 = vunpack.c.l.b16 %v3285
        %v3342 = vunpack.c.l.b16 %v3286
        %v3343 = vunpack.c.l.b16 %v3287
        %v3344 = vunpack.c.l.b16 %v3288
        %v3345 = vunpack.c.l.b16 %v3289
        %v3346 = vunpack.c.l.b16 %v3290
        %v3347 = vunpack.c.l.b16 %v3291
        %v3348 = vunpack.c.l.b16 %v3292
        %v3349 = vunpack.c.l.b16 %v3293
        %v3350 = vunpack.c.l.b16 %v3294
        %v3351 = vunpack.c.l.b16 %v3295
        %v3352 = vunpack.c.l.b16 %v3296
        %v3353 = vunpack.c.l.b16 %v3297
        %v3354 = vunpack.c.l.b16 %v3298
        %v3355 = vpack.c.b16 %v3340, %v3339
        %v3356 = vpack.c.b16 %v3342, %v3341
        %v3357 = vpack.c.b16 %v3344, %v3343
        %v3358 = vpack.c.b16 %v3346, %v3345
        %v3359 = vpack.c.b16 %v3348, %v3347
        %v3360 = vpack.c.b16 %v3350, %v3349
        %v3361 = vpack.c.b16 %v3352, %v3351
        %v3362 = vpack.c.b16 %v3354, %v3353
        %3371 = vmatprep.subr.bf16.mxu0 0
        %3372 = vmatpush1.bf16.msra.mxu0 %v3362
        %3373 = vmatprep.subr.bf16.mxu0 0
        %3374 = vmatpush1.bf16.msra.mxu0 %v3361
        %3375 = vmatprep.subr.bf16.mxu0 0
        %3376 = vmatpush1.bf16.msra.mxu0 %v3360
        %3377 = vmatprep.subr.bf16.mxu0 0
        %3378 = vmatpush1.bf16.msra.mxu0 %v3359
        %3379 = vmatprep.subr.bf16.mxu0 0
        %3380 = vmatpush1.bf16.msra.mxu0 %v3358
        %3381 = vmatprep.subr.bf16.mxu0 0
        %3382 = vmatpush1.bf16.msra.mxu0 %v3357
        %3383 = vmatprep.subr.bf16.mxu0 0
        %3384 = vmatpush1.bf16.msra.mxu0 %v3356
        %3385 = vmatprep.subr.bf16.mxu0 0
        %3386 = vmatpush1.bf16.msra.mxu0 %v3355
        %3387 = vmatprep.subr.bf16.mxu0 0
        %3388 = vmatpush2.bf16.msra.mxu0 0
        %3389 = vmatprep.subr.bf16.mxu0 0
        %3390 = vmatpush2.bf16.msra.mxu0 0
        %3391 = vmatprep.subr.bf16.mxu0 0
        %3392 = vmatpush2.bf16.msra.mxu0 0
        %3393 = vmatprep.subr.bf16.mxu0 0
        %3394 = vmatpush2.bf16.msra.mxu0 0
        %3395 = vmatprep.subr.bf16.mxu0 0
        %3396 = vmatpush2.bf16.msra.mxu0 0
        %3397 = vmatprep.subr.bf16.mxu0 0
        %3398 = vmatpush2.bf16.msra.mxu0 0
        %3399 = vmatprep.subr.bf16.mxu0 0
        %3400 = vmatpush2.bf16.msra.mxu0 0
        %3401 = vmatprep.subr.bf16.mxu0 0
        %3402 = vmatpush2.bf16.msra.mxu0 0
        %3403 = vmatprep.mubr.bf16.mxu0 0
        %3404 = vmatmul.mubr.bf16.gmra.mxu0 %v3299
        %v3405 = vpop.f32.mrf.mxu0
        %v3406 = vadd.f32 0.0, %v3405
        %v3407 = vpop.f32.mrf.mxu0
        %v3408 = vpop.f32.mrf.mxu0
        %v3409 = vadd.f32 0.0, %v3408
        %v3410 = vpop.f32.mrf.mxu0
        %3411 = vmatprep.mubr.bf16.mxu0 0
        %3412 = vmatmul.mubr.bf16.gmra.mxu0 %v3300
        %v3413 = vpop.f32.mrf.mxu0
        %v3414 = vpop.f32.mrf.mxu0
        %v3415 = vpop.f32.mrf.mxu0
        %v3416 = vadd.f32 0.0, %v3415
        %v3417 = vpop.f32.mrf.mxu0
        %3418 = vmatprep.mubr.bf16.mxu0 0
        %3419 = vmatmul.mubr.bf16.gmra.mxu0 %v3301
        %v3420 = vpop.f32.mrf.mxu0
        %v3421 = vadd.f32 0.0, %v3420
        %v3422 = vpop.f32.mrf.mxu0
        %v3423 = vpop.f32.mrf.mxu0
        %v3424 = vpop.f32.mrf.mxu0
        %3425 = vmatprep.mubr.bf16.mxu0 0
        %3426 = vmatmul.mubr.bf16.gmra.mxu0 %v3302
        %v3427 = vpop.f32.mrf.mxu0
        %v3428 = vadd.f32 0.0, %v3427
        %v3429 = vpop.f32.mrf.mxu0
        %v3430 = vpop.f32.mrf.mxu0
        %v3431 = vadd.f32 0.0, %v3430
        %v3432 = vpop.f32.mrf.mxu0
        %3433 = vmatprep.mubr.bf16.mxu0 0
        %3434 = vmatmul.mubr.bf16.gmra.mxu0 %v3303
        %v3435 = vpop.f32.mrf.mxu0
        %v3436 = vpop.f32.mrf.mxu0
        %v3437 = vpop.f32.mrf.mxu0
        %v3438 = vadd.f32 0.0, %v3437
        %v3439 = vpop.f32.mrf.mxu0
        %3440 = vmatprep.mubr.bf16.mxu0 0
        %3441 = vmatmul.mubr.bf16.gmra.mxu0 %v3304
        %v3442 = vpop.f32.mrf.mxu0
        %v3443 = vadd.f32 0.0, %v3442
        %v3444 = vpop.f32.mrf.mxu0
        %v3445 = vpop.f32.mrf.mxu0
        %v3446 = vpop.f32.mrf.mxu0
        %3447 = vmatprep.mubr.bf16.mxu0 0
        %3448 = vmatmul.mubr.bf16.gmra.mxu0 %v3305
        %v3449 = vpop.f32.mrf.mxu0
        %v3450 = vadd.f32 0.0, %v3449
        %v3451 = vpop.f32.mrf.mxu0
        %v3452 = vpop.f32.mrf.mxu0
        %v3453 = vadd.f32 0.0, %v3452
        %v3454 = vpop.f32.mrf.mxu0
        %3455 = vmatprep.mubr.bf16.mxu0 0
        %3456 = vmatmul.mubr.bf16.gmra.mxu0 %v3306
        %v3457 = vpop.f32.mrf.mxu0
        %v3458 = vpop.f32.mrf.mxu0
        %v3459 = vpop.f32.mrf.mxu0
        %v3460 = vadd.f32 0.0, %v3459
        %v3461 = vpop.f32.mrf.mxu0
        %3462 = vmatprep.mubr.bf16.mxu0 0
        %3463 = vmatmul.mubr.bf16.gmra.mxu0 %v3307
        %v3464 = vpop.f32.mrf.mxu0
        %v3465 = vadd.f32 0.0, %v3464
        %v3466 = vpop.f32.mrf.mxu0
        %v3467 = vpop.f32.mrf.mxu0
        %v3468 = vpop.f32.mrf.mxu0
        %3469 = vmatprep.mubr.bf16.mxu0 0
        %3470 = vmatmul.mubr.bf16.gmra.mxu0 %v3308
        %v3471 = vpop.f32.mrf.mxu0
        %v3472 = vadd.f32 0.0, %v3471
        %v3473 = vpop.f32.mrf.mxu0
        %v3474 = vpop.f32.mrf.mxu0
        %v3475 = vadd.f32 0.0, %v3474
        %v3476 = vpop.f32.mrf.mxu0
        %3477 = vmatprep.mubr.bf16.mxu0 0
        %3478 = vmatmul.mubr.bf16.gmra.mxu0 %v3309
        %v3479 = vpop.f32.mrf.mxu0
        %v3480 = vpop.f32.mrf.mxu0
        %v3481 = vpop.f32.mrf.mxu0
        %v3482 = vadd.f32 0.0, %v3481
        %v3483 = vpop.f32.mrf.mxu0
        %3484 = vmatprep.mubr.bf16.mxu0 0
        %3485 = vmatmul.mubr.bf16.gmra.mxu0 %v3310
        %v3486 = vpop.f32.mrf.mxu0
        %v3487 = vadd.f32 0.0, %v3486
        %v3488 = vpop.f32.mrf.mxu0
        %v3489 = vpop.f32.mrf.mxu0
        %v3490 = vpop.f32.mrf.mxu0
        %3491 = vdwg.mxu0
        %v3492 = vpack.c.b16 %v3204, %v3203
        %v3493 = vpack.c.b16 %v3206, %v3205
        %v3494 = vpack.c.b16 %v3208, %v3207
        %v3495 = vpack.c.b16 %v3210, %v3209
        %v3496 = vpack.c.b16 %v3212, %v3211
        %v3497 = vpack.c.b16 %v3214, %v3213
        %v3498 = vpack.c.b16 %v3216, %v3215
        %v3499 = vpack.c.b16 %v3218, %v3217
        %v3500 = vpack.c.b16 %v3220, %v3219
        %v3501 = vpack.c.b16 %v3222, %v3221
        %v3502 = vpack.c.b16 %v3224, %v3223
        %v3503 = vpack.c.b16 %v3226, %v3225
        %v3532 = vunpack.c.l.b16 %v3227
        %v3533 = vunpack.c.l.b16 %v3228
        %v3534 = vunpack.c.l.b16 %v3229
        %v3535 = vunpack.c.l.b16 %v3230
        %v3536 = vunpack.c.l.b16 %v3231
        %v3537 = vunpack.c.l.b16 %v3232
        %v3538 = vunpack.c.l.b16 %v3233
        %v3539 = vunpack.c.l.b16 %v3234
        %v3540 = vunpack.c.l.b16 %v3235
        %v3541 = vunpack.c.l.b16 %v3236
        %v3542 = vunpack.c.l.b16 %v3237
        %v3543 = vunpack.c.l.b16 %v3238
        %v3544 = vunpack.c.l.b16 %v3239
        %v3545 = vunpack.c.l.b16 %v3240
        %v3546 = vunpack.c.l.b16 %v3241
        %v3547 = vunpack.c.l.b16 %v3242
        %v3548 = vpack.c.b16 %v3533, %v3532
        %v3549 = vpack.c.b16 %v3535, %v3534
        %v3550 = vpack.c.b16 %v3537, %v3536
        %v3551 = vpack.c.b16 %v3539, %v3538
        %v3552 = vpack.c.b16 %v3541, %v3540
        %v3553 = vpack.c.b16 %v3543, %v3542
        %v3554 = vpack.c.b16 %v3545, %v3544
        %v3555 = vpack.c.b16 %v3547, %v3546
        %3564 = vmatprep.subr.bf16.mxu0 0
        %3565 = vmatpush1.bf16.msra.mxu0 %v3555
        %3566 = vmatprep.subr.bf16.mxu0 0
        %3567 = vmatpush1.bf16.msra.mxu0 %v3554
        %3568 = vmatprep.subr.bf16.mxu0 0
        %3569 = vmatpush1.bf16.msra.mxu0 %v3553
        %3570 = vmatprep.subr.bf16.mxu0 0
        %3571 = vmatpush1.bf16.msra.mxu0 %v3552
        %3572 = vmatprep.subr.bf16.mxu0 0
        %3573 = vmatpush1.bf16.msra.mxu0 %v3551
        %3574 = vmatprep.subr.bf16.mxu0 0
        %3575 = vmatpush1.bf16.msra.mxu0 %v3550
        %3576 = vmatprep.subr.bf16.mxu0 0
        %3577 = vmatpush1.bf16.msra.mxu0 %v3549
        %3578 = vmatprep.subr.bf16.mxu0 0
        %3579 = vmatpush1.bf16.msra.mxu0 %v3548
        %3580 = vmatprep.subr.bf16.mxu0 0
        %3581 = vmatpush2.bf16.msra.mxu0 0
        %3582 = vmatprep.subr.bf16.mxu0 0
        %3583 = vmatpush2.bf16.msra.mxu0 0
        %3584 = vmatprep.subr.bf16.mxu0 0
        %3585 = vmatpush2.bf16.msra.mxu0 0
        %3586 = vmatprep.subr.bf16.mxu0 0
        %3587 = vmatpush2.bf16.msra.mxu0 0
        %3588 = vmatprep.subr.bf16.mxu0 0
        %3589 = vmatpush2.bf16.msra.mxu0 0
        %3590 = vmatprep.subr.bf16.mxu0 0
        %3591 = vmatpush2.bf16.msra.mxu0 0
        %3592 = vmatprep.subr.bf16.mxu0 0
        %3593 = vmatpush2.bf16.msra.mxu0 0
        %3594 = vmatprep.subr.bf16.mxu0 0
        %3595 = vmatpush2.bf16.msra.mxu0 0
        %3596 = vmatprep.mubr.bf16.mxu0 0
        %3597 = vmatmul.mubr.bf16.gmra.mxu0 %v3492
        %v3598 = vpop.f32.mrf.mxu0
        %v3599 = vadd.f32 %v3406, %v3598
        %v3600 = vpop.f32.mrf.mxu0
        %v3601 = vpop.f32.mrf.mxu0
        %v3602 = vadd.f32 %v3409, %v3601
        %v3603 = vpop.f32.mrf.mxu0
        %3604 = vmatprep.mubr.bf16.mxu0 0
        %3605 = vmatmul.mubr.bf16.gmra.mxu0 %v3493
        %v3606 = vpop.f32.mrf.mxu0
        %v3607 = vpop.f32.mrf.mxu0
        %v3608 = vpop.f32.mrf.mxu0
        %v3609 = vadd.f32 %v3416, %v3608
        %v3610 = vpop.f32.mrf.mxu0
        %3611 = vmatprep.mubr.bf16.mxu0 0
        %3612 = vmatmul.mubr.bf16.gmra.mxu0 %v3494
        %v3613 = vpop.f32.mrf.mxu0
        %v3614 = vadd.f32 %v3421, %v3613
        %v3615 = vpop.f32.mrf.mxu0
        %v3616 = vpop.f32.mrf.mxu0
        %v3617 = vpop.f32.mrf.mxu0
        %3618 = vmatprep.mubr.bf16.mxu0 0
        %3619 = vmatmul.mubr.bf16.gmra.mxu0 %v3495
        %v3620 = vpop.f32.mrf.mxu0
        %v3621 = vadd.f32 %v3428, %v3620
        %v3622 = vpop.f32.mrf.mxu0
        %v3623 = vpop.f32.mrf.mxu0
        %v3624 = vadd.f32 %v3431, %v3623
        %v3625 = vpop.f32.mrf.mxu0
        %3626 = vmatprep.mubr.bf16.mxu0 0
        %3627 = vmatmul.mubr.bf16.gmra.mxu0 %v3496
        %v3628 = vpop.f32.mrf.mxu0
        %v3629 = vpop.f32.mrf.mxu0
        %v3630 = vpop.f32.mrf.mxu0
        %v3631 = vadd.f32 %v3438, %v3630
        %v3632 = vpop.f32.mrf.mxu0
        %3633 = vmatprep.mubr.bf16.mxu0 0
        %3634 = vmatmul.mubr.bf16.gmra.mxu0 %v3497
        %v3635 = vpop.f32.mrf.mxu0
        %v3636 = vadd.f32 %v3443, %v3635
        %v3637 = vpop.f32.mrf.mxu0
        %v3638 = vpop.f32.mrf.mxu0
        %v3639 = vpop.f32.mrf.mxu0
        %3640 = vmatprep.mubr.bf16.mxu0 0
        %3641 = vmatmul.mubr.bf16.gmra.mxu0 %v3498
        %v3642 = vpop.f32.mrf.mxu0
        %v3643 = vadd.f32 %v3450, %v3642
        %v3644 = vpop.f32.mrf.mxu0
        %v3645 = vpop.f32.mrf.mxu0
        %v3646 = vadd.f32 %v3453, %v3645
        %v3647 = vpop.f32.mrf.mxu0
        %3648 = vmatprep.mubr.bf16.mxu0 0
        %3649 = vmatmul.mubr.bf16.gmra.mxu0 %v3499
        %v3650 = vpop.f32.mrf.mxu0
        %v3651 = vpop.f32.mrf.mxu0
        %v3652 = vpop.f32.mrf.mxu0
        %v3653 = vadd.f32 %v3460, %v3652
        %v3654 = vpop.f32.mrf.mxu0
        %3655 = vmatprep.mubr.bf16.mxu0 0
        %3656 = vmatmul.mubr.bf16.gmra.mxu0 %v3500
        %v3657 = vpop.f32.mrf.mxu0
        %v3658 = vadd.f32 %v3465, %v3657
        %v3659 = vpop.f32.mrf.mxu0
        %v3660 = vpop.f32.mrf.mxu0
        %v3661 = vpop.f32.mrf.mxu0
        %3662 = vmatprep.mubr.bf16.mxu0 0
        %3663 = vmatmul.mubr.bf16.gmra.mxu0 %v3501
        %v3664 = vpop.f32.mrf.mxu0
        %v3665 = vadd.f32 %v3472, %v3664
        %v3666 = vpop.f32.mrf.mxu0
        %v3667 = vpop.f32.mrf.mxu0
        %v3668 = vadd.f32 %v3475, %v3667
        %v3669 = vpop.f32.mrf.mxu0
        %3670 = vmatprep.mubr.bf16.mxu0 0
        %3671 = vmatmul.mubr.bf16.gmra.mxu0 %v3502
        %v3672 = vpop.f32.mrf.mxu0
        %v3673 = vpop.f32.mrf.mxu0
        %v3674 = vpop.f32.mrf.mxu0
        %v3675 = vadd.f32 %v3482, %v3674
        %v3676 = vpop.f32.mrf.mxu0
        %3677 = vmatprep.mubr.bf16.mxu0 0
        %3678 = vmatmul.mubr.bf16.gmra.mxu0 %v3503
        %v3679 = vpop.f32.mrf.mxu0
        %v3680 = vadd.f32 %v3487, %v3679
        %v3681 = vpop.f32.mrf.mxu0
        %v3682 = vpop.f32.mrf.mxu0
        %v3683 = vpop.f32.mrf.mxu0
        %3684 = vdwg.mxu0
        %s3685 = scalar_lea.vmem [#allocation7], 256
        %v3686 = vld [vmem:[%s3685] sm:$0xf]
        %v3687 = vld [vmem:[%s3685 + $0x4] sm:$0xf]
        %v3688 = vld [vmem:[%s3685 + $0x8] sm:$0xf]
        %v3689 = vld [vmem:[%s3685 + $0xc] sm:$0xf]
        %v3690 = vld [vmem:[%s3685 + $0x10] sm:$0xf]
        %v3691 = vld [vmem:[%s3685 + $0x14] sm:$0xf]
        %v3692 = vld [vmem:[%s3685 + $0x18] sm:$0xf]
        %v3693 = vld [vmem:[%s3685 + $0x1c] sm:$0xf]
        %v3694 = vld [vmem:[%s3685 + $0x20] sm:$0xf]
        %v3695 = vld [vmem:[%s3685 + $0x24] sm:$0xf]
        %v3696 = vld [vmem:[%s3685 + $0x28] sm:$0xf]
        %v3697 = vld [vmem:[%s3685 + $0x2c] sm:$0xf]
        %v3698 = vld [vmem:[%s3685 + $0x30] sm:$0xf]
        %v3699 = vld [vmem:[%s3685 + $0x34] sm:$0xf]
        %v3700 = vld [vmem:[%s3685 + $0x38] sm:$0xf]
        %v3701 = vld [vmem:[%s3685 + $0x3c] sm:$0xf]
        %v3718 = vunpack.c.l.b16 %v3686
        %v3719 = vunpack.c.l.b16 %v3687
        %v3720 = vunpack.c.l.b16 %v3688
        %v3721 = vunpack.c.l.b16 %v3689
        %v3722 = vunpack.c.l.b16 %v3690
        %v3723 = vunpack.c.l.b16 %v3691
        %v3724 = vunpack.c.l.b16 %v3692
        %v3725 = vunpack.c.l.b16 %v3693
        %v3726 = vunpack.c.l.b16 %v3694
        %v3727 = vunpack.c.l.b16 %v3695
        %v3728 = vunpack.c.l.b16 %v3696
        %v3729 = vunpack.c.l.b16 %v3697
        %v3730 = vunpack.c.l.b16 %v3698
        %v3731 = vunpack.c.l.b16 %v3699
        %v3732 = vunpack.c.l.b16 %v3700
        %v3733 = vunpack.c.l.b16 %v3701
        %v3734 = vpack.c.b16 %v3719, %v3718
        %v3735 = vpack.c.b16 %v3721, %v3720
        %v3736 = vpack.c.b16 %v3723, %v3722
        %v3737 = vpack.c.b16 %v3725, %v3724
        %v3738 = vpack.c.b16 %v3727, %v3726
        %v3739 = vpack.c.b16 %v3729, %v3728
        %v3740 = vpack.c.b16 %v3731, %v3730
        %v3741 = vpack.c.b16 %v3733, %v3732
        %3750 = vmatprep.subr.bf16.mxu0 0
        %3751 = vmatpush1.bf16.msra.mxu0 %v3741
        %3752 = vmatprep.subr.bf16.mxu0 0
        %3753 = vmatpush1.bf16.msra.mxu0 %v3740
        %3754 = vmatprep.subr.bf16.mxu0 0
        %3755 = vmatpush1.bf16.msra.mxu0 %v3739
        %3756 = vmatprep.subr.bf16.mxu0 0
        %3757 = vmatpush1.bf16.msra.mxu0 %v3738
        %3758 = vmatprep.subr.bf16.mxu0 0
        %3759 = vmatpush1.bf16.msra.mxu0 %v3737
        %3760 = vmatprep.subr.bf16.mxu0 0
        %3761 = vmatpush1.bf16.msra.mxu0 %v3736
        %3762 = vmatprep.subr.bf16.mxu0 0
        %3763 = vmatpush1.bf16.msra.mxu0 %v3735
        %3764 = vmatprep.subr.bf16.mxu0 0
        %3765 = vmatpush1.bf16.msra.mxu0 %v3734
        %3766 = vmatprep.subr.bf16.mxu0 0
        %3767 = vmatpush2.bf16.msra.mxu0 0
        %3768 = vmatprep.subr.bf16.mxu0 0
        %3769 = vmatpush2.bf16.msra.mxu0 0
        %3770 = vmatprep.subr.bf16.mxu0 0
        %3771 = vmatpush2.bf16.msra.mxu0 0
        %3772 = vmatprep.subr.bf16.mxu0 0
        %3773 = vmatpush2.bf16.msra.mxu0 0
        %3774 = vmatprep.subr.bf16.mxu0 0
        %3775 = vmatpush2.bf16.msra.mxu0 0
        %3776 = vmatprep.subr.bf16.mxu0 0
        %3777 = vmatpush2.bf16.msra.mxu0 0
        %3778 = vmatprep.subr.bf16.mxu0 0
        %3779 = vmatpush2.bf16.msra.mxu0 0
        %3780 = vmatprep.subr.bf16.mxu0 0
        %3781 = vmatpush2.bf16.msra.mxu0 0
        %3782 = vmatprep.mubr.bf16.mxu0 0
        %3783 = vmatmul.mubr.bf16.gmra.mxu0 %v3299
        %v3784 = vpop.f32.mrf.mxu0
        %v3785 = vadd.f32 0.0, %v3784
        %v3786 = vpop.f32.mrf.mxu0
        %v3787 = vpop.f32.mrf.mxu0
        %v3788 = vadd.f32 0.0, %v3787
        %v3789 = vpop.f32.mrf.mxu0
        %3790 = vmatprep.mubr.bf16.mxu0 0
        %3791 = vmatmul.mubr.bf16.gmra.mxu0 %v3300
        %v3792 = vpop.f32.mrf.mxu0
        %v3793 = vadd.f32 0.0, %v3792
        %v3794 = vpop.f32.mrf.mxu0
        %v3795 = vpop.f32.mrf.mxu0
        %v3796 = vadd.f32 0.0, %v3795
        %v3797 = vpop.f32.mrf.mxu0
        %3798 = vmatprep.mubr.bf16.mxu0 0
        %3799 = vmatmul.mubr.bf16.gmra.mxu0 %v3301
        %v3800 = vpop.f32.mrf.mxu0
        %v3801 = vadd.f32 0.0, %v3800
        %v3802 = vpop.f32.mrf.mxu0
        %v3803 = vpop.f32.mrf.mxu0
        %v3804 = vadd.f32 0.0, %v3803
        %v3805 = vpop.f32.mrf.mxu0
        %3806 = vmatprep.mubr.bf16.mxu0 0
        %3807 = vmatmul.mubr.bf16.gmra.mxu0 %v3302
        %v3808 = vpop.f32.mrf.mxu0
        %v3809 = vadd.f32 0.0, %v3808
        %v3810 = vpop.f32.mrf.mxu0
        %v3811 = vpop.f32.mrf.mxu0
        %v3812 = vadd.f32 0.0, %v3811
        %v3813 = vpop.f32.mrf.mxu0
        %3814 = vmatprep.mubr.bf16.mxu0 0
        %3815 = vmatmul.mubr.bf16.gmra.mxu0 %v3303
        %v3816 = vpop.f32.mrf.mxu0
        %v3817 = vadd.f32 0.0, %v3816
        %v3818 = vpop.f32.mrf.mxu0
        %v3819 = vpop.f32.mrf.mxu0
        %v3820 = vadd.f32 0.0, %v3819
        %v3821 = vpop.f32.mrf.mxu0
        %3822 = vmatprep.mubr.bf16.mxu0 0
        %3823 = vmatmul.mubr.bf16.gmra.mxu0 %v3304
        %v3824 = vpop.f32.mrf.mxu0
        %v3825 = vadd.f32 0.0, %v3824
        %v3826 = vpop.f32.mrf.mxu0
        %v3827 = vpop.f32.mrf.mxu0
        %v3828 = vadd.f32 0.0, %v3827
        %v3829 = vpop.f32.mrf.mxu0
        %3830 = vmatprep.mubr.bf16.mxu0 0
        %3831 = vmatmul.mubr.bf16.gmra.mxu0 %v3305
        %v3832 = vpop.f32.mrf.mxu0
        %v3833 = vadd.f32 0.0, %v3832
        %v3834 = vpop.f32.mrf.mxu0
        %v3835 = vpop.f32.mrf.mxu0
        %v3836 = vadd.f32 0.0, %v3835
        %v3837 = vpop.f32.mrf.mxu0
        %3838 = vmatprep.mubr.bf16.mxu0 0
        %3839 = vmatmul.mubr.bf16.gmra.mxu0 %v3306
        %v3840 = vpop.f32.mrf.mxu0
        %v3841 = vadd.f32 0.0, %v3840
        %v3842 = vpop.f32.mrf.mxu0
        %v3843 = vpop.f32.mrf.mxu0
        %v3844 = vadd.f32 0.0, %v3843
        %v3845 = vpop.f32.mrf.mxu0
        %3846 = vmatprep.mubr.bf16.mxu0 0
        %3847 = vmatmul.mubr.bf16.gmra.mxu0 %v3307
        %v3848 = vpop.f32.mrf.mxu0
        %v3849 = vadd.f32 0.0, %v3848
        %v3850 = vpop.f32.mrf.mxu0
        %v3851 = vpop.f32.mrf.mxu0
        %v3852 = vadd.f32 0.0, %v3851
        %v3853 = vpop.f32.mrf.mxu0
        %3854 = vmatprep.mubr.bf16.mxu0 0
        %3855 = vmatmul.mubr.bf16.gmra.mxu0 %v3308
        %v3856 = vpop.f32.mrf.mxu0
        %v3857 = vadd.f32 0.0, %v3856
        %v3858 = vpop.f32.mrf.mxu0
        %v3859 = vpop.f32.mrf.mxu0
        %v3860 = vadd.f32 0.0, %v3859
        %v3861 = vpop.f32.mrf.mxu0
        %3862 = vmatprep.mubr.bf16.mxu0 0
        %3863 = vmatmul.mubr.bf16.gmra.mxu0 %v3309
        %v3864 = vpop.f32.mrf.mxu0
        %v3865 = vadd.f32 0.0, %v3864
        %v3866 = vpop.f32.mrf.mxu0
        %v3867 = vpop.f32.mrf.mxu0
        %v3868 = vadd.f32 0.0, %v3867
        %v3869 = vpop.f32.mrf.mxu0
        %3870 = vmatprep.mubr.bf16.mxu0 0
        %3871 = vmatmul.mubr.bf16.gmra.mxu0 %v3310
        %v3872 = vpop.f32.mrf.mxu0
        %v3873 = vadd.f32 0.0, %v3872
        %v3874 = vpop.f32.mrf.mxu0
        %v3875 = vpop.f32.mrf.mxu0
        %v3876 = vadd.f32 0.0, %v3875
        %v3877 = vpop.f32.mrf.mxu0
        %3878 = vdwg.mxu0
        %v3895 = vunpack.c.l.b16 %v3244
        %v3896 = vunpack.c.l.b16 %v3245
        %v3897 = vunpack.c.l.b16 %v3246
        %v3898 = vunpack.c.l.b16 %v3247
        %v3899 = vunpack.c.l.b16 %v3248
        %v3900 = vunpack.c.l.b16 %v3249
        %v3901 = vunpack.c.l.b16 %v3250
        %v3902 = vunpack.c.l.b16 %v3251
        %v3903 = vunpack.c.l.b16 %v3252
        %v3904 = vunpack.c.l.b16 %v3253
        %v3905 = vunpack.c.l.b16 %v3254
        %v3906 = vunpack.c.l.b16 %v3255
        %v3907 = vunpack.c.l.b16 %v3256
        %v3908 = vunpack.c.l.b16 %v3257
        %v3909 = vunpack.c.l.b16 %v3258
        %v3910 = vunpack.c.l.b16 %v3259
        %v3911 = vpack.c.b16 %v3896, %v3895
        %v3912 = vpack.c.b16 %v3898, %v3897
        %v3913 = vpack.c.b16 %v3900, %v3899
        %v3914 = vpack.c.b16 %v3902, %v3901
        %v3915 = vpack.c.b16 %v3904, %v3903
        %v3916 = vpack.c.b16 %v3906, %v3905
        %v3917 = vpack.c.b16 %v3908, %v3907
        %v3918 = vpack.c.b16 %v3910, %v3909
        %3927 = vmatprep.subr.bf16.mxu0 0
        %3928 = vmatpush1.bf16.msra.mxu0 %v3918
        %3929 = vmatprep.subr.bf16.mxu0 0
        %3930 = vmatpush1.bf16.msra.mxu0 %v3917
        %3931 = vmatprep.subr.bf16.mxu0 0
        %3932 = vmatpush1.bf16.msra.mxu0 %v3916
        %3933 = vmatprep.subr.bf16.mxu0 0
        %3934 = vmatpush1.bf16.msra.mxu0 %v3915
        %3935 = vmatprep.subr.bf16.mxu0 0
        %3936 = vmatpush1.bf16.msra.mxu0 %v3914
        %3937 = vmatprep.subr.bf16.mxu0 0
        %3938 = vmatpush1.bf16.msra.mxu0 %v3913
        %3939 = vmatprep.subr.bf16.mxu0 0
        %3940 = vmatpush1.bf16.msra.mxu0 %v3912
        %3941 = vmatprep.subr.bf16.mxu0 0
        %3942 = vmatpush1.bf16.msra.mxu0 %v3911
        %3943 = vmatprep.subr.bf16.mxu0 0
        %3944 = vmatpush2.bf16.msra.mxu0 0
        %3945 = vmatprep.subr.bf16.mxu0 0
        %3946 = vmatpush2.bf16.msra.mxu0 0
        %3947 = vmatprep.subr.bf16.mxu0 0
        %3948 = vmatpush2.bf16.msra.mxu0 0
        %3949 = vmatprep.subr.bf16.mxu0 0
        %3950 = vmatpush2.bf16.msra.mxu0 0
        %3951 = vmatprep.subr.bf16.mxu0 0
        %3952 = vmatpush2.bf16.msra.mxu0 0
        %3953 = vmatprep.subr.bf16.mxu0 0
        %3954 = vmatpush2.bf16.msra.mxu0 0
        %3955 = vmatprep.subr.bf16.mxu0 0
        %3956 = vmatpush2.bf16.msra.mxu0 0
        %3957 = vmatprep.subr.bf16.mxu0 0
        %3958 = vmatpush2.bf16.msra.mxu0 0
        %3959 = vmatprep.mubr.bf16.mxu0 0
        %3960 = vmatmul.mubr.bf16.gmra.mxu0 %v3492
        %v3961 = vpop.f32.mrf.mxu0
        %v3962 = vadd.f32 %v3785, %v3961
        %v3963 = vpop.f32.mrf.mxu0
        %v3964 = vpop.f32.mrf.mxu0
        %v3965 = vadd.f32 %v3788, %v3964
        %v3966 = vpop.f32.mrf.mxu0
        %3967 = vmatprep.mubr.bf16.mxu0 0
        %3968 = vmatmul.mubr.bf16.gmra.mxu0 %v3493
        %v3969 = vpop.f32.mrf.mxu0
        %v3970 = vadd.f32 %v3793, %v3969
        %v3971 = vpop.f32.mrf.mxu0
        %v3972 = vpop.f32.mrf.mxu0
        %v3973 = vadd.f32 %v3796, %v3972
        %v3974 = vpop.f32.mrf.mxu0
        %3975 = vmatprep.mubr.bf16.mxu0 0
        %3976 = vmatmul.mubr.bf16.gmra.mxu0 %v3494
        %v3977 = vpop.f32.mrf.mxu0
        %v3978 = vadd.f32 %v3801, %v3977
        %v3979 = vpop.f32.mrf.mxu0
        %v3980 = vpop.f32.mrf.mxu0
        %v3981 = vadd.f32 %v3804, %v3980
        %v3982 = vpop.f32.mrf.mxu0
        %3983 = vmatprep.mubr.bf16.mxu0 0
        %3984 = vmatmul.mubr.bf16.gmra.mxu0 %v3495
        %v3985 = vpop.f32.mrf.mxu0
        %v3986 = vadd.f32 %v3809, %v3985
        %v3987 = vpop.f32.mrf.mxu0
        %v3988 = vpop.f32.mrf.mxu0
        %v3989 = vadd.f32 %v3812, %v3988
        %v3990 = vpop.f32.mrf.mxu0
        %3991 = vmatprep.mubr.bf16.mxu0 0
        %3992 = vmatmul.mubr.bf16.gmra.mxu0 %v3496
        %v3993 = vpop.f32.mrf.mxu0
        %v3994 = vadd.f32 %v3817, %v3993
        %v3995 = vpop.f32.mrf.mxu0
        %v3996 = vpop.f32.mrf.mxu0
        %v3997 = vadd.f32 %v3820, %v3996
        %v3998 = vpop.f32.mrf.mxu0
        %3999 = vmatprep.mubr.bf16.mxu0 0
        %4000 = vmatmul.mubr.bf16.gmra.mxu0 %v3497
        %v4001 = vpop.f32.mrf.mxu0
        %v4002 = vadd.f32 %v3825, %v4001
        %v4003 = vpop.f32.mrf.mxu0
        %v4004 = vpop.f32.mrf.mxu0
        %v4005 = vadd.f32 %v3828, %v4004
        %v4006 = vpop.f32.mrf.mxu0
        %4007 = vmatprep.mubr.bf16.mxu0 0
        %4008 = vmatmul.mubr.bf16.gmra.mxu0 %v3498
        %v4009 = vpop.f32.mrf.mxu0
        %v4010 = vadd.f32 %v3833, %v4009
        %v4011 = vpop.f32.mrf.mxu0
        %v4012 = vpop.f32.mrf.mxu0
        %v4013 = vadd.f32 %v3836, %v4012
        %v4014 = vpop.f32.mrf.mxu0
        %4015 = vmatprep.mubr.bf16.mxu0 0
        %4016 = vmatmul.mubr.bf16.gmra.mxu0 %v3499
        %v4017 = vpop.f32.mrf.mxu0
        %v4018 = vadd.f32 %v3841, %v4017
        %v4019 = vpop.f32.mrf.mxu0
        %v4020 = vpop.f32.mrf.mxu0
        %v4021 = vadd.f32 %v3844, %v4020
        %v4022 = vpop.f32.mrf.mxu0
        %4023 = vmatprep.mubr.bf16.mxu0 0
        %4024 = vmatmul.mubr.bf16.gmra.mxu0 %v3500
        %v4025 = vpop.f32.mrf.mxu0
        %v4026 = vadd.f32 %v3849, %v4025
        %v4027 = vpop.f32.mrf.mxu0
        %v4028 = vpop.f32.mrf.mxu0
        %v4029 = vadd.f32 %v3852, %v4028
        %v4030 = vpop.f32.mrf.mxu0
        %4031 = vmatprep.mubr.bf16.mxu0 0
        %4032 = vmatmul.mubr.bf16.gmra.mxu0 %v3501
        %v4033 = vpop.f32.mrf.mxu0
        %v4034 = vadd.f32 %v3857, %v4033
        %v4035 = vpop.f32.mrf.mxu0
        %v4036 = vpop.f32.mrf.mxu0
        %v4037 = vadd.f32 %v3860, %v4036
        %v4038 = vpop.f32.mrf.mxu0
        %4039 = vmatprep.mubr.bf16.mxu0 0
        %4040 = vmatmul.mubr.bf16.gmra.mxu0 %v3502
        %v4041 = vpop.f32.mrf.mxu0
        %v4042 = vadd.f32 %v3865, %v4041
        %v4043 = vpop.f32.mrf.mxu0
        %v4044 = vpop.f32.mrf.mxu0
        %v4045 = vadd.f32 %v3868, %v4044
        %v4046 = vpop.f32.mrf.mxu0
        %4047 = vmatprep.mubr.bf16.mxu0 0
        %4048 = vmatmul.mubr.bf16.gmra.mxu0 %v3503
        %v4049 = vpop.f32.mrf.mxu0
        %v4050 = vadd.f32 %v3873, %v4049
        %v4051 = vpop.f32.mrf.mxu0
        %v4052 = vpop.f32.mrf.mxu0
        %v4053 = vadd.f32 %v3876, %v4052
        %v4054 = vpop.f32.mrf.mxu0
        %4055 = vdwg.mxu0
        %s4056 = scalar_lea.vmem [#allocation7], 320
        %v4057 = vld [vmem:[%s4056] sm:$0xf]
        %v4058 = vld [vmem:[%s4056 + $0x4] sm:$0xf]
        %v4059 = vld [vmem:[%s4056 + $0x8] sm:$0xf]
        %v4060 = vld [vmem:[%s4056 + $0xc] sm:$0xf]
        %v4061 = vld [vmem:[%s4056 + $0x10] sm:$0xf]
        %v4062 = vld [vmem:[%s4056 + $0x14] sm:$0xf]
        %v4063 = vld [vmem:[%s4056 + $0x18] sm:$0xf]
        %v4064 = vld [vmem:[%s4056 + $0x1c] sm:$0xf]
        %v4065 = vld [vmem:[%s4056 + $0x20] sm:$0xf]
        %v4066 = vld [vmem:[%s4056 + $0x24] sm:$0xf]
        %v4067 = vld [vmem:[%s4056 + $0x28] sm:$0xf]
        %v4068 = vld [vmem:[%s4056 + $0x2c] sm:$0xf]
        %v4069 = vld [vmem:[%s4056 + $0x30] sm:$0xf]
        %v4070 = vld [vmem:[%s4056 + $0x34] sm:$0xf]
        %v4071 = vld [vmem:[%s4056 + $0x38] sm:$0xf]
        %v4072 = vld [vmem:[%s4056 + $0x3c] sm:$0xf]
        %v4089 = vunpack.c.l.b16 %v4057
        %v4090 = vunpack.c.l.b16 %v4058
        %v4091 = vunpack.c.l.b16 %v4059
        %v4092 = vunpack.c.l.b16 %v4060
        %v4093 = vunpack.c.l.b16 %v4061
        %v4094 = vunpack.c.l.b16 %v4062
        %v4095 = vunpack.c.l.b16 %v4063
        %v4096 = vunpack.c.l.b16 %v4064
        %v4097 = vunpack.c.l.b16 %v4065
        %v4098 = vunpack.c.l.b16 %v4066
        %v4099 = vunpack.c.l.b16 %v4067
        %v4100 = vunpack.c.l.b16 %v4068
        %v4101 = vunpack.c.l.b16 %v4069
        %v4102 = vunpack.c.l.b16 %v4070
        %v4103 = vunpack.c.l.b16 %v4071
        %v4104 = vunpack.c.l.b16 %v4072
        %v4105 = vpack.c.b16 %v4090, %v4089
        %v4106 = vpack.c.b16 %v4092, %v4091
        %v4107 = vpack.c.b16 %v4094, %v4093
        %v4108 = vpack.c.b16 %v4096, %v4095
        %v4109 = vpack.c.b16 %v4098, %v4097
        %v4110 = vpack.c.b16 %v4100, %v4099
        %v4111 = vpack.c.b16 %v4102, %v4101
        %v4112 = vpack.c.b16 %v4104, %v4103
        %4121 = vmatprep.subr.bf16.mxu0 0
        %4122 = vmatpush1.bf16.msra.mxu0 %v4112
        %4123 = vmatprep.subr.bf16.mxu0 0
        %4124 = vmatpush1.bf16.msra.mxu0 %v4111
        %4125 = vmatprep.subr.bf16.mxu0 0
        %4126 = vmatpush1.bf16.msra.mxu0 %v4110
        %4127 = vmatprep.subr.bf16.mxu0 0
        %4128 = vmatpush1.bf16.msra.mxu0 %v4109
        %4129 = vmatprep.subr.bf16.mxu0 0
        %4130 = vmatpush1.bf16.msra.mxu0 %v4108
        %4131 = vmatprep.subr.bf16.mxu0 0
        %4132 = vmatpush1.bf16.msra.mxu0 %v4107
        %4133 = vmatprep.subr.bf16.mxu0 0
        %4134 = vmatpush1.bf16.msra.mxu0 %v4106
        %4135 = vmatprep.subr.bf16.mxu0 0
        %4136 = vmatpush1.bf16.msra.mxu0 %v4105
        %4137 = vmatprep.subr.bf16.mxu0 0
        %4138 = vmatpush2.bf16.msra.mxu0 0
        %4139 = vmatprep.subr.bf16.mxu0 0
        %4140 = vmatpush2.bf16.msra.mxu0 0
        %4141 = vmatprep.subr.bf16.mxu0 0
        %4142 = vmatpush2.bf16.msra.mxu0 0
        %4143 = vmatprep.subr.bf16.mxu0 0
        %4144 = vmatpush2.bf16.msra.mxu0 0
        %4145 = vmatprep.subr.bf16.mxu0 0
        %4146 = vmatpush2.bf16.msra.mxu0 0
        %4147 = vmatprep.subr.bf16.mxu0 0
        %4148 = vmatpush2.bf16.msra.mxu0 0
        %4149 = vmatprep.subr.bf16.mxu0 0
        %4150 = vmatpush2.bf16.msra.mxu0 0
        %4151 = vmatprep.subr.bf16.mxu0 0
        %4152 = vmatpush2.bf16.msra.mxu0 0
        %4153 = vmatprep.mubr.bf16.mxu0 0
        %4154 = vmatmul.mubr.bf16.gmra.mxu0 %v3299
        %v4155 = vpop.f32.mrf.mxu0
        %v4156 = vadd.f32 0.0, %v4155
        %v4157 = vpop.f32.mrf.mxu0
        %v4158 = vpop.f32.mrf.mxu0
        %v4159 = vadd.f32 0.0, %v4158
        %v4160 = vpop.f32.mrf.mxu0
        %4161 = vmatprep.mubr.bf16.mxu0 0
        %4162 = vmatmul.mubr.bf16.gmra.mxu0 %v3300
        %v4163 = vpop.f32.mrf.mxu0
        %v4164 = vadd.f32 0.0, %v4163
        %v4165 = vpop.f32.mrf.mxu0
        %v4166 = vpop.f32.mrf.mxu0
        %v4167 = vadd.f32 0.0, %v4166
        %v4168 = vpop.f32.mrf.mxu0
        %4169 = vmatprep.mubr.bf16.mxu0 0
        %4170 = vmatmul.mubr.bf16.gmra.mxu0 %v3301
        %v4171 = vpop.f32.mrf.mxu0
        %v4172 = vadd.f32 0.0, %v4171
        %v4173 = vpop.f32.mrf.mxu0
        %v4174 = vpop.f32.mrf.mxu0
        %v4175 = vadd.f32 0.0, %v4174
        %v4176 = vpop.f32.mrf.mxu0
        %4177 = vmatprep.mubr.bf16.mxu0 0
        %4178 = vmatmul.mubr.bf16.gmra.mxu0 %v3302
        %v4179 = vpop.f32.mrf.mxu0
        %v4180 = vadd.f32 0.0, %v4179
        %v4181 = vpop.f32.mrf.mxu0
        %v4182 = vpop.f32.mrf.mxu0
        %v4183 = vadd.f32 0.0, %v4182
        %v4184 = vpop.f32.mrf.mxu0
        %4185 = vmatprep.mubr.bf16.mxu0 0
        %4186 = vmatmul.mubr.bf16.gmra.mxu0 %v3303
        %v4187 = vpop.f32.mrf.mxu0
        %v4188 = vadd.f32 0.0, %v4187
        %v4189 = vpop.f32.mrf.mxu0
        %v4190 = vpop.f32.mrf.mxu0
        %v4191 = vadd.f32 0.0, %v4190
        %v4192 = vpop.f32.mrf.mxu0
        %4193 = vmatprep.mubr.bf16.mxu0 0
        %4194 = vmatmul.mubr.bf16.gmra.mxu0 %v3304
        %v4195 = vpop.f32.mrf.mxu0
        %v4196 = vadd.f32 0.0, %v4195
        %v4197 = vpop.f32.mrf.mxu0
        %v4198 = vpop.f32.mrf.mxu0
        %v4199 = vadd.f32 0.0, %v4198
        %v4200 = vpop.f32.mrf.mxu0
        %4201 = vmatprep.mubr.bf16.mxu0 0
        %4202 = vmatmul.mubr.bf16.gmra.mxu0 %v3305
        %v4203 = vpop.f32.mrf.mxu0
        %v4204 = vadd.f32 0.0, %v4203
        %v4205 = vpop.f32.mrf.mxu0
        %v4206 = vpop.f32.mrf.mxu0
        %v4207 = vadd.f32 0.0, %v4206
        %v4208 = vpop.f32.mrf.mxu0
        %4209 = vmatprep.mubr.bf16.mxu0 0
        %4210 = vmatmul.mubr.bf16.gmra.mxu0 %v3306
        %v4211 = vpop.f32.mrf.mxu0
        %v4212 = vadd.f32 0.0, %v4211
        %v4213 = vpop.f32.mrf.mxu0
        %v4214 = vpop.f32.mrf.mxu0
        %v4215 = vadd.f32 0.0, %v4214
        %v4216 = vpop.f32.mrf.mxu0
        %4217 = vmatprep.mubr.bf16.mxu0 0
        %4218 = vmatmul.mubr.bf16.gmra.mxu0 %v3307
        %v4219 = vpop.f32.mrf.mxu0
        %v4220 = vadd.f32 0.0, %v4219
        %v4221 = vpop.f32.mrf.mxu0
        %v4222 = vpop.f32.mrf.mxu0
        %v4223 = vadd.f32 0.0, %v4222
        %v4224 = vpop.f32.mrf.mxu0
        %4225 = vmatprep.mubr.bf16.mxu0 0
        %4226 = vmatmul.mubr.bf16.gmra.mxu0 %v3308
        %v4227 = vpop.f32.mrf.mxu0
        %v4228 = vadd.f32 0.0, %v4227
        %v4229 = vpop.f32.mrf.mxu0
        %v4230 = vpop.f32.mrf.mxu0
        %v4231 = vadd.f32 0.0, %v4230
        %v4232 = vpop.f32.mrf.mxu0
        %4233 = vmatprep.mubr.bf16.mxu0 0
        %4234 = vmatmul.mubr.bf16.gmra.mxu0 %v3309
        %v4235 = vpop.f32.mrf.mxu0
        %v4236 = vadd.f32 0.0, %v4235
        %v4237 = vpop.f32.mrf.mxu0
        %v4238 = vpop.f32.mrf.mxu0
        %v4239 = vadd.f32 0.0, %v4238
        %v4240 = vpop.f32.mrf.mxu0
        %4241 = vmatprep.mubr.bf16.mxu0 0
        %4242 = vmatmul.mubr.bf16.gmra.mxu0 %v3310
        %v4243 = vpop.f32.mrf.mxu0
        %v4244 = vadd.f32 0.0, %v4243
        %v4245 = vpop.f32.mrf.mxu0
        %v4246 = vpop.f32.mrf.mxu0
        %v4247 = vadd.f32 0.0, %v4246
        %v4248 = vpop.f32.mrf.mxu0
        %4249 = vdwg.mxu0
        %v4266 = vunpack.c.l.b16 %v3261
        %v4267 = vunpack.c.l.b16 %v3262
        %v4268 = vunpack.c.l.b16 %v3263
        %v4269 = vunpack.c.l.b16 %v3264
        %v4270 = vunpack.c.l.b16 %v3265
        %v4271 = vunpack.c.l.b16 %v3266
        %v4272 = vunpack.c.l.b16 %v3267
        %v4273 = vunpack.c.l.b16 %v3268
        %v4274 = vunpack.c.l.b16 %v3269
        %v4275 = vunpack.c.l.b16 %v3270
        %v4276 = vunpack.c.l.b16 %v3271
        %v4277 = vunpack.c.l.b16 %v3272
        %v4278 = vunpack.c.l.b16 %v3273
        %v4279 = vunpack.c.l.b16 %v3274
        %v4280 = vunpack.c.l.b16 %v3275
        %v4281 = vunpack.c.l.b16 %v3276
        %v4282 = vpack.c.b16 %v4267, %v4266
        %v4283 = vpack.c.b16 %v4269, %v4268
        %v4284 = vpack.c.b16 %v4271, %v4270
        %v4285 = vpack.c.b16 %v4273, %v4272
        %v4286 = vpack.c.b16 %v4275, %v4274
        %v4287 = vpack.c.b16 %v4277, %v4276
        %v4288 = vpack.c.b16 %v4279, %v4278
        %v4289 = vpack.c.b16 %v4281, %v4280
        %4298 = vmatprep.subr.bf16.mxu0 0
        %4299 = vmatpush1.bf16.msra.mxu0 %v4289
        %4300 = vmatprep.subr.bf16.mxu0 0
        %4301 = vmatpush1.bf16.msra.mxu0 %v4288
        %4302 = vmatprep.subr.bf16.mxu0 0
        %4303 = vmatpush1.bf16.msra.mxu0 %v4287
        %4304 = vmatprep.subr.bf16.mxu0 0
        %4305 = vmatpush1.bf16.msra.mxu0 %v4286
        %4306 = vmatprep.subr.bf16.mxu0 0
        %4307 = vmatpush1.bf16.msra.mxu0 %v4285
        %4308 = vmatprep.subr.bf16.mxu0 0
        %4309 = vmatpush1.bf16.msra.mxu0 %v4284
        %4310 = vmatprep.subr.bf16.mxu0 0
        %4311 = vmatpush1.bf16.msra.mxu0 %v4283
        %4312 = vmatprep.subr.bf16.mxu0 0
        %4313 = vmatpush1.bf16.msra.mxu0 %v4282
        %4314 = vmatprep.subr.bf16.mxu0 0
        %4315 = vmatpush2.bf16.msra.mxu0 0
        %4316 = vmatprep.subr.bf16.mxu0 0
        %4317 = vmatpush2.bf16.msra.mxu0 0
        %4318 = vmatprep.subr.bf16.mxu0 0
        %4319 = vmatpush2.bf16.msra.mxu0 0
        %4320 = vmatprep.subr.bf16.mxu0 0
        %4321 = vmatpush2.bf16.msra.mxu0 0
        %4322 = vmatprep.subr.bf16.mxu0 0
        %4323 = vmatpush2.bf16.msra.mxu0 0
        %4324 = vmatprep.subr.bf16.mxu0 0
        %4325 = vmatpush2.bf16.msra.mxu0 0
        %4326 = vmatprep.subr.bf16.mxu0 0
        %4327 = vmatpush2.bf16.msra.mxu0 0
        %4328 = vmatprep.subr.bf16.mxu0 0
        %4329 = vmatpush2.bf16.msra.mxu0 0
        %4330 = vmatprep.mubr.bf16.mxu0 0
        %4331 = vmatmul.mubr.bf16.gmra.mxu0 %v3492
        %v4332 = vpop.f32.mrf.mxu0
        %v4333 = vadd.f32 %v4156, %v4332
        %v4334 = vpop.f32.mrf.mxu0
        %v4335 = vpop.f32.mrf.mxu0
        %v4336 = vadd.f32 %v4159, %v4335
        %v4337 = vpop.f32.mrf.mxu0
        %4338 = vmatprep.mubr.bf16.mxu0 0
        %4339 = vmatmul.mubr.bf16.gmra.mxu0 %v3493
        %v4340 = vpop.f32.mrf.mxu0
        %v4341 = vadd.f32 %v4164, %v4340
        %v4342 = vpop.f32.mrf.mxu0
        %v4343 = vpop.f32.mrf.mxu0
        %v4344 = vadd.f32 %v4167, %v4343
        %v4345 = vpop.f32.mrf.mxu0
        %4346 = vmatprep.mubr.bf16.mxu0 0
        %4347 = vmatmul.mubr.bf16.gmra.mxu0 %v3494
        %v4348 = vpop.f32.mrf.mxu0
        %v4349 = vadd.f32 %v4172, %v4348
        %v4350 = vpop.f32.mrf.mxu0
        %v4351 = vpop.f32.mrf.mxu0
        %v4352 = vadd.f32 %v4175, %v4351
        %v4353 = vpop.f32.mrf.mxu0
        %4354 = vmatprep.mubr.bf16.mxu0 0
        %4355 = vmatmul.mubr.bf16.gmra.mxu0 %v3495
        %v4356 = vpop.f32.mrf.mxu0
        %v4357 = vadd.f32 %v4180, %v4356
        %v4358 = vpop.f32.mrf.mxu0
        %v4359 = vpop.f32.mrf.mxu0
        %v4360 = vadd.f32 %v4183, %v4359
        %v4361 = vpop.f32.mrf.mxu0
        %4362 = vmatprep.mubr.bf16.mxu0 0
        %4363 = vmatmul.mubr.bf16.gmra.mxu0 %v3496
        %v4364 = vpop.f32.mrf.mxu0
        %v4365 = vadd.f32 %v4188, %v4364
        %v4366 = vpop.f32.mrf.mxu0
        %v4367 = vpop.f32.mrf.mxu0
        %v4368 = vadd.f32 %v4191, %v4367
        %v4369 = vpop.f32.mrf.mxu0
        %4370 = vmatprep.mubr.bf16.mxu0 0
        %4371 = vmatmul.mubr.bf16.gmra.mxu0 %v3497
        %v4372 = vpop.f32.mrf.mxu0
        %v4373 = vadd.f32 %v4196, %v4372
        %v4374 = vpop.f32.mrf.mxu0
        %v4375 = vpop.f32.mrf.mxu0
        %v4376 = vadd.f32 %v4199, %v4375
        %v4377 = vpop.f32.mrf.mxu0
        %4378 = vmatprep.mubr.bf16.mxu0 0
        %4379 = vmatmul.mubr.bf16.gmra.mxu0 %v3498
        %v4380 = vpop.f32.mrf.mxu0
        %v4381 = vadd.f32 %v4204, %v4380
        %v4382 = vpop.f32.mrf.mxu0
        %v4383 = vpop.f32.mrf.mxu0
        %v4384 = vadd.f32 %v4207, %v4383
        %v4385 = vpop.f32.mrf.mxu0
        %4386 = vmatprep.mubr.bf16.mxu0 0
        %4387 = vmatmul.mubr.bf16.gmra.mxu0 %v3499
        %v4388 = vpop.f32.mrf.mxu0
        %v4389 = vadd.f32 %v4212, %v4388
        %v4390 = vpop.f32.mrf.mxu0
        %v4391 = vpop.f32.mrf.mxu0
        %v4392 = vadd.f32 %v4215, %v4391
        %v4393 = vpop.f32.mrf.mxu0
        %4394 = vmatprep.mubr.bf16.mxu0 0
        %4395 = vmatmul.mubr.bf16.gmra.mxu0 %v3500
        %v4396 = vpop.f32.mrf.mxu0
        %v4397 = vadd.f32 %v4220, %v4396
        %v4398 = vpop.f32.mrf.mxu0
        %v4399 = vpop.f32.mrf.mxu0
        %v4400 = vadd.f32 %v4223, %v4399
        %v4401 = vpop.f32.mrf.mxu0
        %4402 = vmatprep.mubr.bf16.mxu0 0
        %4403 = vmatmul.mubr.bf16.gmra.mxu0 %v3501
        %v4404 = vpop.f32.mrf.mxu0
        %v4405 = vadd.f32 %v4228, %v4404
        %v4406 = vpop.f32.mrf.mxu0
        %v4407 = vpop.f32.mrf.mxu0
        %v4408 = vadd.f32 %v4231, %v4407
        %v4409 = vpop.f32.mrf.mxu0
        %4410 = vmatprep.mubr.bf16.mxu0 0
        %4411 = vmatmul.mubr.bf16.gmra.mxu0 %v3502
        %v4412 = vpop.f32.mrf.mxu0
        %v4413 = vadd.f32 %v4236, %v4412
        %v4414 = vpop.f32.mrf.mxu0
        %v4415 = vpop.f32.mrf.mxu0
        %v4416 = vadd.f32 %v4239, %v4415
        %v4417 = vpop.f32.mrf.mxu0
        %4418 = vmatprep.mubr.bf16.mxu0 0
        %4419 = vmatmul.mubr.bf16.gmra.mxu0 %v3503
        %v4420 = vpop.f32.mrf.mxu0
        %v4421 = vadd.f32 %v4244, %v4420
        %v4422 = vpop.f32.mrf.mxu0
        %v4423 = vpop.f32.mrf.mxu0
        %v4424 = vadd.f32 %v4247, %v4423
        %v4425 = vpop.f32.mrf.mxu0
        %4426 = vdwg.mxu0
        %v4429 = vunpack.c.l.b16 %v3185
        %v4430 = vunpack.c.h.b16 %v3185
        %v4431 = vunpack.c.l.b16 %v3186
        %s4432 = scalar_lea.vmem [#allocation7], 384
        %v4433 = vld [vmem:[%s4432] sm:$0xf]
        %v4434 = vld [vmem:[%s4432 + $0x4] sm:$0xf]
        %v4435 = vld [vmem:[%s4432 + $0x8] sm:$0xf]
        %v4436 = vld [vmem:[%s4432 + $0xc] sm:$0xf]
        %v4437 = vld [vmem:[%s4432 + $0x10] sm:$0xf]
        %v4438 = vld [vmem:[%s4432 + $0x14] sm:$0xf]
        %v4439 = vld [vmem:[%s4432 + $0x18] sm:$0xf]
        %v4440 = vld [vmem:[%s4432 + $0x1c] sm:$0xf]
        %v4441 = vld [vmem:[%s4432 + $0x20] sm:$0xf]
        %v4442 = vld [vmem:[%s4432 + $0x24] sm:$0xf]
        %v4443 = vld [vmem:[%s4432 + $0x28] sm:$0xf]
        %v4444 = vld [vmem:[%s4432 + $0x2c] sm:$0xf]
        %v4445 = vld [vmem:[%s4432 + $0x30] sm:$0xf]
        %v4446 = vld [vmem:[%s4432 + $0x34] sm:$0xf]
        %v4447 = vld [vmem:[%s4432 + $0x38] sm:$0xf]
        %v4448 = vld [vmem:[%s4432 + $0x3c] sm:$0xf]
        %v4449 = vpack.c.b16 %v3280, %v3279
        %v4450 = vpack.c.b16 %v4429, %v3281
        %v4451 = vpack.c.b16 %v4431, %v4430
        %v4471 = vunpack.c.l.b16 %v4433
        %v4472 = vunpack.c.l.b16 %v4434
        %v4473 = vunpack.c.l.b16 %v4435
        %v4474 = vunpack.c.l.b16 %v4436
        %v4475 = vunpack.c.l.b16 %v4437
        %v4476 = vunpack.c.l.b16 %v4438
        %v4477 = vunpack.c.l.b16 %v4439
        %v4478 = vunpack.c.l.b16 %v4440
        %v4479 = vunpack.c.l.b16 %v4441
        %v4480 = vunpack.c.l.b16 %v4442
        %v4481 = vunpack.c.l.b16 %v4443
        %v4482 = vunpack.c.l.b16 %v4444
        %v4483 = vunpack.c.l.b16 %v4445
        %v4484 = vunpack.c.l.b16 %v4446
        %v4485 = vunpack.c.l.b16 %v4447
        %v4486 = vunpack.c.l.b16 %v4448
        %v4487 = vpack.c.b16 %v4472, %v4471
        %v4488 = vpack.c.b16 %v4474, %v4473
        %v4489 = vpack.c.b16 %v4476, %v4475
        %v4490 = vpack.c.b16 %v4478, %v4477
        %v4491 = vpack.c.b16 %v4480, %v4479
        %v4492 = vpack.c.b16 %v4482, %v4481
        %v4493 = vpack.c.b16 %v4484, %v4483
        %v4494 = vpack.c.b16 %v4486, %v4485
        %4503 = vmatprep.subr.bf16.mxu0 0
        %4504 = vmatpush1.bf16.msra.mxu0 %v4494
        %4505 = vmatprep.subr.bf16.mxu0 0
        %4506 = vmatpush1.bf16.msra.mxu0 %v4493
        %4507 = vmatprep.subr.bf16.mxu0 0
        %4508 = vmatpush1.bf16.msra.mxu0 %v4492
        %4509 = vmatprep.subr.bf16.mxu0 0
        %4510 = vmatpush1.bf16.msra.mxu0 %v4491
        %4511 = vmatprep.subr.bf16.mxu0 0
        %4512 = vmatpush1.bf16.msra.mxu0 %v4490
        %4513 = vmatprep.subr.bf16.mxu0 0
        %4514 = vmatpush1.bf16.msra.mxu0 %v4489
        %4515 = vmatprep.subr.bf16.mxu0 0
        %4516 = vmatpush1.bf16.msra.mxu0 %v4488
        %4517 = vmatprep.subr.bf16.mxu0 0
        %4518 = vmatpush1.bf16.msra.mxu0 %v4487
        %4519 = vmatprep.subr.bf16.mxu0 0
        %4520 = vmatpush2.bf16.msra.mxu0 0
        %4521 = vmatprep.subr.bf16.mxu0 0
        %4522 = vmatpush2.bf16.msra.mxu0 0
        %4523 = vmatprep.subr.bf16.mxu0 0
        %4524 = vmatpush2.bf16.msra.mxu0 0
        %4525 = vmatprep.subr.bf16.mxu0 0
        %4526 = vmatpush2.bf16.msra.mxu0 0
        %4527 = vmatprep.subr.bf16.mxu0 0
        %4528 = vmatpush2.bf16.msra.mxu0 0
        %4529 = vmatprep.subr.bf16.mxu0 0
        %4530 = vmatpush2.bf16.msra.mxu0 0
        %4531 = vmatprep.subr.bf16.mxu0 0
        %4532 = vmatpush2.bf16.msra.mxu0 0
        %4533 = vmatprep.subr.bf16.mxu0 0
        %4534 = vmatpush2.bf16.msra.mxu0 0
        %4535 = vmatprep.mubr.bf16.mxu0 0
        %4536 = vmatmul.mubr.bf16.gmra.mxu0 %v3495
        %v4537 = vpop.f32.mrf.mxu0
        %v4538 = vadd.f32 0.0, %v4537
        %v4539 = vpop.f32.mrf.mxu0
        %v4540 = vpop.f32.mrf.mxu0
        %v4541 = vadd.f32 0.0, %v4540
        %v4542 = vpop.f32.mrf.mxu0
        %4543 = vmatprep.mubr.bf16.mxu0 0
        %4544 = vmatmul.mubr.bf16.gmra.mxu0 %v3496
        %v4545 = vpop.f32.mrf.mxu0
        %v4546 = vpop.f32.mrf.mxu0
        %v4547 = vpop.f32.mrf.mxu0
        %v4548 = vadd.f32 0.0, %v4547
        %v4549 = vpop.f32.mrf.mxu0
        %4550 = vmatprep.mubr.bf16.mxu0 0
        %4551 = vmatmul.mubr.bf16.gmra.mxu0 %v3497
        %v4552 = vpop.f32.mrf.mxu0
        %v4553 = vadd.f32 0.0, %v4552
        %v4554 = vpop.f32.mrf.mxu0
        %v4555 = vpop.f32.mrf.mxu0
        %v4556 = vpop.f32.mrf.mxu0
        %4557 = vmatprep.mubr.bf16.mxu0 0
        %4558 = vmatmul.mubr.bf16.gmra.mxu0 %v3498
        %v4559 = vpop.f32.mrf.mxu0
        %v4560 = vadd.f32 0.0, %v4559
        %v4561 = vpop.f32.mrf.mxu0
        %v4562 = vpop.f32.mrf.mxu0
        %v4563 = vadd.f32 0.0, %v4562
        %v4564 = vpop.f32.mrf.mxu0
        %4565 = vmatprep.mubr.bf16.mxu0 0
        %4566 = vmatmul.mubr.bf16.gmra.mxu0 %v3499
        %v4567 = vpop.f32.mrf.mxu0
        %v4568 = vpop.f32.mrf.mxu0
        %v4569 = vpop.f32.mrf.mxu0
        %v4570 = vadd.f32 0.0, %v4569
        %v4571 = vpop.f32.mrf.mxu0
        %4572 = vmatprep.mubr.bf16.mxu0 0
        %4573 = vmatmul.mubr.bf16.gmra.mxu0 %v3500
        %v4574 = vpop.f32.mrf.mxu0
        %v4575 = vadd.f32 0.0, %v4574
        %v4576 = vpop.f32.mrf.mxu0
        %v4577 = vpop.f32.mrf.mxu0
        %v4578 = vpop.f32.mrf.mxu0
        %4579 = vmatprep.mubr.bf16.mxu0 0
        %4580 = vmatmul.mubr.bf16.gmra.mxu0 %v3501
        %v4581 = vpop.f32.mrf.mxu0
        %v4582 = vadd.f32 0.0, %v4581
        %v4583 = vpop.f32.mrf.mxu0
        %v4584 = vpop.f32.mrf.mxu0
        %v4585 = vadd.f32 0.0, %v4584
        %v4586 = vpop.f32.mrf.mxu0
        %4587 = vmatprep.mubr.bf16.mxu0 0
        %4588 = vmatmul.mubr.bf16.gmra.mxu0 %v3502
        %v4589 = vpop.f32.mrf.mxu0
        %v4590 = vpop.f32.mrf.mxu0
        %v4591 = vpop.f32.mrf.mxu0
        %v4592 = vadd.f32 0.0, %v4591
        %v4593 = vpop.f32.mrf.mxu0
        %4594 = vmatprep.mubr.bf16.mxu0 0
        %4595 = vmatmul.mubr.bf16.gmra.mxu0 %v3503
        %v4596 = vpop.f32.mrf.mxu0
        %v4597 = vadd.f32 0.0, %v4596
        %v4598 = vpop.f32.mrf.mxu0
        %v4599 = vpop.f32.mrf.mxu0
        %v4600 = vpop.f32.mrf.mxu0
        %4601 = vmatprep.mubr.bf16.mxu0 0
        %4602 = vmatmul.mubr.bf16.gmra.mxu0 %v4449
        %v4603 = vpop.f32.mrf.mxu0
        %v4604 = vadd.f32 0.0, %v4603
        %v4605 = vpop.f32.mrf.mxu0
        %v4606 = vpop.f32.mrf.mxu0
        %v4607 = vadd.f32 0.0, %v4606
        %v4608 = vpop.f32.mrf.mxu0
        %4609 = vmatprep.mubr.bf16.mxu0 0
        %4610 = vmatmul.mubr.bf16.gmra.mxu0 %v4450
        %v4611 = vpop.f32.mrf.mxu0
        %v4612 = vpop.f32.mrf.mxu0
        %v4613 = vpop.f32.mrf.mxu0
        %v4614 = vadd.f32 0.0, %v4613
        %v4615 = vpop.f32.mrf.mxu0
        %4616 = vmatprep.mubr.bf16.mxu0 0
        %4617 = vmatmul.mubr.bf16.gmra.mxu0 %v4451
        %v4618 = vpop.f32.mrf.mxu0
        %v4619 = vadd.f32 0.0, %v4618
        %v4620 = vpop.f32.mrf.mxu0
        %v4621 = vpop.f32.mrf.mxu0
        %v4622 = vpop.f32.mrf.mxu0
        %4623 = vdwg.mxu0
        %v4624 = vadd.f32 %v3599, %v4538
        %v4625 = vadd.f32 %v3602, %v4541
        %v4626 = vadd.f32 %v3609, %v4548
        %v4627 = vadd.f32 %v3614, %v4553
        %v4628 = vadd.f32 %v3621, %v4560
        %v4629 = vadd.f32 %v3624, %v4563
        %v4630 = vadd.f32 %v3631, %v4570
        %v4631 = vadd.f32 %v3636, %v4575
        %v4632 = vadd.f32 %v3643, %v4582
        %v4633 = vadd.f32 %v3646, %v4585
        %v4634 = vadd.f32 %v3653, %v4592
        %v4635 = vadd.f32 %v3658, %v4597
        %v4636 = vadd.f32 %v3665, %v4604
        %v4637 = vadd.f32 %v3668, %v4607
        %v4638 = vadd.f32 %v3675, %v4614
        %v4639 = vadd.f32 %v3680, %v4619
        %s4640 = scalar_lea.vmem [#allocation7], 448
        %v4641 = vld [vmem:[%s4640] sm:$0xf]
        %v4642 = vld [vmem:[%s4640 + $0x4] sm:$0xf]
        %v4643 = vld [vmem:[%s4640 + $0x8] sm:$0xf]
        %v4644 = vld [vmem:[%s4640 + $0xc] sm:$0xf]
        %v4645 = vld [vmem:[%s4640 + $0x10] sm:$0xf]
        %v4646 = vld [vmem:[%s4640 + $0x14] sm:$0xf]
        %v4647 = vld [vmem:[%s4640 + $0x18] sm:$0xf]
        %v4648 = vld [vmem:[%s4640 + $0x1c] sm:$0xf]
        %v4649 = vld [vmem:[%s4640 + $0x20] sm:$0xf]
        %v4650 = vld [vmem:[%s4640 + $0x24] sm:$0xf]
        %v4651 = vld [vmem:[%s4640 + $0x28] sm:$0xf]
        %v4652 = vld [vmem:[%s4640 + $0x2c] sm:$0xf]
        %v4653 = vld [vmem:[%s4640 + $0x30] sm:$0xf]
        %v4654 = vld [vmem:[%s4640 + $0x34] sm:$0xf]
        %v4655 = vld [vmem:[%s4640 + $0x38] sm:$0xf]
        %v4656 = vld [vmem:[%s4640 + $0x3c] sm:$0xf]
        %v4673 = vunpack.c.l.b16 %v4641
        %v4674 = vunpack.c.l.b16 %v4642
        %v4675 = vunpack.c.l.b16 %v4643
        %v4676 = vunpack.c.l.b16 %v4644
        %v4677 = vunpack.c.l.b16 %v4645
        %v4678 = vunpack.c.l.b16 %v4646
        %v4679 = vunpack.c.l.b16 %v4647
        %v4680 = vunpack.c.l.b16 %v4648
        %v4681 = vunpack.c.l.b16 %v4649
        %v4682 = vunpack.c.l.b16 %v4650
        %v4683 = vunpack.c.l.b16 %v4651
        %v4684 = vunpack.c.l.b16 %v4652
        %v4685 = vunpack.c.l.b16 %v4653
        %v4686 = vunpack.c.l.b16 %v4654
        %v4687 = vunpack.c.l.b16 %v4655
        %v4688 = vunpack.c.l.b16 %v4656
        %v4689 = vpack.c.b16 %v4674, %v4673
        %v4690 = vpack.c.b16 %v4676, %v4675
        %v4691 = vpack.c.b16 %v4678, %v4677
        %v4692 = vpack.c.b16 %v4680, %v4679
        %v4693 = vpack.c.b16 %v4682, %v4681
        %v4694 = vpack.c.b16 %v4684, %v4683
        %v4695 = vpack.c.b16 %v4686, %v4685
        %v4696 = vpack.c.b16 %v4688, %v4687
        %4705 = vmatprep.subr.bf16.mxu0 0
        %4706 = vmatpush1.bf16.msra.mxu0 %v4696
        %4707 = vmatprep.subr.bf16.mxu0 0
        %4708 = vmatpush1.bf16.msra.mxu0 %v4695
        %4709 = vmatprep.subr.bf16.mxu0 0
        %4710 = vmatpush1.bf16.msra.mxu0 %v4694
        %4711 = vmatprep.subr.bf16.mxu0 0
        %4712 = vmatpush1.bf16.msra.mxu0 %v4693
        %4713 = vmatprep.subr.bf16.mxu0 0
        %4714 = vmatpush1.bf16.msra.mxu0 %v4692
        %4715 = vmatprep.subr.bf16.mxu0 0
        %4716 = vmatpush1.bf16.msra.mxu0 %v4691
        %4717 = vmatprep.subr.bf16.mxu0 0
        %4718 = vmatpush1.bf16.msra.mxu0 %v4690
        %4719 = vmatprep.subr.bf16.mxu0 0
        %4720 = vmatpush1.bf16.msra.mxu0 %v4689
        %4721 = vmatprep.subr.bf16.mxu0 0
        %4722 = vmatpush2.bf16.msra.mxu0 0
        %4723 = vmatprep.subr.bf16.mxu0 0
        %4724 = vmatpush2.bf16.msra.mxu0 0
        %4725 = vmatprep.subr.bf16.mxu0 0
        %4726 = vmatpush2.bf16.msra.mxu0 0
        %4727 = vmatprep.subr.bf16.mxu0 0
        %4728 = vmatpush2.bf16.msra.mxu0 0
        %4729 = vmatprep.subr.bf16.mxu0 0
        %4730 = vmatpush2.bf16.msra.mxu0 0
        %4731 = vmatprep.subr.bf16.mxu0 0
        %4732 = vmatpush2.bf16.msra.mxu0 0
        %4733 = vmatprep.subr.bf16.mxu0 0
        %4734 = vmatpush2.bf16.msra.mxu0 0
        %4735 = vmatprep.subr.bf16.mxu0 0
        %4736 = vmatpush2.bf16.msra.mxu0 0
        %4737 = vmatprep.mubr.bf16.mxu0 0
        %4738 = vmatmul.mubr.bf16.gmra.mxu0 %v3495
        %v4739 = vpop.f32.mrf.mxu0
        %v4740 = vadd.f32 0.0, %v4739
        %v4741 = vpop.f32.mrf.mxu0
        %v4742 = vpop.f32.mrf.mxu0
        %v4743 = vadd.f32 0.0, %v4742
        %v4744 = vpop.f32.mrf.mxu0
        %4745 = vmatprep.mubr.bf16.mxu0 0
        %4746 = vmatmul.mubr.bf16.gmra.mxu0 %v3496
        %v4747 = vpop.f32.mrf.mxu0
        %v4748 = vadd.f32 0.0, %v4747
        %v4749 = vpop.f32.mrf.mxu0
        %v4750 = vpop.f32.mrf.mxu0
        %v4751 = vadd.f32 0.0, %v4750
        %v4752 = vpop.f32.mrf.mxu0
        %4753 = vmatprep.mubr.bf16.mxu0 0
        %4754 = vmatmul.mubr.bf16.gmra.mxu0 %v3497
        %v4755 = vpop.f32.mrf.mxu0
        %v4756 = vadd.f32 0.0, %v4755
        %v4757 = vpop.f32.mrf.mxu0
        %v4758 = vpop.f32.mrf.mxu0
        %v4759 = vadd.f32 0.0, %v4758
        %v4760 = vpop.f32.mrf.mxu0
        %4761 = vmatprep.mubr.bf16.mxu0 0
        %4762 = vmatmul.mubr.bf16.gmra.mxu0 %v3498
        %v4763 = vpop.f32.mrf.mxu0
        %v4764 = vadd.f32 0.0, %v4763
        %v4765 = vpop.f32.mrf.mxu0
        %v4766 = vpop.f32.mrf.mxu0
        %v4767 = vadd.f32 0.0, %v4766
        %v4768 = vpop.f32.mrf.mxu0
        %4769 = vmatprep.mubr.bf16.mxu0 0
        %4770 = vmatmul.mubr.bf16.gmra.mxu0 %v3499
        %v4771 = vpop.f32.mrf.mxu0
        %v4772 = vadd.f32 0.0, %v4771
        %v4773 = vpop.f32.mrf.mxu0
        %v4774 = vpop.f32.mrf.mxu0
        %v4775 = vadd.f32 0.0, %v4774
        %v4776 = vpop.f32.mrf.mxu0
        %4777 = vmatprep.mubr.bf16.mxu0 0
        %4778 = vmatmul.mubr.bf16.gmra.mxu0 %v3500
        %v4779 = vpop.f32.mrf.mxu0
        %v4780 = vadd.f32 0.0, %v4779
        %v4781 = vpop.f32.mrf.mxu0
        %v4782 = vpop.f32.mrf.mxu0
        %v4783 = vadd.f32 0.0, %v4782
        %v4784 = vpop.f32.mrf.mxu0
        %4785 = vmatprep.mubr.bf16.mxu0 0
        %4786 = vmatmul.mubr.bf16.gmra.mxu0 %v3501
        %v4787 = vpop.f32.mrf.mxu0
        %v4788 = vadd.f32 0.0, %v4787
        %v4789 = vpop.f32.mrf.mxu0
        %v4790 = vpop.f32.mrf.mxu0
        %v4791 = vadd.f32 0.0, %v4790
        %v4792 = vpop.f32.mrf.mxu0
        %4793 = vmatprep.mubr.bf16.mxu0 0
        %4794 = vmatmul.mubr.bf16.gmra.mxu0 %v3502
        %v4795 = vpop.f32.mrf.mxu0
        %v4796 = vadd.f32 0.0, %v4795
        %v4797 = vpop.f32.mrf.mxu0
        %v4798 = vpop.f32.mrf.mxu0
        %v4799 = vadd.f32 0.0, %v4798
        %v4800 = vpop.f32.mrf.mxu0
        %4801 = vmatprep.mubr.bf16.mxu0 0
        %4802 = vmatmul.mubr.bf16.gmra.mxu0 %v3503
        %v4803 = vpop.f32.mrf.mxu0
        %v4804 = vadd.f32 0.0, %v4803
        %v4805 = vpop.f32.mrf.mxu0
        %v4806 = vpop.f32.mrf.mxu0
        %v4807 = vadd.f32 0.0, %v4806
        %v4808 = vpop.f32.mrf.mxu0
        %4809 = vmatprep.mubr.bf16.mxu0 0
        %4810 = vmatmul.mubr.bf16.gmra.mxu0 %v4449
        %v4811 = vpop.f32.mrf.mxu0
        %v4812 = vadd.f32 0.0, %v4811
        %v4813 = vpop.f32.mrf.mxu0
        %v4814 = vpop.f32.mrf.mxu0
        %v4815 = vadd.f32 0.0, %v4814
        %v4816 = vpop.f32.mrf.mxu0
        %4817 = vmatprep.mubr.bf16.mxu0 0
        %4818 = vmatmul.mubr.bf16.gmra.mxu0 %v4450
        %v4819 = vpop.f32.mrf.mxu0
        %v4820 = vadd.f32 0.0, %v4819
        %v4821 = vpop.f32.mrf.mxu0
        %v4822 = vpop.f32.mrf.mxu0
        %v4823 = vadd.f32 0.0, %v4822
        %v4824 = vpop.f32.mrf.mxu0
        %4825 = vmatprep.mubr.bf16.mxu0 0
        %4826 = vmatmul.mubr.bf16.gmra.mxu0 %v4451
        %v4827 = vpop.f32.mrf.mxu0
        %v4828 = vadd.f32 0.0, %v4827
        %v4829 = vpop.f32.mrf.mxu0
        %v4830 = vpop.f32.mrf.mxu0
        %v4831 = vadd.f32 0.0, %v4830
        %v4832 = vpop.f32.mrf.mxu0
        %4833 = vdwg.mxu0
        %v4834 = vadd.f32 %v3962, %v4740
        %v4835 = vadd.f32 %v3965, %v4743
        %v4836 = vadd.f32 %v3970, %v4748
        %v4837 = vadd.f32 %v3973, %v4751
        %v4838 = vadd.f32 %v3978, %v4756
        %v4839 = vadd.f32 %v3981, %v4759
        %v4840 = vadd.f32 %v3986, %v4764
        %v4841 = vadd.f32 %v3989, %v4767
        %v4842 = vadd.f32 %v3994, %v4772
        %v4843 = vadd.f32 %v3997, %v4775
        %v4844 = vadd.f32 %v4002, %v4780
        %v4845 = vadd.f32 %v4005, %v4783
        %v4846 = vadd.f32 %v4010, %v4788
        %v4847 = vadd.f32 %v4013, %v4791
        %v4848 = vadd.f32 %v4018, %v4796
        %v4849 = vadd.f32 %v4021, %v4799
        %v4850 = vadd.f32 %v4026, %v4804
        %v4851 = vadd.f32 %v4029, %v4807
        %v4852 = vadd.f32 %v4034, %v4812
        %v4853 = vadd.f32 %v4037, %v4815
        %v4854 = vadd.f32 %v4042, %v4820
        %v4855 = vadd.f32 %v4045, %v4823
        %v4856 = vadd.f32 %v4050, %v4828
        %v4857 = vadd.f32 %v4053, %v4831
        %s4858 = scalar_lea.vmem [#allocation7], 512
        %v4859 = vld [vmem:[%s4858] sm:$0xf]
        %v4860 = vld [vmem:[%s4858 + $0x4] sm:$0xf]
        %v4861 = vld [vmem:[%s4858 + $0x8] sm:$0xf]
        %v4862 = vld [vmem:[%s4858 + $0xc] sm:$0xf]
        %v4863 = vld [vmem:[%s4858 + $0x10] sm:$0xf]
        %v4864 = vld [vmem:[%s4858 + $0x14] sm:$0xf]
        %v4865 = vld [vmem:[%s4858 + $0x18] sm:$0xf]
        %v4866 = vld [vmem:[%s4858 + $0x1c] sm:$0xf]
        %v4867 = vld [vmem:[%s4858 + $0x20] sm:$0xf]
        %v4868 = vld [vmem:[%s4858 + $0x24] sm:$0xf]
        %v4869 = vld [vmem:[%s4858 + $0x28] sm:$0xf]
        %v4870 = vld [vmem:[%s4858 + $0x2c] sm:$0xf]
        %v4871 = vld [vmem:[%s4858 + $0x30] sm:$0xf]
        %v4872 = vld [vmem:[%s4858 + $0x34] sm:$0xf]
        %v4873 = vld [vmem:[%s4858 + $0x38] sm:$0xf]
        %v4874 = vld [vmem:[%s4858 + $0x3c] sm:$0xf]
        %v4891 = vunpack.c.l.b16 %v4859
        %v4892 = vunpack.c.l.b16 %v4860
        %v4893 = vunpack.c.l.b16 %v4861
        %v4894 = vunpack.c.l.b16 %v4862
        %v4895 = vunpack.c.l.b16 %v4863
        %v4896 = vunpack.c.l.b16 %v4864
        %v4897 = vunpack.c.l.b16 %v4865
        %v4898 = vunpack.c.l.b16 %v4866
        %v4899 = vunpack.c.l.b16 %v4867
        %v4900 = vunpack.c.l.b16 %v4868
        %v4901 = vunpack.c.l.b16 %v4869
        %v4902 = vunpack.c.l.b16 %v4870
        %v4903 = vunpack.c.l.b16 %v4871
        %v4904 = vunpack.c.l.b16 %v4872
        %v4905 = vunpack.c.l.b16 %v4873
        %v4906 = vunpack.c.l.b16 %v4874
        %v4907 = vpack.c.b16 %v4892, %v4891
        %v4908 = vpack.c.b16 %v4894, %v4893
        %v4909 = vpack.c.b16 %v4896, %v4895
        %v4910 = vpack.c.b16 %v4898, %v4897
        %v4911 = vpack.c.b16 %v4900, %v4899
        %v4912 = vpack.c.b16 %v4902, %v4901
        %v4913 = vpack.c.b16 %v4904, %v4903
        %v4914 = vpack.c.b16 %v4906, %v4905
        %4923 = vmatprep.subr.bf16.mxu0 0
        %4924 = vmatpush1.bf16.msra.mxu0 %v4914
        %4925 = vmatprep.subr.bf16.mxu0 0
        %4926 = vmatpush1.bf16.msra.mxu0 %v4913
        %4927 = vmatprep.subr.bf16.mxu0 0
        %4928 = vmatpush1.bf16.msra.mxu0 %v4912
        %4929 = vmatprep.subr.bf16.mxu0 0
        %4930 = vmatpush1.bf16.msra.mxu0 %v4911
        %4931 = vmatprep.subr.bf16.mxu0 0
        %4932 = vmatpush1.bf16.msra.mxu0 %v4910
        %4933 = vmatprep.subr.bf16.mxu0 0
        %4934 = vmatpush1.bf16.msra.mxu0 %v4909
        %4935 = vmatprep.subr.bf16.mxu0 0
        %4936 = vmatpush1.bf16.msra.mxu0 %v4908
        %4937 = vmatprep.subr.bf16.mxu0 0
        %4938 = vmatpush1.bf16.msra.mxu0 %v4907
        %4939 = vmatprep.subr.bf16.mxu0 0
        %4940 = vmatpush2.bf16.msra.mxu0 0
        %4941 = vmatprep.subr.bf16.mxu0 0
        %4942 = vmatpush2.bf16.msra.mxu0 0
        %4943 = vmatprep.subr.bf16.mxu0 0
        %4944 = vmatpush2.bf16.msra.mxu0 0
        %4945 = vmatprep.subr.bf16.mxu0 0
        %4946 = vmatpush2.bf16.msra.mxu0 0
        %4947 = vmatprep.subr.bf16.mxu0 0
        %4948 = vmatpush2.bf16.msra.mxu0 0
        %4949 = vmatprep.subr.bf16.mxu0 0
        %4950 = vmatpush2.bf16.msra.mxu0 0
        %4951 = vmatprep.subr.bf16.mxu0 0
        %4952 = vmatpush2.bf16.msra.mxu0 0
        %4953 = vmatprep.subr.bf16.mxu0 0
        %4954 = vmatpush2.bf16.msra.mxu0 0
        %4955 = vmatprep.mubr.bf16.mxu0 0
        %4956 = vmatmul.mubr.bf16.gmra.mxu0 %v3495
        %v4957 = vpop.f32.mrf.mxu0
        %v4958 = vadd.f32 0.0, %v4957
        %v4959 = vpop.f32.mrf.mxu0
        %v4960 = vpop.f32.mrf.mxu0
        %v4961 = vadd.f32 0.0, %v4960
        %v4962 = vpop.f32.mrf.mxu0
        %4963 = vmatprep.mubr.bf16.mxu0 0
        %4964 = vmatmul.mubr.bf16.gmra.mxu0 %v3496
        %v4965 = vpop.f32.mrf.mxu0
        %v4966 = vadd.f32 0.0, %v4965
        %v4967 = vpop.f32.mrf.mxu0
        %v4968 = vpop.f32.mrf.mxu0
        %v4969 = vadd.f32 0.0, %v4968
        %v4970 = vpop.f32.mrf.mxu0
        %4971 = vmatprep.mubr.bf16.mxu0 0
        %4972 = vmatmul.mubr.bf16.gmra.mxu0 %v3497
        %v4973 = vpop.f32.mrf.mxu0
        %v4974 = vadd.f32 0.0, %v4973
        %v4975 = vpop.f32.mrf.mxu0
        %v4976 = vpop.f32.mrf.mxu0
        %v4977 = vadd.f32 0.0, %v4976
        %v4978 = vpop.f32.mrf.mxu0
        %4979 = vmatprep.mubr.bf16.mxu0 0
        %4980 = vmatmul.mubr.bf16.gmra.mxu0 %v3498
        %v4981 = vpop.f32.mrf.mxu0
        %v4982 = vadd.f32 0.0, %v4981
        %v4983 = vpop.f32.mrf.mxu0
        %v4984 = vpop.f32.mrf.mxu0
        %v4985 = vadd.f32 0.0, %v4984
        %v4986 = vpop.f32.mrf.mxu0
        %4987 = vmatprep.mubr.bf16.mxu0 0
        %4988 = vmatmul.mubr.bf16.gmra.mxu0 %v3499
        %v4989 = vpop.f32.mrf.mxu0
        %v4990 = vadd.f32 0.0, %v4989
        %v4991 = vpop.f32.mrf.mxu0
        %v4992 = vpop.f32.mrf.mxu0
        %v4993 = vadd.f32 0.0, %v4992
        %v4994 = vpop.f32.mrf.mxu0
        %4995 = vmatprep.mubr.bf16.mxu0 0
        %4996 = vmatmul.mubr.bf16.gmra.mxu0 %v3500
        %v4997 = vpop.f32.mrf.mxu0
        %v4998 = vadd.f32 0.0, %v4997
        %v4999 = vpop.f32.mrf.mxu0
        %v5000 = vpop.f32.mrf.mxu0
        %v5001 = vadd.f32 0.0, %v5000
        %v5002 = vpop.f32.mrf.mxu0
        %5003 = vmatprep.mubr.bf16.mxu0 0
        %5004 = vmatmul.mubr.bf16.gmra.mxu0 %v3501
        %v5005 = vpop.f32.mrf.mxu0
        %v5006 = vadd.f32 0.0, %v5005
        %v5007 = vpop.f32.mrf.mxu0
        %v5008 = vpop.f32.mrf.mxu0
        %v5009 = vadd.f32 0.0, %v5008
        %v5010 = vpop.f32.mrf.mxu0
        %5011 = vmatprep.mubr.bf16.mxu0 0
        %5012 = vmatmul.mubr.bf16.gmra.mxu0 %v3502
        %v5013 = vpop.f32.mrf.mxu0
        %v5014 = vadd.f32 0.0, %v5013
        %v5015 = vpop.f32.mrf.mxu0
        %v5016 = vpop.f32.mrf.mxu0
        %v5017 = vadd.f32 0.0, %v5016
        %v5018 = vpop.f32.mrf.mxu0
        %5019 = vmatprep.mubr.bf16.mxu0 0
        %5020 = vmatmul.mubr.bf16.gmra.mxu0 %v3503
        %v5021 = vpop.f32.mrf.mxu0
        %v5022 = vadd.f32 0.0, %v5021
        %v5023 = vpop.f32.mrf.mxu0
        %v5024 = vpop.f32.mrf.mxu0
        %v5025 = vadd.f32 0.0, %v5024
        %v5026 = vpop.f32.mrf.mxu0
        %5027 = vmatprep.mubr.bf16.mxu0 0
        %5028 = vmatmul.mubr.bf16.gmra.mxu0 %v4449
        %v5029 = vpop.f32.mrf.mxu0
        %v5030 = vadd.f32 0.0, %v5029
        %v5031 = vpop.f32.mrf.mxu0
        %v5032 = vpop.f32.mrf.mxu0
        %v5033 = vadd.f32 0.0, %v5032
        %v5034 = vpop.f32.mrf.mxu0
        %5035 = vmatprep.mubr.bf16.mxu0 0
        %5036 = vmatmul.mubr.bf16.gmra.mxu0 %v4450
        %v5037 = vpop.f32.mrf.mxu0
        %v5038 = vadd.f32 0.0, %v5037
        %v5039 = vpop.f32.mrf.mxu0
        %v5040 = vpop.f32.mrf.mxu0
        %v5041 = vadd.f32 0.0, %v5040
        %v5042 = vpop.f32.mrf.mxu0
        %5043 = vmatprep.mubr.bf16.mxu0 0
        %5044 = vmatmul.mubr.bf16.gmra.mxu0 %v4451
        %v5045 = vpop.f32.mrf.mxu0
        %v5046 = vadd.f32 0.0, %v5045
        %v5047 = vpop.f32.mrf.mxu0
        %v5048 = vpop.f32.mrf.mxu0
        %v5049 = vadd.f32 0.0, %v5048
        %v5050 = vpop.f32.mrf.mxu0
        %5051 = vdwg.mxu0
        %v5052 = vadd.f32 %v4333, %v4958
        %v5053 = vadd.f32 %v4336, %v4961
        %v5054 = vadd.f32 %v4341, %v4966
        %v5055 = vadd.f32 %v4344, %v4969
        %v5056 = vadd.f32 %v4349, %v4974
        %v5057 = vadd.f32 %v4352, %v4977
        %v5058 = vadd.f32 %v4357, %v4982
        %v5059 = vadd.f32 %v4360, %v4985
        %v5060 = vadd.f32 %v4365, %v4990
        %v5061 = vadd.f32 %v4368, %v4993
        %v5062 = vadd.f32 %v4373, %v4998
        %v5063 = vadd.f32 %v4376, %v5001
        %v5064 = vadd.f32 %v4381, %v5006
        %v5065 = vadd.f32 %v4384, %v5009
        %v5066 = vadd.f32 %v4389, %v5014
        %v5067 = vadd.f32 %v4392, %v5017
        %v5068 = vadd.f32 %v4397, %v5022
        %v5069 = vadd.f32 %v4400, %v5025
        %v5070 = vadd.f32 %v4405, %v5030
        %v5071 = vadd.f32 %v4408, %v5033
        %v5072 = vadd.f32 %v4413, %v5038
        %v5073 = vadd.f32 %v4416, %v5041
        %v5074 = vadd.f32 %v4421, %v5046
        %v5075 = vadd.f32 %v4424, %v5049
        %v5076 = vrot.slane %v4834, 1
        %v5077 = vrot.slane %v4835, 1
        %v5078 = vrot.slane %v4836, 1
        %v5079 = vrot.slane %v4837, 1
        %v5080 = vrot.slane %v4838, 1
        %v5081 = vrot.slane %v4839, 1
        %v5082 = vrot.slane %v4840, 1
        %v5083 = vrot.slane %v4841, 1
        %v5084 = vrot.slane %v4842, 1
        %v5085 = vrot.slane %v4843, 1
        %v5086 = vrot.slane %v4844, 1
        %v5087 = vrot.slane %v4845, 1
        %v5088 = vrot.slane %v4846, 1
        %v5089 = vrot.slane %v4847, 1
        %v5090 = vrot.slane %v4848, 1
        %v5091 = vrot.slane %v4849, 1
        %v5092 = vrot.slane %v4850, 1
        %v5093 = vrot.slane %v4851, 1
        %v5094 = vrot.slane %v4852, 1
        %v5095 = vrot.slane %v4853, 1
        %v5096 = vrot.slane %v4854, 1
        %v5097 = vrot.slane %v4855, 1
        %v5098 = vrot.slane %v4856, 1
        %v5099 = vrot.slane %v4857, 1
        %vm5100 = vcmp.lt.s32.totalorder %v2748, 7
        %v5101 = vsel %vm5100, %v5098, %v5099
        %v5102 = vsel %vm5100, %v5097, %v5098
        %v5103 = vsel %vm5100, %v5095, %v5096
        %v5104 = vsel %vm5100, %v5094, %v5095
        %v5105 = vsel %vm5100, %v5092, %v5093
        %v5106 = vsel %vm5100, %v5091, %v5092
        %v5107 = vsel %vm5100, %v5089, %v5090
        %v5108 = vsel %vm5100, %v5088, %v5089
        %v5109 = vsel %vm5100, %v5086, %v5087
        %v5110 = vsel %vm5100, %v5085, %v5086
        %v5111 = vsel %vm5100, %v5083, %v5084
        %v5112 = vsel %vm5100, %v5082, %v5083
        %v5113 = vsel %vm5100, %v5080, %v5081
        %v5114 = vsel %vm5100, %v5079, %v5080
        %v5115 = vsel %vm5100, %v5077, %v5078
        %v5116 = vsel %vm5100, %v5076, %v5077
        %v5117 = vadd.f32 %v4624, %v5116
        %v5118 = vadd.f32 %v4625, %v5115
        %v5119 = vadd.f32 %v4626, %v5114
        %v5120 = vadd.f32 %v4627, %v5113
        %v5121 = vadd.f32 %v4628, %v5112
        %v5122 = vadd.f32 %v4629, %v5111
        %v5123 = vadd.f32 %v4630, %v5110
        %v5124 = vadd.f32 %v4631, %v5109
        %v5125 = vadd.f32 %v4632, %v5108
        %v5126 = vadd.f32 %v4633, %v5107
        %v5127 = vadd.f32 %v4634, %v5106
        %v5128 = vadd.f32 %v4635, %v5105
        %v5129 = vadd.f32 %v4636, %v5104
        %v5130 = vadd.f32 %v4637, %v5103
        %v5131 = vadd.f32 %v4638, %v5102
        %v5132 = vadd.f32 %v4639, %v5101
        %v5133 = vrot.slane %v5052, 2
        %v5134 = vrot.slane %v5053, 2
        %v5135 = vrot.slane %v5054, 2
        %v5136 = vrot.slane %v5055, 2
        %v5137 = vrot.slane %v5056, 2
        %v5138 = vrot.slane %v5057, 2
        %v5139 = vrot.slane %v5058, 2
        %v5140 = vrot.slane %v5059, 2
        %v5141 = vrot.slane %v5060, 2
        %v5142 = vrot.slane %v5061, 2
        %v5143 = vrot.slane %v5062, 2
        %v5144 = vrot.slane %v5063, 2
        %v5145 = vrot.slane %v5064, 2
        %v5146 = vrot.slane %v5065, 2
        %v5147 = vrot.slane %v5066, 2
        %v5148 = vrot.slane %v5067, 2
        %v5149 = vrot.slane %v5068, 2
        %v5150 = vrot.slane %v5069, 2
        %v5151 = vrot.slane %v5070, 2
        %v5152 = vrot.slane %v5071, 2
        %v5153 = vrot.slane %v5072, 2
        %v5154 = vrot.slane %v5073, 2
        %v5155 = vrot.slane %v5074, 2
        %v5156 = vrot.slane %v5075, 2
        %vm5157 = vcmp.lt.s32.totalorder %v2748, 6
        %v5158 = vsel %vm5157, %v5155, %v5156
        %v5159 = vsel %vm5157, %v5154, %v5155
        %v5160 = vsel %vm5157, %v5152, %v5153
        %v5161 = vsel %vm5157, %v5151, %v5152
        %v5162 = vsel %vm5157, %v5149, %v5150
        %v5163 = vsel %vm5157, %v5148, %v5149
        %v5164 = vsel %vm5157, %v5146, %v5147
        %v5165 = vsel %vm5157, %v5145, %v5146
        %v5166 = vsel %vm5157, %v5143, %v5144
        %v5167 = vsel %vm5157, %v5142, %v5143
        %v5168 = vsel %vm5157, %v5140, %v5141
        %v5169 = vsel %vm5157, %v5139, %v5140
        %v5170 = vsel %vm5157, %v5137, %v5138
        %v5171 = vsel %vm5157, %v5136, %v5137
        %v5172 = vsel %vm5157, %v5134, %v5135
        %v5173 = vsel %vm5157, %v5133, %v5134
        %v5174 = vadd.f32 %v5117, %v5173
        %v5175 = vadd.f32 %v5118, %v5172
        %v5176 = vadd.f32 %v5119, %v5171
        %v5177 = vadd.f32 %v5120, %v5170
        %v5178 = vadd.f32 %v5121, %v5169
        %v5179 = vadd.f32 %v5122, %v5168
        %v5180 = vadd.f32 %v5123, %v5167
        %v5181 = vadd.f32 %v5124, %v5166
        %v5182 = vadd.f32 %v5125, %v5165
        %v5183 = vadd.f32 %v5126, %v5164
        %v5184 = vadd.f32 %v5127, %v5163
        %v5185 = vadd.f32 %v5128, %v5162
        %v5186 = vadd.f32 %v5129, %v5161
        %v5187 = vadd.f32 %v5130, %v5160
        %v5188 = vadd.f32 %v5131, %v5159
        %v5189 = vadd.f32 %v5132, %v5158
        %v5190 = vld [vmem:[%s4] sm:$0x1]
        %v5192 = vlaneseq
        %v5193 = vshrl.u32 %v5192, 7
        %v5194 = vsub.s32 0, %v5193
        %v5195 = vrot.slane %v5190, %v5194
        %v5197 = vadd.f32 %v5174, %v5195
        %v5198 = vadd.f32 %v5175, %v5195
        %v5199 = vadd.f32 %v5176, %v5195
        %v5200 = vadd.f32 %v5177, %v5195
        %v5201 = vadd.f32 %v5178, %v5195
        %v5202 = vadd.f32 %v5179, %v5195
        %v5203 = vadd.f32 %v5180, %v5195
        %v5204 = vadd.f32 %v5181, %v5195
        %v5205 = vadd.f32 %v5182, %v5195
        %v5206 = vadd.f32 %v5183, %v5195
        %v5207 = vadd.f32 %v5184, %v5195
        %v5208 = vadd.f32 %v5185, %v5195
        %v5209 = vadd.f32 %v5186, %v5195
        %v5210 = vadd.f32 %v5187, %v5195
        %v5211 = vadd.f32 %v5188, %v5195
        %v5212 = vadd.f32 %v5189, %v5195
        %v5213 = vld [vmem:[%s1852] sm:$0xf]
        %v5214 = vld [vmem:[%s1852 + $0x4] sm:$0xf]
        %v5215 = vld [vmem:[%s1852 + $0xc] sm:$0xf]
        %v5216 = vld [vmem:[%s1852 + $0x10] sm:$0xf]
        %v5217 = vld [vmem:[%s1852 + $0x18] sm:$0xf]
        %v5218 = vld [vmem:[%s1852 + $0x1c] sm:$0xf]
        %v5219 = vld [vmem:[%s1852 + $0x24] sm:$0xf]
        %v5220 = vld [vmem:[%s1852 + $0x28] sm:$0xf]
        %v5221 = vld [vmem:[%s1852 + $0x30] sm:$0xf]
        %v5222 = vld [vmem:[%s1852 + $0x34] sm:$0xf]
        %v5223 = vld [vmem:[%s1852 + $0x3c] sm:$0xf]
        %v5224 = vld [vmem:[%s1852 + $0x40] sm:$0xf]
        %v5225 = vld [vmem:[%s1852 + $0x48] sm:$0xf]
        %v5226 = vld [vmem:[%s1852 + $0x4c] sm:$0xf]
        %v5227 = vld [vmem:[%s1852 + $0x54] sm:$0xf]
        %v5228 = vld [vmem:[%s1852 + $0x58] sm:$0xf]
        %v5229 = vunpack.c.l.bf16 %v5213
        %v5230 = vunpack.c.l.bf16 %v5214
        %v5231 = vunpack.c.l.bf16 %v5215
        %v5232 = vunpack.c.l.bf16 %v5216
        %v5233 = vunpack.c.l.bf16 %v5217
        %v5234 = vunpack.c.l.bf16 %v5218
        %v5235 = vunpack.c.l.bf16 %v5219
        %v5236 = vunpack.c.l.bf16 %v5220
        %v5237 = vunpack.c.l.bf16 %v5221
        %v5238 = vunpack.c.l.bf16 %v5222
        %v5239 = vunpack.c.l.bf16 %v5223
        %v5240 = vunpack.c.l.bf16 %v5224
        %v5241 = vunpack.c.l.bf16 %v5225
        %v5242 = vunpack.c.l.bf16 %v5226
        %v5243 = vunpack.c.l.bf16 %v5227
        %v5244 = vunpack.c.l.bf16 %v5228
        %v5245 = vadd.f32 %v5197, %v5229
        %v5246 = vadd.f32 %v5198, %v5230
        %v5247 = vadd.f32 %v5199, %v5231
        %v5248 = vadd.f32 %v5200, %v5232
        %v5249 = vadd.f32 %v5201, %v5233
        %v5250 = vadd.f32 %v5202, %v5234
        %v5251 = vadd.f32 %v5203, %v5235
        %v5252 = vadd.f32 %v5204, %v5236
        %v5253 = vadd.f32 %v5205, %v5237
        %v5254 = vadd.f32 %v5206, %v5238
        %v5255 = vadd.f32 %v5207, %v5239
        %v5256 = vadd.f32 %v5208, %v5240
        %v5257 = vadd.f32 %v5209, %v5241
        %v5258 = vadd.f32 %v5210, %v5242
        %v5259 = vadd.f32 %v5211, %v5243
        %v5260 = vadd.f32 %v5212, %v5244
        %v5261 = vmax.f32 %v5245, 0.0
        %v5262 = vmax.f32 %v5246, 0.0
        %v5263 = vmax.f32 %v5247, 0.0
        %v5264 = vmax.f32 %v5248, 0.0
        %v5265 = vmax.f32 %v5249, 0.0
        %v5266 = vmax.f32 %v5250, 0.0
        %v5267 = vmax.f32 %v5251, 0.0
        %v5268 = vmax.f32 %v5252, 0.0
        %v5269 = vmax.f32 %v5253, 0.0
        %v5270 = vmax.f32 %v5254, 0.0
        %v5271 = vmax.f32 %v5255, 0.0
        %v5272 = vmax.f32 %v5256, 0.0
        %v5273 = vmax.f32 %v5257, 0.0
        %v5274 = vmax.f32 %v5258, 0.0
        %v5275 = vmax.f32 %v5259, 0.0
        %v5276 = vmax.f32 %v5260, 0.0
        %v5277 = vpack.c.bf16 %v5262, %v5261
        %v5278 = vpack.c.bf16 %v5264, %v5263
        %v5279 = vpack.c.bf16 %v5266, %v5265
        %v5280 = vpack.c.bf16 %v5268, %v5267
        %v5281 = vpack.c.bf16 %v5270, %v5269
        %v5282 = vpack.c.bf16 %v5272, %v5271
        %v5283 = vpack.c.bf16 %v5274, %v5273
        %v5284 = vpack.c.bf16 %v5276, %v5275
        %v5293 = vunpack.c.l.b16 %v5277
        %v5294 = vunpack.c.h.b16 %v5277
        %v5295 = vunpack.c.l.b16 %v5278
        %v5296 = vunpack.c.h.b16 %v5278
        %v5297 = vunpack.c.l.b16 %v5279
        %v5298 = vunpack.c.h.b16 %v5279
        %v5299 = vunpack.c.l.b16 %v5280
        %v5300 = vunpack.c.h.b16 %v5280
        %v5301 = vunpack.c.l.b16 %v5281
        %v5302 = vunpack.c.h.b16 %v5281
        %v5303 = vunpack.c.l.b16 %v5282
        %v5304 = vunpack.c.h.b16 %v5282
        %v5305 = vunpack.c.l.b16 %v5283
        %v5306 = vunpack.c.h.b16 %v5283
        %v5307 = vunpack.c.l.b16 %v5284
        %v5308 = vunpack.c.h.b16 %v5284
        %v5309 = vpack.c.b16 %v5293, %v5293
        %v5310 = vpack.c.b16 %v5294, %v5294
        %v5311 = vpack.c.b16 %v5295, %v5295
        %v5312 = vpack.c.b16 %v5296, %v5296
        %v5313 = vpack.c.b16 %v5297, %v5297
        %v5314 = vpack.c.b16 %v5298, %v5298
        %v5315 = vpack.c.b16 %v5299, %v5299
        %v5316 = vpack.c.b16 %v5300, %v5300
        %v5317 = vpack.c.b16 %v5301, %v5301
        %v5318 = vpack.c.b16 %v5302, %v5302
        %v5319 = vpack.c.b16 %v5303, %v5303
        %v5320 = vpack.c.b16 %v5304, %v5304
        %v5321 = vpack.c.b16 %v5305, %v5305
        %v5322 = vpack.c.b16 %v5306, %v5306
        %v5323 = vpack.c.b16 %v5307, %v5307
        %v5324 = vpack.c.b16 %v5308, %v5308
        %5341 = vst [vmem:[%s285] sm:$0xf] %v5309
        %5342 = vst [vmem:[%s285 + $0x4] sm:$0xf] %v5310
        %5343 = vst [vmem:[%s285 + $0x8] sm:$0xf] %v5311
        %5344 = vst [vmem:[%s285 + $0xc] sm:$0xf] %v5312
        %5345 = vst [vmem:[%s285 + $0x10] sm:$0xf] %v5313
        %5346 = vst [vmem:[%s285 + $0x14] sm:$0xf] %v5314
        %5347 = vst [vmem:[%s285 + $0x18] sm:$0xf] %v5315
        %5348 = vst [vmem:[%s285 + $0x1c] sm:$0xf] %v5316
        %5349 = vst [vmem:[%s285 + $0x20] sm:$0xf] %v5317
        %5350 = vst [vmem:[%s285 + $0x24] sm:$0xf] %v5318
        %5351 = vst [vmem:[%s285 + $0x28] sm:$0xf] %v5319
        %5352 = vst [vmem:[%s285 + $0x2c] sm:$0xf] %v5320
        %5353 = vst [vmem:[%s285 + $0x30] sm:$0xf] %v5321
        %5354 = vst [vmem:[%s285 + $0x34] sm:$0xf] %v5322
        %5355 = vst [vmem:[%s285 + $0x38] sm:$0xf] %v5323
        %5356 = vst [vmem:[%s285 + $0x3c] sm:$0xf] %v5324
        %s5357 = sand.u32 %s155, 1
        %s5358 = scalar_lea.sflag [#allocation4], %s5357
        %s5359 = sand.u32 %s155, 1
        %s5360 = smul.addr %s5359, 64
        %s5361 = scalar_lea.vmem [#allocation8], %s5360
        // Predicated region
        $region53: #{tpu_custom_call.1} parent=39 // pred_check
          %p5362 = pneg %p165
        $region54: #{tpu_custom_call.1} parent=39 // pred_check_branch
          %5364 = sbr.rel (%p5362) target = $region56
        $region55: #{tpu_custom_call.1} parent=39 // pred_region
          %s5365 = smul.u32 8, %s28
          %s5367 = ssub.s32 1024, 1024
          %5368 = vsyncadd %s5358, %s5367
          %s5369 = smul.addr %s5365, 2
          %s5370 = smul.addr %s27, 32
          %s5371 = sadd.s32 %s5369, %s5370
          %s5372 = smul.addr %s5371, 64
          %s5373 = scalar_lea.hbm %s5, %s5372
          %s5374 = sshll.u32 %s5361, 4
          %s5375 = int_to_ptr.vmem [resolvable:$true] %s5374
          %5380 = dma.vmem_to_hbm [thread:$0]  %s5375, 1024, %s5373, %s5358, 64, 64, 4
        $region56: #{tpu_custom_call.1} parent=39 // pred_fallthru
          _
      $region40: #{tpu_custom_call.1} parent=5 // pred_fallthru
        _
      %p5381 = scmp.le.s32.totalorder 2, %s18
      // Predicated region
      $region57: #{tpu_custom_call.1} parent=5 // pred_check
        %p5382 = pneg %p5381
      $region58: #{tpu_custom_call.1} parent=5 // pred_check_branch
        %5384 = sbr.rel (%p5382) target = $region60
      $region59: #{tpu_custom_call.1} parent=5 // pred_region
        %s5385 = ssub.s32 %s18, 2
        // Predicated region
        $region61: #{tpu_custom_call.1} parent=59 // pred_check
          %p5386 = pneg %p171
        $region62: #{tpu_custom_call.1} parent=59 // pred_check_branch
          %5388 = sbr.rel (%p5386) target = $region64
        $region63: #{tpu_custom_call.1} parent=59 // pred_region
          %s5389 = sand.u32 %s156, 1
          %s5390 = scalar_lea.sflag [#allocation4], %s5389
          %s5391 = sand.u32 %s156, 1
          %s5392 = smul.addr %s5391, 64
          %s5393 = scalar_lea.vmem [#allocation8], %s5392
          %5394 = dma.done %s5390, 1024
        $region64: #{tpu_custom_call.1} parent=59 // pred_fallthru
          _
      $region60: #{tpu_custom_call.1} parent=5 // pred_fallthru
        _
    $region6: #{tpu_custom_call.1} parent=1 // loop_footer
      %s22 = sadd.s32 1, %s18
    $region7: #{tpu_custom_call.1} parent=1 // loop_footer_branch
      %17 = sbr.rel target = $region3
    $region8: #{tpu_custom_call.1} parent=1 // loop_exit
      _
    %5395 = vsyncpa [#allocation3], 1
    %s5396 = scalar_lea.sflag [#allocation3], 1
    %5397 = vsyncpa %s5396, 1
    %5398 = vsyncpa [#allocation6], 1
    %5399 = vsyncpa [#allocation4], 1
    %s5400 = scalar_lea.sflag [#allocation4], 1
    %5401 = vsyncpa %s5400, 1

</llo_original>
